<compile_context>
chip_gen: v7x
topology: tpu7x:2x2x1
jax: 0.10.0
libtpu: 0.0.40
codegen_flags: <defaults>
</compile_context>

<pallas_src>
import functools

import jax
import jax.numpy as jnp
from jax import lax
from jax.experimental import pallas as pl
from jax.experimental.pallas import tpu as pltpu


# ---------------------------------------------------------------------------
# small helpers
# ---------------------------------------------------------------------------
def _round_up(x, m):
    return ((x + m - 1) // m) * m


def _lane_pad(n):
    # Pad matmul N to 256 when N > 128: v6e/v7x MXU tiles are 2x256^2 and a 128-wide N
    # tile leaves half the systolic array idle; 128 is already full width on v5e.
    return 128 if n <= 128 else _round_up(n, 256)


def _pick_tm(m, target=1024):
    """Row tile for the linear: a multiple of 8 that divides m exactly (so no
    wrapper-side padding/slicing over M), <= target, and leaving >=2 grid steps when
    possible so v7x's two TensorCores both get work.  Sweep `target` in [512, 2048] at
    production sizes (keep ~512 on v5e unless vmem_limit_bytes is raised further)."""
    if m % 8 != 0:
        return m                                   # ragged M: single full-extent block
    upper = max(8, min(target, (m // 2 // 8) * 8 if m >= 16 else m))
    tm = upper
    while m % tm != 0:
        tm -= 8
    return tm


def _vmem_limit_bytes(per_step_bytes):
    """Scoped-VMEM limit: double/treble-buffered blocks + compiler temporaries,
    floored at 32 MiB (raises v5e's 16 MiB default when needed) and capped below
    v7x's 64 MiB physical VMEM."""
    return int(min(max(3 * per_step_bytes + (4 << 20), 32 << 20), 48 << 20))


# ---------------------------------------------------------------------------
# Kernel 1: fused 3x3 conv (BN folded) + ReLU, single MXU pass, channel-major output.
#
#   x_ref     : (1, (H+4)*W, Cin)  bf16  height-padded (2 top / 2 bottom) NHWC image,
#                                        spatial dims flattened row-major.
#   w_ref     : (9*Cin, Cout)      bf16  tap-major folded conv weight (VMEM resident).
#   b_ref     : (1, Cout)          f32   folded BN bias (VMEM resident).
#   o_ref     : (1, Cout, H*W)     bf16  channel-major feature map (== NCHW flatten).
#   patch_ref : (H*W, 9*Cin)       bf16  VMEM scratch: in-kernel im2col operand.
#
# Tap t = 3*di + dj reads the contiguous slice starting at (di+1)*W + (dj-1).  The two
# taps per row that would wrap across image rows (dj==0 at w==0, dj==2 at w==W-1) are
# masked to zero -- exactly the value the conv's 1-pixel zero width-padding supplies.
# All 9 masked slices are packed into patch_ref and contracted in ONE K=9*Cin matmul:
# the (B,H,W,9*Cin) patch tensor never hits HBM and there is no per-tap f32
# accumulator read-modify-write.
# ---------------------------------------------------------------------------
def _conv3x3_kernel(x_ref, w_ref, b_ref, o_ref, patch_ref, *, H, W, Cin):
    HW = H * W
    col = lax.broadcasted_iota(jnp.int32, (HW, 1), 0) % W
    for t in range(9):                                   # static 9-tap unroll
        di, dj = t // 3, t % 3
        off = (di + 1) * W + (dj - 1)
        s = x_ref[0, off:off + HW, :]                    # (HW, Cin) bf16, contiguous
        if dj == 0:
            s = jnp.where(col != 0, s, jnp.zeros_like(s))
        elif dj == 2:
            s = jnp.where(col != W - 1, s, jnp.zeros_like(s))
        patch_ref[:, t * Cin:(t + 1) * Cin] = s
    # single MXU pass: (HW, 9*Cin) x (9*Cin, Cout) -> (HW, Cout) f32
    acc = jnp.dot(patch_ref[...], w_ref[...], preferred_element_type=jnp.float32)
    res = jnp.maximum(acc + b_ref[...], 0.0)             # folded BN bias + ReLU
    # cast to bf16 BEFORE the XLU transpose: half the bytes/vregs through the XLU
    o_ref[0] = res.astype(o_ref.dtype).T                 # (Cout, HW), channel-major


def conv3x3_bn_relu_cm(x_flat, w_flat, b_row, *, H, W):
    """x_flat: (B, (H+4)*W, Cin) bf16; w_flat: (9*Cin, Cout) bf16; b_row: (1, Cout) f32.
    Returns (B, Cout, H*W) bf16 in channel-major (NCHW-flattened) order."""
    B, S, Cin = x_flat.shape
    assert S == (H + 4) * W
    K9, Cout = w_flat.shape
    assert K9 == 9 * Cin
    HW = H * W
    kernel = functools.partial(_conv3x3_kernel, H=H, W=W, Cin=Cin)
    per_step = (S * Cin * 2            # x block (bf16)
                + Cout * HW * 2        # out block (bf16)
                + HW * 9 * Cin * 2     # im2col scratch (bf16)
                + K9 * Cout * 2        # resident weight (bf16)
                + Cout * 4             # resident bias (f32)
                + HW * Cout * 4)       # f32 conv result before the bf16 cast
    cost = pl.CostEstimate(
        flops=2 * B * HW * 9 * Cin * Cout,
        transcendentals=0,
        bytes_accessed=(x_flat.size * 2 + w_flat.size * 2 + b_row.size * 4
                        + B * Cout * HW * 2),
    )
    return pl.pallas_call(
        kernel,
        out_shape=jax.ShapeDtypeStruct((B, Cout, HW), jnp.bfloat16),
        grid_spec=pltpu.PrefetchScalarGridSpec(
            num_scalar_prefetch=0,
            grid=(B,),
            in_specs=[
                pl.BlockSpec((1, S, Cin), lambda b: (b, 0, 0)),
                # whole-array VMEM residents: single copy, no double buffering
                pl.BlockSpec(memory_space=pltpu.MemorySpace.VMEM),
                pl.BlockSpec(memory_space=pltpu.MemorySpace.VMEM),
            ],
            out_specs=pl.BlockSpec((1, Cout, HW), lambda b: (b, 0, 0)),
            scratch_shapes=[pltpu.VMEM((HW, 9 * Cin), jnp.bfloat16)],
        ),
        compiler_params=pltpu.CompilerParams(
            dimension_semantics=("parallel",),
            vmem_limit_bytes=_vmem_limit_bytes(per_step)),
        cost_estimate=cost,
    )(x_flat, w_flat, b_row)


# ---------------------------------------------------------------------------
# Kernel 2: linear projection  out = x @ w + b  (bf16 operands, f32 accumulate).
# ---------------------------------------------------------------------------
def _linear_kernel(x_ref, w_ref, b_ref, o_ref):
    acc = jnp.dot(x_ref[...], w_ref[...], preferred_element_type=jnp.float32)
    o_ref[...] = (acc + b_ref[...]).astype(o_ref.dtype)


def linear_bias(x, w_pad, b_pad, *, n_out, tm_target=1024):
    """x: (M, K) bf16; w_pad: (K, Np) bf16; b_pad: (1, Np) f32 -> (M, n_out) f32.

    Np is lane-padded ONCE at param-build time.  tm is chosen to divide M exactly
    (no wrapper-side M pad / slice) and, when possible, to leave >=2 grid steps for
    v7x's two TensorCores.  Weight/bias are single-buffered whole-array VMEM residents.
    """
    M, K = x.shape
    Kw, Np = w_pad.shape
    assert K == Kw and Np % 128 == 0
    x = x.astype(jnp.bfloat16)                         # no-op: conv output is bf16
    tm = _pick_tm(M, tm_target)
    per_step = tm * K * 2 + tm * Np * 4 + K * Np * 2 + Np * 4
    cost = pl.CostEstimate(
        flops=2 * M * K * Np,
        transcendentals=0,
        bytes_accessed=M * K * 2 + K * Np * 2 + Np * 4 + M * Np * 4,
    )
    out = pl.pallas_call(
        _linear_kernel,
        out_shape=jax.ShapeDtypeStruct((M, Np), jnp.float32),
        grid_spec=pltpu.PrefetchScalarGridSpec(
            num_scalar_prefetch=0,
            grid=(M // tm,),
            in_specs=[
                pl.BlockSpec((tm, K), lambda i: (i, 0)),
                pl.BlockSpec(memory_space=pltpu.MemorySpace.VMEM),   # resident weight
                pl.BlockSpec(memory_space=pltpu.MemorySpace.VMEM),   # resident bias
            ],
            out_specs=pl.BlockSpec((tm, Np), lambda i: (i, 0)),
        ),
        compiler_params=pltpu.CompilerParams(
            dimension_semantics=("parallel",),
            vmem_limit_bytes=_vmem_limit_bytes(per_step)),
        cost_estimate=cost,
    )(x, w_pad, b_pad)
    return out if n_out == Np else out[:, :n_out]


# ---------------------------------------------------------------------------
# AttentionEncoderCNN forward
# ---------------------------------------------------------------------------
def attention_encoder_cnn_forward(images_nchw, params):
    """images_nchw: (B, Cin, H, W) float32 -> (B, L, rnn_hidden_size) float32."""
    prev_vec = params["prev_vec_dim"]
    rnn_hidden = params["rnn_hidden_size"]
    B, Cin, H, W = images_nchw.shape
    Cout = params["conv_w_flat"].shape[-1]

    # ---- CNN block: fused (in-kernel im2col + conv3x3 + folded BN + ReLU) ----
    # Cast to bf16 BEFORE the transpose / pad so those full-batch XLA HBM passes move
    # half the bytes.
    x = images_nchw.astype(jnp.bfloat16)
    x = jnp.transpose(x, (0, 2, 3, 1))                          # NCHW -> NHWC
    x = jnp.pad(x, ((0, 0), (2, 2), (0, 0), (0, 0)))            # height pad only
    x_flat = x.reshape(B, (H + 4) * W, Cin)
    feat_cm = conv3x3_bn_relu_cm(x_flat, params["conv_w_flat"],
                                 params["conv_b_row"], H=H, W=W)  # (B, Cout, HW) bf16

    # ---- features.view(B, -1, prev_vec): raw NCHW (channel-major) flatten ----
    # NOTE: because the flatten is channel-major, each length-`prev_vec` row generally
    # mixes spatial positions of one channel -- faithful to the original PyTorch quirk.
    assert (Cout * H * W) % prev_vec == 0
    L = (Cout * H * W) // prev_vec
    feats = feat_cm.reshape(B * L, prev_vec)   # contiguous reshape (no transpose trip)

    # ---- linear projection ----
    out = linear_bias(feats, params["lin_w_pad"], params["lin_b_pad"],
                      n_out=rnn_hidden)                          # (B*L, rnn_hidden) f32
    return out.reshape(B, L, rnn_hidden)


# ---------------------------------------------------------------------------
# Deterministic parameter construction (synthetic, not a checkpoint).
# Kernel-ready operands (tap-major flat conv weight, lane-padded bf16 linear weight)
# are built ONCE here, not per forward call.
# ---------------------------------------------------------------------------
def make_params(key, cin, prev_vec_dim, rnn_hidden_size):
    ks = jax.random.split(key, 8)
    conv_w = jax.random.normal(ks[0], (prev_vec_dim, cin, 3, 3), jnp.float32) * 0.1
    conv_b = jax.random.normal(ks[1], (prev_vec_dim,), jnp.float32) * 0.05
    gamma = 0.5 + jax.random.uniform(ks[2], (prev_vec_dim,), jnp.float32)
    beta = jax.random.normal(ks[3], (prev_vec_dim,), jnp.float32) * 0.1
    r_mean = jax.random.normal(ks[4], (prev_vec_dim,), jnp.float32) * 0.1
    r_var = 0.5 + jax.random.uniform(ks[5], (prev_vec_dim,), jnp.float32)
    eps = 1e-5

    # fold BN (eval mode) into conv weight / bias
    scale = gamma / jnp.sqrt(r_var + eps)                        # (Cout,)
    conv_w_folded = conv_w * scale[:, None, None, None]
    conv_b_folded = beta + (conv_b - r_mean) * scale

    # tap-major weight: (Cout, Cin, kh, kw) -> (kh, kw, Cin, Cout) -> (9, Cin, Cout)
    conv_w_taps = jnp.transpose(conv_w_folded, (2, 3, 1, 0)).reshape(9, cin, prev_vec_dim)
    # kernel operand: flat (9*Cin, Cout) bf16 for the single-dot im2col contraction
    conv_w_flat = conv_w_taps.reshape(9 * cin, prev_vec_dim).astype(jnp.bfloat16)
    conv_b_row = conv_b_folded.reshape(1, prev_vec_dim).astype(jnp.float32)

    # linear: nn.Linear(prev_vec_dim, rnn_hidden_size); stored as (K, N) for x @ W
    lin_w = (jax.random.normal(ks[6], (rnn_hidden_size, prev_vec_dim), jnp.float32) * 0.05).T
    lin_b = jax.random.normal(ks[7], (rnn_hidden_size,), jnp.float32) * 0.05
    n_pad = _lane_pad(rnn_hidden_size)
    lin_w_pad = jnp.pad(lin_w, ((0, 0), (0, n_pad - rnn_hidden_size))).astype(jnp.bfloat16)
    lin_b_pad = jnp.pad(lin_b, (0, n_pad - rnn_hidden_size)).astype(jnp.float32).reshape(1, n_pad)

    return {
        "prev_vec_dim": prev_vec_dim,
        "rnn_hidden_size": rnn_hidden_size,
        # kernel operands
        "conv_w_flat": conv_w_flat,    # (9*Cin, Cout) bf16, BN folded, tap-major
        "conv_b_row": conv_b_row,      # (1, Cout) f32
        "lin_w_pad": lin_w_pad,        # (prev_vec_dim, Np) bf16, lane-padded
        "lin_b_pad": lin_b_pad,        # (1, Np) f32
        # reference operands (unpadded f32)
        "conv_w_taps": conv_w_taps,    # (9, Cin, Cout) f32, BN folded
        "conv_b_fold": conv_b_folded,  # (Cout,) f32
        "lin_w": lin_w,                # (prev_vec_dim, rnn_hidden_size) f32
        "lin_b": lin_b,                # (rnn_hidden_size,) f32
    }


# ---------------------------------------------------------------------------
# Pure-JAX reference (mirrors the kernel's bf16-operand / f32-accumulate numerics,
# but uses a standard symmetric-padding im2col -> independently validates the
# in-kernel shifted-slice + mask trick and the single-dot contraction).
# ---------------------------------------------------------------------------
def reference_forward(images_nchw, params):
    B, Cin, H, W = images_nchw.shape
    prev_vec = params["prev_vec_dim"]
    x = jnp.transpose(images_nchw, (0, 2, 3, 1)).astype(jnp.bfloat16)
    xp = jnp.pad(x, ((0, 0), (1, 1), (1, 1), (0, 0)))
    taps = jnp.stack(
        [xp[:, i:i + H, j:j + W, :] for i in range(3) for j in range(3)], axis=3
    )                                                              # (B, H, W, 9, Cin)
    w = params["conv_w_taps"].astype(jnp.bfloat16)                 # (9, Cin, Cout)
    conv = jnp.einsum("bhwtc,tco->bhwo", taps, w,
                      preferred_element_type=jnp.float32)
    conv = jnp.maximum(conv + params["conv_b_fold"], 0.0)
    feat_cm = jnp.transpose(conv, (0, 3, 1, 2)).astype(jnp.bfloat16)   # NCHW, bf16
    feats = feat_cm.reshape(B, -1, prev_vec)
    lw = params["lin_w"].astype(jnp.bfloat16)
    out = jnp.einsum("blk,kn->bln", feats, lw,
                     preferred_element_type=jnp.float32) + params["lin_b"]
    return out


if __name__ == "__main__":
    key = jax.random.PRNGKey(0)
    k_img, k_par = jax.random.split(key)

    B, Cin, H, W = 2, 4, 16, 16          # small synthetic "images"
    prev_vec_dim = 64                    # stand-in for VGG's 512
    rnn_hidden_size = 32

    images = jax.random.normal(k_img, (B, Cin, H, W), jnp.float32)
    params = make_params(k_par, Cin, prev_vec_dim, rnn_hidden_size)

    out = attention_encoder_cnn_forward(images, params)
    out = jax.block_until_ready(out)

    ref = reference_forward(images, params)
    L = (prev_vec_dim * H * W) // prev_vec_dim
    assert out.shape == (B, L, rnn_hidden_size)
    assert jnp.allclose(out, ref, atol=1e-2, rtol=1e-2), float(jnp.max(jnp.abs(out - ref)))

    print("KERNEL_OK")
</pallas_src>

<mosaic_0001>
module attributes {stable_mosaic.version = 11 : i64} {
  func.func @_conv3x3_kernel(%arg0: i32, %arg1: memref<1x320x4xbf16, #tpu.memory_space<vmem>>, %arg2: memref<36x64xbf16, #tpu.memory_space<vmem>>, %arg3: memref<1x64xf32, #tpu.memory_space<vmem>>, %arg4: memref<1x64x256xbf16, #tpu.memory_space<vmem>>, %arg5: memref<256x36xbf16, #tpu.memory_space<vmem>>) attributes {dimension_semantics = [#tpu.dimension_semantics<parallel>], iteration_bounds = array<i64: 2>, scalar_prefetch = 0 : i64, scratch_operands = 1 : i64, tpu.core_type = #tpu.core_type<tc>, window_params = [{transform_indices = @transform_0, window_bounds = array<i64: 1, 320, 4>}, {pipeline_mode = #tpu.pipeline_mode<synchronous>, transform_indices = @transform_1, window_bounds = array<i64: 36, 64>}, {pipeline_mode = #tpu.pipeline_mode<synchronous>, transform_indices = @transform_2, window_bounds = array<i64: 1, 64>}, {transform_indices = @transform_3, window_bounds = array<i64: 1, 64, 256>}]} {
    %0 = tpu.iota {dimensions = array<i32: 0>} : vector<256x1xi32>
    %c16_i32 = arith.constant 16 : i32
    %c0_i32 = arith.constant 0 : i32
    %1 = arith.cmpi eq, %c16_i32, %c0_i32 : i32
    %c1_i32 = arith.constant 1 : i32
    %2 = arith.select %1, %c1_i32, %c16_i32 : i32
    %3 = vector.broadcast %2 : i32 to vector<256x1xi32>
    %4 = arith.remsi %0, %3 : vector<256x1xi32>
    %c0_i32_0 = arith.constant 0 : i32
    %5 = vector.broadcast %c0_i32_0 : i32 to vector<256x1xi32>
    %6 = arith.cmpi ne, %4, %5 : vector<256x1xi32>
    %c0_i32_1 = arith.constant 0 : i32
    %7 = vector.broadcast %c0_i32_1 : i32 to vector<256x1xi32>
    %8 = arith.cmpi slt, %4, %7 : vector<256x1xi32>
    %c0_i32_2 = arith.constant 0 : i32
    %9 = arith.cmpi slt, %2, %c0_i32_2 : i32
    %10 = vector.broadcast %9 : i1 to vector<256x1xi1>
    %11 = vector.broadcast %10 : vector<256x1xi1> to vector<256x1xi1>
    %12 = arith.xori %8, %11 : vector<256x1xi1>
    %13 = arith.andi %12, %6 : vector<256x1xi1>
    %14 = vector.broadcast %2 : i32 to vector<256x1xi32>
    %15 = arith.addi %4, %14 : vector<256x1xi32>
    %16 = arith.select %13, %15, %4 : vector<256x1xi1>, vector<256x1xi32>
    %c0 = arith.constant 0 : index
    %c15 = arith.constant 15 : index
    %c0_3 = arith.constant 0 : index
    %17 = vector.load %arg1[%c0, %c15, %c0_3] : memref<1x320x4xbf16, #tpu.memory_space<vmem>>, vector<1x256x4xbf16>
    %18 = vector.shape_cast %17 : vector<1x256x4xbf16> to vector<256x4xbf16>
    %c0_i32_4 = arith.constant 0 : i32
    %19 = vector.broadcast %c0_i32_4 : i32 to vector<256x1xi32>
    %20 = arith.cmpi ne, %16, %19 : vector<256x1xi32>
    %cst = arith.constant 0.000000e+00 : bf16
    %21 = vector.broadcast %cst : bf16 to vector<256x4xbf16>
    %22 = vector.shape_cast %20 : vector<256x1xi1> to vector<256x1xi1>
    %23 = vector.broadcast %22 : vector<256x1xi1> to vector<256x4xi1>
    %24 = arith.select %23, %18, %21 : vector<256x4xi1>, vector<256x4xbf16>
    %c0_5 = arith.constant 0 : index
    %c0_6 = arith.constant 0 : index
    %25 = vector.load %arg5[%c0_5, %c0_6] : memref<256x36xbf16, #tpu.memory_space<vmem>>, vector<256x4xbf16>
    tpu.vector_store %arg5[%c0_5, %c0_6], %24 {strides = array<i32>} : memref<256x36xbf16, #tpu.memory_space<vmem>>, vector<256x4xbf16>,
    %c0_7 = arith.constant 0 : index
    %c16 = arith.constant 16 : index
    %c0_8 = arith.constant 0 : index
    %26 = vector.load %arg1[%c0_7, %c16, %c0_8] : memref<1x320x4xbf16, #tpu.memory_space<vmem>>, vector<1x256x4xbf16>
    %27 = vector.shape_cast %26 : vector<1x256x4xbf16> to vector<256x4xbf16>
    %c0_9 = arith.constant 0 : index
    %c4 = arith.constant 4 : index
    %28 = vector.load %arg5[%c0_9, %c4] : memref<256x36xbf16, #tpu.memory_space<vmem>>, vector<256x4xbf16>
    tpu.vector_store %arg5[%c0_9, %c4], %27 {strides = array<i32>} : memref<256x36xbf16, #tpu.memory_space<vmem>>, vector<256x4xbf16>,
    %c0_10 = arith.constant 0 : index
    %c17 = arith.constant 17 : index
    %c0_11 = arith.constant 0 : index
    %29 = vector.load %arg1[%c0_10, %c17, %c0_11] : memref<1x320x4xbf16, #tpu.memory_space<vmem>>, vector<1x256x4xbf16>
    %30 = vector.shape_cast %29 : vector<1x256x4xbf16> to vector<256x4xbf16>
    %c15_i32 = arith.constant 15 : i32
    %31 = vector.broadcast %c15_i32 : i32 to vector<256x1xi32>
    %32 = arith.cmpi ne, %16, %31 : vector<256x1xi32>
    %cst_12 = arith.constant 0.000000e+00 : bf16
    %33 = vector.broadcast %cst_12 : bf16 to vector<256x4xbf16>
    %34 = vector.shape_cast %32 : vector<256x1xi1> to vector<256x1xi1>
    %35 = vector.broadcast %34 : vector<256x1xi1> to vector<256x4xi1>
    %36 = arith.select %35, %30, %33 : vector<256x4xi1>, vector<256x4xbf16>
    %c0_13 = arith.constant 0 : index
    %c8 = arith.constant 8 : index
    %37 = vector.load %arg5[%c0_13, %c8] : memref<256x36xbf16, #tpu.memory_space<vmem>>, vector<256x4xbf16>
    tpu.vector_store %arg5[%c0_13, %c8], %36 {strides = array<i32>} : memref<256x36xbf16, #tpu.memory_space<vmem>>, vector<256x4xbf16>,
    %c0_14 = arith.constant 0 : index
    %c31 = arith.constant 31 : index
    %c0_15 = arith.constant 0 : index
    %38 = vector.load %arg1[%c0_14, %c31, %c0_15] : memref<1x320x4xbf16, #tpu.memory_space<vmem>>, vector<1x256x4xbf16>
    %39 = vector.shape_cast %38 : vector<1x256x4xbf16> to vector<256x4xbf16>
    %c0_i32_16 = arith.constant 0 : i32
    %40 = vector.broadcast %c0_i32_16 : i32 to vector<256x1xi32>
    %41 = arith.cmpi ne, %16, %40 : vector<256x1xi32>
    %cst_17 = arith.constant 0.000000e+00 : bf16
    %42 = vector.broadcast %cst_17 : bf16 to vector<256x4xbf16>
    %43 = vector.shape_cast %41 : vector<256x1xi1> to vector<256x1xi1>
    %44 = vector.broadcast %43 : vector<256x1xi1> to vector<256x4xi1>
    %45 = arith.select %44, %39, %42 : vector<256x4xi1>, vector<256x4xbf16>
    %c0_18 = arith.constant 0 : index
    %c12 = arith.constant 12 : index
    %46 = vector.load %arg5[%c0_18, %c12] : memref<256x36xbf16, #tpu.memory_space<vmem>>, vector<256x4xbf16>
    tpu.vector_store %arg5[%c0_18, %c12], %45 {strides = array<i32>} : memref<256x36xbf16, #tpu.memory_space<vmem>>, vector<256x4xbf16>,
    %c0_19 = arith.constant 0 : index
    %c32 = arith.constant 32 : index
    %c0_20 = arith.constant 0 : index
    %47 = vector.load %arg1[%c0_19, %c32, %c0_20] : memref<1x320x4xbf16, #tpu.memory_space<vmem>>, vector<1x256x4xbf16>
    %48 = vector.shape_cast %47 : vector<1x256x4xbf16> to vector<256x4xbf16>
    %c0_21 = arith.constant 0 : index
    %c16_22 = arith.constant 16 : index
    %49 = vector.load %arg5[%c0_21, %c16_22] : memref<256x36xbf16, #tpu.memory_space<vmem>>, vector<256x4xbf16>
    tpu.vector_store %arg5[%c0_21, %c16_22], %48 {strides = array<i32>} : memref<256x36xbf16, #tpu.memory_space<vmem>>, vector<256x4xbf16>,
    %c0_23 = arith.constant 0 : index
    %c33 = arith.constant 33 : index
    %c0_24 = arith.constant 0 : index
    %50 = vector.load %arg1[%c0_23, %c33, %c0_24] : memref<1x320x4xbf16, #tpu.memory_space<vmem>>, vector<1x256x4xbf16>
    %51 = vector.shape_cast %50 : vector<1x256x4xbf16> to vector<256x4xbf16>
    %c15_i32_25 = arith.constant 15 : i32
    %52 = vector.broadcast %c15_i32_25 : i32 to vector<256x1xi32>
    %53 = arith.cmpi ne, %16, %52 : vector<256x1xi32>
    %cst_26 = arith.constant 0.000000e+00 : bf16
    %54 = vector.broadcast %cst_26 : bf16 to vector<256x4xbf16>
    %55 = vector.shape_cast %53 : vector<256x1xi1> to vector<256x1xi1>
    %56 = vector.broadcast %55 : vector<256x1xi1> to vector<256x4xi1>
    %57 = arith.select %56, %51, %54 : vector<256x4xi1>, vector<256x4xbf16>
    %c0_27 = arith.constant 0 : index
    %c20 = arith.constant 20 : index
    %58 = vector.load %arg5[%c0_27, %c20] : memref<256x36xbf16, #tpu.memory_space<vmem>>, vector<256x4xbf16>
    tpu.vector_store %arg5[%c0_27, %c20], %57 {strides = array<i32>} : memref<256x36xbf16, #tpu.memory_space<vmem>>, vector<256x4xbf16>,
    %c0_28 = arith.constant 0 : index
    %c47 = arith.constant 47 : index
    %c0_29 = arith.constant 0 : index
    %59 = vector.load %arg1[%c0_28, %c47, %c0_29] : memref<1x320x4xbf16, #tpu.memory_space<vmem>>, vector<1x256x4xbf16>
    %60 = vector.shape_cast %59 : vector<1x256x4xbf16> to vector<256x4xbf16>
    %c0_i32_30 = arith.constant 0 : i32
    %61 = vector.broadcast %c0_i32_30 : i32 to vector<256x1xi32>
    %62 = arith.cmpi ne, %16, %61 : vector<256x1xi32>
    %cst_31 = arith.constant 0.000000e+00 : bf16
    %63 = vector.broadcast %cst_31 : bf16 to vector<256x4xbf16>
    %64 = vector.shape_cast %62 : vector<256x1xi1> to vector<256x1xi1>
    %65 = vector.broadcast %64 : vector<256x1xi1> to vector<256x4xi1>
    %66 = arith.select %65, %60, %63 : vector<256x4xi1>, vector<256x4xbf16>
    %c0_32 = arith.constant 0 : index
    %c24 = arith.constant 24 : index
    %67 = vector.load %arg5[%c0_32, %c24] : memref<256x36xbf16, #tpu.memory_space<vmem>>, vector<256x4xbf16>
    tpu.vector_store %arg5[%c0_32, %c24], %66 {strides = array<i32>} : memref<256x36xbf16, #tpu.memory_space<vmem>>, vector<256x4xbf16>,
    %c0_33 = arith.constant 0 : index
    %c48 = arith.constant 48 : index
    %c0_34 = arith.constant 0 : index
    %68 = vector.load %arg1[%c0_33, %c48, %c0_34] : memref<1x320x4xbf16, #tpu.memory_space<vmem>>, vector<1x256x4xbf16>
    %69 = vector.shape_cast %68 : vector<1x256x4xbf16> to vector<256x4xbf16>
    %c0_35 = arith.constant 0 : index
    %c28 = arith.constant 28 : index
    %70 = vector.load %arg5[%c0_35, %c28] : memref<256x36xbf16, #tpu.memory_space<vmem>>, vector<256x4xbf16>
    tpu.vector_store %arg5[%c0_35, %c28], %69 {strides = array<i32>} : memref<256x36xbf16, #tpu.memory_space<vmem>>, vector<256x4xbf16>,
    %c0_36 = arith.constant 0 : index
    %c49 = arith.constant 49 : index
    %c0_37 = arith.constant 0 : index
    %71 = vector.load %arg1[%c0_36, %c49, %c0_37] : memref<1x320x4xbf16, #tpu.memory_space<vmem>>, vector<1x256x4xbf16>
    %72 = vector.shape_cast %71 : vector<1x256x4xbf16> to vector<256x4xbf16>
    %c15_i32_38 = arith.constant 15 : i32
    %73 = vector.broadcast %c15_i32_38 : i32 to vector<256x1xi32>
    %74 = arith.cmpi ne, %16, %73 : vector<256x1xi32>
    %cst_39 = arith.constant 0.000000e+00 : bf16
    %75 = vector.broadcast %cst_39 : bf16 to vector<256x4xbf16>
    %76 = vector.shape_cast %74 : vector<256x1xi1> to vector<256x1xi1>
    %77 = vector.broadcast %76 : vector<256x1xi1> to vector<256x4xi1>
    %78 = arith.select %77, %72, %75 : vector<256x4xi1>, vector<256x4xbf16>
    %c0_40 = arith.constant 0 : index
    %c32_41 = arith.constant 32 : index
    %79 = vector.load %arg5[%c0_40, %c32_41] : memref<256x36xbf16, #tpu.memory_space<vmem>>, vector<256x4xbf16>
    tpu.vector_store %arg5[%c0_40, %c32_41], %78 {strides = array<i32>} : memref<256x36xbf16, #tpu.memory_space<vmem>>, vector<256x4xbf16>,
    %c0_42 = arith.constant 0 : index
    %c0_43 = arith.constant 0 : index
    %80 = vector.load %arg5[%c0_42, %c0_43] : memref<256x36xbf16, #tpu.memory_space<vmem>>, vector<256x36xbf16>
    %c0_44 = arith.constant 0 : index
    %c0_45 = arith.constant 0 : index
    %81 = vector.load %arg2[%c0_44, %c0_45] : memref<36x64xbf16, #tpu.memory_space<vmem>>, vector<36x64xbf16>
    %cst_46 = arith.constant dense<0.000000e+00> : vector<256x64xf32>
    %82 = tpu.matmul %80, %81, %cst_46 {dimension_numbers = #tpu.dot_dimension_numbers<[1], [0], [0], [1], [0, 0, 1, 1], [], []>} : vector<256x36xbf16>, vector<36x64xbf16>, vector<256x64xf32> -> vector<256x64xf32>
    %c0_47 = arith.constant 0 : index
    %c0_48 = arith.constant 0 : index
    %83 = vector.load %arg3[%c0_47, %c0_48] : memref<1x64xf32, #tpu.memory_space<vmem>>, vector<1x64xf32>
    %84 = vector.broadcast %83 : vector<1x64xf32> to vector<256x64xf32>
    %85 = arith.addf %82, %84 : vector<256x64xf32>
    %cst_49 = arith.constant 0.000000e+00 : f32
    %86 = vector.broadcast %cst_49 : f32 to vector<256x64xf32>
    %87 = arith.maximumf %85, %86 : vector<256x64xf32>
    %88 = arith.truncf %87 : vector<256x64xf32> to vector<256x64xbf16>
    %89 = tpu.transpose %88, [1, 0] : vector<256x64xbf16> -> vector<64x256xbf16>
    %c0_50 = arith.constant 0 : index
    %c0_51 = arith.constant 0 : index
    %c0_52 = arith.constant 0 : index
    %90 = vector.load %arg4[%c0_50, %c0_51, %c0_52] : memref<1x64x256xbf16, #tpu.memory_space<vmem>>, vector<1x64x256xbf16>
    %91 = vector.shape_cast %90 : vector<1x64x256xbf16> to vector<64x256xbf16>
    %92 = vector.shape_cast %89 : vector<64x256xbf16> to vector<1x64x256xbf16>
    tpu.vector_store %arg4[%c0_50, %c0_51, %c0_52], %92 {strides = array<i32>} : memref<1x64x256xbf16, #tpu.memory_space<vmem>>, vector<1x64x256xbf16>,
    return
  }
  func.func @transform_0(%arg0: i32) -> (i32, i32, i32) {
    %c0_i32 = arith.constant 0 : i32
    %c0_i32_0 = arith.constant 0 : i32
    %c0_i32_1 = arith.constant 0 : i32
    return %arg0, %c0_i32, %c0_i32_0 : i32, i32, i32
  }
  func.func @transform_1(%arg0: i32) -> (i32, i32) {
    %c0_i32 = arith.constant 0 : i32
    %c0_i32_0 = arith.constant 0 : i32
    %c0_i32_1 = arith.constant 0 : i32
    return %c0_i32, %c0_i32_0 : i32, i32
  }
  func.func @transform_2(%arg0: i32) -> (i32, i32) {
    %c0_i32 = arith.constant 0 : i32
    %c0_i32_0 = arith.constant 0 : i32
    %c0_i32_1 = arith.constant 0 : i32
    return %c0_i32, %c0_i32_0 : i32, i32
  }
  func.func @transform_3(%arg0: i32) -> (i32, i32, i32) {
    %c0_i32 = arith.constant 0 : i32
    %c0_i32_0 = arith.constant 0 : i32
    %c0_i32_1 = arith.constant 0 : i32
    return %arg0, %c0_i32, %c0_i32_0 : i32, i32, i32
  }
}

</mosaic_0001>

<llo_original>
// kernel: tpu_custom_call.1
$region0: #{tpu_custom_call.1}
  #allocation0 [shape = 'u32[]', space=smem, size = 0x4, offset = 0x4, fixed_abs, tag = 'smem constant byte address 0x4 - core index']
  #allocation1 [shape = 'u32[144,128]{1,0:T(1,128)}', space=vmem, size = 0x12000, scoped, tag = 'internal scratch']
  #allocation2 [shape = 'bf16[256,36]{1,0:T(16,128)(2,1)}', space=vmem, size = 0x10000, scoped, tag = 'scratch operand']
  %s0 = inlined_call_operand.vmem [shape: bf16[2,320,4], index: 0, kind: input, shape index: {}]
  %s1 = inlined_call_operand.vmem [shape: bf16[36,64], index: 1, kind: input, shape index: {}]
  %s2 = inlined_call_operand.vmem [shape: f32[1,64], index: 2, kind: input, shape index: {}]
  %s3 = inlined_call_operand.hbm [shape: bf16[2,64,256], index: 3, kind: output, shape index: {}]
  %s4 = sld [smem:[#allocation0]]
  $region45: #{tpu_custom_call.1} parent=0
    _
  %s6 = ssub.s32 1, %s4
  %s7 = scalar_select 0, %s6, %s4
  $region1: #{tpu_custom_call.1} parent=0
    #allocation3 [shape = 'u8[65536]{0}', space=vmem, size = 0x10000, scoped, tag = 'output window, operand 0']
    #allocation4 [shape = 's32[2]{0}', space=sflag, size = 0x8, scoped, tag = 'scoped memory for tpu_custom_call.1']
    %8 = vsyncpa [#allocation4], 0
    %s9 = scalar_lea.sflag [#allocation4], 1
    %10 = vsyncpa %s9, 0
    loop: start=0, step=1, limit=4
    $region2: #{tpu_custom_call.1} parent=1 // loop_pre_header
      _
    $region3: #{tpu_custom_call.1} parent=1 // loop_header
      %s12 = sphi 0, %s16
      %p13 = scmp.ge.s32.totalorder %s12, 4
      %s22 = sphi 0, %s24
      %s25 = sphi 0, %s22
      %s26 = sphi 0, %s25
      %s42 = sphi 0, %s26
      %s46 = sphi 0, %s46
      %s48 = sphi 0, %s46
      %s49 = sphi 0, %s48
      %s63 = sphi 0, %s49
      %s67 = sphi 0, %s67
      %s69 = sphi 0, %s67
      %s70 = sphi 0, %s69
      %s84 = sphi 0, %s70
      %s90 = sphi 0, %s92
      %s93 = sphi 0, %s90
      %s94 = sphi 0, %s93
      %s110 = sphi 0, %s94
    $region4: #{tpu_custom_call.1} parent=1 // loop_header_branch
      %15 = sbr.rel (%p13) target = $region8
    $region5: #{tpu_custom_call.1} parent=1 // loop_body
      %s17 = ssub.s32 %s12, 1
      %s18 = ssub.s32 %s12, 2
      %s19 = sadd.s32 %s12, 1
      %s20 = ssub.s32 %s12, %s19
      %p21 = scmp.eq.s32.totalorder %s20, 0
      %s23 = sadd.s32 %s22, 1
      %s24 = scalar_select %p21, %s22, %s23
      %p27 = pneg %p21
      %p28 = scmp.eq.s32.totalorder %s12, 1
      %p29 = por %p27, %p28
      %p30 = scmp.ne.s32.totalorder %s22, %s25
      %p31 = scmp.eq.s32.totalorder %s12, 0
      %p32 = por %p30, %p31
      %p33 = scmp.ne.s32.totalorder %s22, %s25
      %p34 = scmp.eq.s32.totalorder %s17, 1
      %p35 = por %p33, %p34
      %p36 = scmp.ne.s32.totalorder %s25, %s26
      %p37 = scmp.eq.s32.totalorder %s17, 0
      %p38 = por %p36, %p37
      %p39 = scmp.ne.s32.totalorder %s25, %s26
      %p40 = scmp.eq.s32.totalorder %s18, 1
      %p41 = por %p39, %p40
      %p43 = scmp.ne.s32.totalorder %s26, %s42
      %p44 = scmp.eq.s32.totalorder %s18, 0
      %p45 = por %p43, %p44
      %s47 = sadd.s32 %s46, 1
      %p50 = scmp.eq.s32.totalorder %s12, 1
      %p51 = scmp.ne.s32.totalorder %s46, %s48
      %p52 = scmp.eq.s32.totalorder %s12, 0
      %p53 = por %p51, %p52
      %p54 = scmp.ne.s32.totalorder %s46, %s48
      %p55 = scmp.eq.s32.totalorder %s17, 1
      %p56 = por %p54, %p55
      %p57 = scmp.ne.s32.totalorder %s48, %s49
      %p58 = scmp.eq.s32.totalorder %s17, 0
      %p59 = por %p57, %p58
      %p60 = scmp.ne.s32.totalorder %s48, %s49
      %p61 = scmp.eq.s32.totalorder %s18, 1
      %p62 = por %p60, %p61
      %p64 = scmp.ne.s32.totalorder %s49, %s63
      %p65 = scmp.eq.s32.totalorder %s18, 0
      %p66 = por %p64, %p65
      %s68 = sadd.s32 %s67, 1
      %p71 = scmp.eq.s32.totalorder %s12, 1
      %p72 = scmp.ne.s32.totalorder %s67, %s69
      %p73 = scmp.eq.s32.totalorder %s12, 0
      %p74 = por %p72, %p73
      %p75 = scmp.ne.s32.totalorder %s67, %s69
      %p76 = scmp.eq.s32.totalorder %s17, 1
      %p77 = por %p75, %p76
      %p78 = scmp.ne.s32.totalorder %s69, %s70
      %p79 = scmp.eq.s32.totalorder %s17, 0
      %p80 = por %p78, %p79
      %p81 = scmp.ne.s32.totalorder %s69, %s70
      %p82 = scmp.eq.s32.totalorder %s18, 1
      %p83 = por %p81, %p82
      %p85 = scmp.ne.s32.totalorder %s70, %s84
      %p86 = scmp.eq.s32.totalorder %s18, 0
      %p87 = por %p85, %p86
      %s88 = ssub.s32 %s12, %s19
      %p89 = scmp.eq.s32.totalorder %s88, 0
      %s91 = sadd.s32 %s90, 1
      %s92 = scalar_select %p89, %s90, %s91
      %p95 = pneg %p89
      %p96 = scmp.eq.s32.totalorder %s12, 1
      %p97 = por %p95, %p96
      %p98 = scmp.ne.s32.totalorder %s90, %s93
      %p99 = scmp.eq.s32.totalorder %s12, 0
      %p100 = por %p98, %p99
      %p101 = scmp.ne.s32.totalorder %s90, %s93
      %p102 = scmp.eq.s32.totalorder %s17, 1
      %p103 = por %p101, %p102
      %p104 = scmp.ne.s32.totalorder %s93, %s94
      %p105 = scmp.eq.s32.totalorder %s17, 0
      %p106 = por %p104, %p105
      %p107 = scmp.ne.s32.totalorder %s93, %s94
      %p108 = scmp.eq.s32.totalorder %s18, 1
      %p109 = por %p107, %p108
      %p111 = scmp.ne.s32.totalorder %s94, %s110
      %p112 = scmp.eq.s32.totalorder %s18, 0
      %p113 = por %p111, %p112
      %p114 = scmp.le.s32.totalorder 1, %s12
      %p115 = scmp.lt.s32.totalorder %s12, 3
      %p116 = pnand %p114, %p115
      %p117 = pneg %p116
      // Predicated region
      $region9: #{tpu_custom_call.1} parent=5 // pred_check
        _
      $region10: #{tpu_custom_call.1} parent=5 // pred_check_branch
        %119 = sbr.rel (%p116) target = $region12
      $region11: #{tpu_custom_call.1} parent=5 // pred_region
        %s120 = ssub.s32 %s12, 1
        // Predicated region
        $region13: #{tpu_custom_call.1} parent=11 // pred_check
          %p121 = pneg %p59
        $region14: #{tpu_custom_call.1} parent=11 // pred_check_branch
          %123 = sbr.rel (%p121) target = $region16
        $region15: #{tpu_custom_call.1} parent=11 // pred_region
          _
        $region16: #{tpu_custom_call.1} parent=11 // pred_fallthru
          _
        // Predicated region
        $region17: #{tpu_custom_call.1} parent=11 // pred_check
          %p124 = pneg %p80
        $region18: #{tpu_custom_call.1} parent=11 // pred_check_branch
          %126 = sbr.rel (%p124) target = $region20
        $region19: #{tpu_custom_call.1} parent=11 // pred_region
          _
        $region20: #{tpu_custom_call.1} parent=11 // pred_fallthru
          _
      $region12: #{tpu_custom_call.1} parent=5 // pred_fallthru
        _
      %p127 = scmp.lt.s32.totalorder %s12, 2
      // Predicated region
      $region21: #{tpu_custom_call.1} parent=5 // pred_check
        %p128 = pneg %p127
      $region22: #{tpu_custom_call.1} parent=5 // pred_check_branch
        %130 = sbr.rel (%p128) target = $region24
      $region23: #{tpu_custom_call.1} parent=5 // pred_region
        // Predicated region
        $region25: #{tpu_custom_call.1} parent=23 // pred_check
          %p131 = pneg %p32
        $region26: #{tpu_custom_call.1} parent=23 // pred_check_branch
          %133 = sbr.rel (%p131) target = $region28
        $region27: #{tpu_custom_call.1} parent=23 // pred_region
          %p134 = scmp.lt.s32.totalorder %s12, 1
          %s135 = scalar_select %p134, %s12, 1
          %s136 = smul.addr %s135, 40
          %s137 = smul.addr %s136, 4
          %s138 = scalar_lea.vmem %s0, %s137
        $region28: #{tpu_custom_call.1} parent=23 // pred_fallthru
          _
      $region24: #{tpu_custom_call.1} parent=5 // pred_fallthru
        _
      %p139 = scmp.le.s32.totalorder 1, %s12
      %p140 = scmp.lt.s32.totalorder %s12, 3
      %p141 = pnand %p139, %p140
      %p142 = pneg %p141
      // Predicated region
      $region29: #{tpu_custom_call.1} parent=5 // pred_check
        _
      $region30: #{tpu_custom_call.1} parent=5 // pred_check_branch
        %144 = sbr.rel (%p141) target = $region32
      $region31: #{tpu_custom_call.1} parent=5 // pred_region
        %s145 = ssub.s32 %s12, 1
        %p146 = scmp.lt.s32.totalorder %s17, 1
        %s147 = scalar_select %p146, %s17, 1
        %s148 = smul.addr %s147, 40
        %s149 = smul.addr %s148, 4
        %s150 = scalar_lea.vmem %s0, %s149
        %p151 = pneg %p38
        %p152 = pneg %p35
        %p153 = pneg %p59
        %p154 = pneg %p56
        %p155 = pneg %p80
        %p156 = pneg %p77
        %p157 = pneg %p106
        %p158 = pneg %p103
        %s159 = sand.u32 %s93, 1
        %s160 = scalar_lea.sflag [#allocation4], %s159
        %s161 = sand.u32 %s93, 1
        %s162 = smul.addr %s161, 64
        %s163 = scalar_lea.vmem [#allocation3], %s162
        %p164 = scmp.lt.s32.totalorder %s17, 1
        %s165 = scalar_select %p164, %s17, 1
        %s166 = smul.addr %s165, 40
        %s167 = smul.addr %s166, 4
        %s168 = scalar_lea.vmem %s0, %s167
        %v172 = vlaneseq
        %v173 = vshrl.u32 %v172, 7
        %v174 = vadd.s32 %v173, 8
        %v175 = vadd.s32 %v173, 16
        %v176 = vadd.s32 %v173, 24
        %v177 = vadd.s32 %v173, 32
        %v178 = vadd.s32 %v173, 40
        %v179 = vadd.s32 %v173, 48
        %v180 = vadd.s32 %v173, 56
        %v181 = vadd.s32 %v173, 64
        %v182 = vadd.s32 %v173, 72
        %v183 = vadd.s32 %v173, 80
        %v184 = vadd.s32 %v173, 88
        %v185 = vadd.s32 %v173, 96
        %v186 = vadd.s32 %v173, 104
        %v187 = vadd.s32 %v173, 112
        %v188 = vadd.s32 %v173, 120
        %v189 = vadd.s32 %v173, 128
        %v190 = vadd.s32 %v173, 136
        %v191 = vadd.s32 %v173, 144
        %v192 = vadd.s32 %v173, 152
        %v193 = vadd.s32 %v173, 160
        %v194 = vadd.s32 %v173, 168
        %v195 = vadd.s32 %v173, 176
        %v196 = vadd.s32 %v173, 184
        %v197 = vadd.s32 %v173, 192
        %v198 = vadd.s32 %v173, 200
        %v199 = vadd.s32 %v173, 208
        %v200 = vadd.s32 %v173, 216
        %v201 = vadd.s32 %v173, 224
        %v202 = vadd.s32 %v173, 232
        %v203 = vadd.s32 %v173, 240
        %v204 = vadd.s32 %v173, 248
        %vm205 = vcmp.lt.s32.totalorder %v173, 0
        %v206 = vsub.s32 0, %v173
        %v207 = vsel %vm205, %v206, %v173
        %v208 = vshrl.u32 %v207, 4
        %v209 = vand.u32 %v207, 15
        %v210 = vsub.s32 0, %v209
        %v211 = vsel %vm205, %v210, %v209
        %vm212 = vcmp.lt.s32.totalorder %v174, 0
        %v213 = vsub.s32 0, %v174
        %v214 = vsel %vm212, %v213, %v174
        %v215 = vshrl.u32 %v214, 4
        %v216 = vand.u32 %v214, 15
        %v217 = vsub.s32 0, %v216
        %v218 = vsel %vm212, %v217, %v216
        %vm219 = vcmp.lt.s32.totalorder %v175, 0
        %v220 = vsub.s32 0, %v175
        %v221 = vsel %vm219, %v220, %v175
        %v222 = vshrl.u32 %v221, 4
        %v223 = vand.u32 %v221, 15
        %v224 = vsub.s32 0, %v223
        %v225 = vsel %vm219, %v224, %v223
        %vm226 = vcmp.lt.s32.totalorder %v176, 0
        %v227 = vsub.s32 0, %v176
        %v228 = vsel %vm226, %v227, %v176
        %v229 = vshrl.u32 %v228, 4
        %v230 = vand.u32 %v228, 15
        %v231 = vsub.s32 0, %v230
        %v232 = vsel %vm226, %v231, %v230
        %vm233 = vcmp.lt.s32.totalorder %v177, 0
        %v234 = vsub.s32 0, %v177
        %v235 = vsel %vm233, %v234, %v177
        %v236 = vshrl.u32 %v235, 4
        %v237 = vand.u32 %v235, 15
        %v238 = vsub.s32 0, %v237
        %v239 = vsel %vm233, %v238, %v237
        %vm240 = vcmp.lt.s32.totalorder %v178, 0
        %v241 = vsub.s32 0, %v178
        %v242 = vsel %vm240, %v241, %v178
        %v243 = vshrl.u32 %v242, 4
        %v244 = vand.u32 %v242, 15
        %v245 = vsub.s32 0, %v244
        %v246 = vsel %vm240, %v245, %v244
        %vm247 = vcmp.lt.s32.totalorder %v179, 0
        %v248 = vsub.s32 0, %v179
        %v249 = vsel %vm247, %v248, %v179
        %v250 = vshrl.u32 %v249, 4
        %v251 = vand.u32 %v249, 15
        %v252 = vsub.s32 0, %v251
        %v253 = vsel %vm247, %v252, %v251
        %vm254 = vcmp.lt.s32.totalorder %v180, 0
        %v255 = vsub.s32 0, %v180
        %v256 = vsel %vm254, %v255, %v180
        %v257 = vshrl.u32 %v256, 4
        %v258 = vand.u32 %v256, 15
        %v259 = vsub.s32 0, %v258
        %v260 = vsel %vm254, %v259, %v258
        %vm261 = vcmp.lt.s32.totalorder %v181, 0
        %v262 = vsub.s32 0, %v181
        %v263 = vsel %vm261, %v262, %v181
        %v264 = vshrl.u32 %v263, 4
        %v265 = vand.u32 %v263, 15
        %v266 = vsub.s32 0, %v265
        %v267 = vsel %vm261, %v266, %v265
        %vm268 = vcmp.lt.s32.totalorder %v182, 0
        %v269 = vsub.s32 0, %v182
        %v270 = vsel %vm268, %v269, %v182
        %v271 = vshrl.u32 %v270, 4
        %v272 = vand.u32 %v270, 15
        %v273 = vsub.s32 0, %v272
        %v274 = vsel %vm268, %v273, %v272
        %vm275 = vcmp.lt.s32.totalorder %v183, 0
        %v276 = vsub.s32 0, %v183
        %v277 = vsel %vm275, %v276, %v183
        %v278 = vshrl.u32 %v277, 4
        %v279 = vand.u32 %v277, 15
        %v280 = vsub.s32 0, %v279
        %v281 = vsel %vm275, %v280, %v279
        %vm282 = vcmp.lt.s32.totalorder %v184, 0
        %v283 = vsub.s32 0, %v184
        %v284 = vsel %vm282, %v283, %v184
        %v285 = vshrl.u32 %v284, 4
        %v286 = vand.u32 %v284, 15
        %v287 = vsub.s32 0, %v286
        %v288 = vsel %vm282, %v287, %v286
        %vm289 = vcmp.lt.s32.totalorder %v185, 0
        %v290 = vsub.s32 0, %v185
        %v291 = vsel %vm289, %v290, %v185
        %v292 = vshrl.u32 %v291, 4
        %v293 = vand.u32 %v291, 15
        %v294 = vsub.s32 0, %v293
        %v295 = vsel %vm289, %v294, %v293
        %vm296 = vcmp.lt.s32.totalorder %v186, 0
        %v297 = vsub.s32 0, %v186
        %v298 = vsel %vm296, %v297, %v186
        %v299 = vshrl.u32 %v298, 4
        %v300 = vand.u32 %v298, 15
        %v301 = vsub.s32 0, %v300
        %v302 = vsel %vm296, %v301, %v300
        %vm303 = vcmp.lt.s32.totalorder %v187, 0
        %v304 = vsub.s32 0, %v187
        %v305 = vsel %vm303, %v304, %v187
        %v306 = vshrl.u32 %v305, 4
        %v307 = vand.u32 %v305, 15
        %v308 = vsub.s32 0, %v307
        %v309 = vsel %vm303, %v308, %v307
        %vm310 = vcmp.lt.s32.totalorder %v188, 0
        %v311 = vsub.s32 0, %v188
        %v312 = vsel %vm310, %v311, %v188
        %v313 = vshrl.u32 %v312, 4
        %v314 = vand.u32 %v312, 15
        %v315 = vsub.s32 0, %v314
        %v316 = vsel %vm310, %v315, %v314
        %vm317 = vcmp.lt.s32.totalorder %v189, 0
        %v318 = vsub.s32 0, %v189
        %v319 = vsel %vm317, %v318, %v189
        %v320 = vshrl.u32 %v319, 4
        %v321 = vand.u32 %v319, 15
        %v322 = vsub.s32 0, %v321
        %v323 = vsel %vm317, %v322, %v321
        %vm324 = vcmp.lt.s32.totalorder %v190, 0
        %v325 = vsub.s32 0, %v190
        %v326 = vsel %vm324, %v325, %v190
        %v327 = vshrl.u32 %v326, 4
        %v328 = vand.u32 %v326, 15
        %v329 = vsub.s32 0, %v328
        %v330 = vsel %vm324, %v329, %v328
        %vm331 = vcmp.lt.s32.totalorder %v191, 0
        %v332 = vsub.s32 0, %v191
        %v333 = vsel %vm331, %v332, %v191
        %v334 = vshrl.u32 %v333, 4
        %v335 = vand.u32 %v333, 15
        %v336 = vsub.s32 0, %v335
        %v337 = vsel %vm331, %v336, %v335
        %vm338 = vcmp.lt.s32.totalorder %v192, 0
        %v339 = vsub.s32 0, %v192
        %v340 = vsel %vm338, %v339, %v192
        %v341 = vshrl.u32 %v340, 4
        %v342 = vand.u32 %v340, 15
        %v343 = vsub.s32 0, %v342
        %v344 = vsel %vm338, %v343, %v342
        %vm345 = vcmp.lt.s32.totalorder %v193, 0
        %v346 = vsub.s32 0, %v193
        %v347 = vsel %vm345, %v346, %v193
        %v348 = vshrl.u32 %v347, 4
        %v349 = vand.u32 %v347, 15
        %v350 = vsub.s32 0, %v349
        %v351 = vsel %vm345, %v350, %v349
        %vm352 = vcmp.lt.s32.totalorder %v194, 0
        %v353 = vsub.s32 0, %v194
        %v354 = vsel %vm352, %v353, %v194
        %v355 = vshrl.u32 %v354, 4
        %v356 = vand.u32 %v354, 15
        %v357 = vsub.s32 0, %v356
        %v358 = vsel %vm352, %v357, %v356
        %vm359 = vcmp.lt.s32.totalorder %v195, 0
        %v360 = vsub.s32 0, %v195
        %v361 = vsel %vm359, %v360, %v195
        %v362 = vshrl.u32 %v361, 4
        %v363 = vand.u32 %v361, 15
        %v364 = vsub.s32 0, %v363
        %v365 = vsel %vm359, %v364, %v363
        %vm366 = vcmp.lt.s32.totalorder %v196, 0
        %v367 = vsub.s32 0, %v196
        %v368 = vsel %vm366, %v367, %v196
        %v369 = vshrl.u32 %v368, 4
        %v370 = vand.u32 %v368, 15
        %v371 = vsub.s32 0, %v370
        %v372 = vsel %vm366, %v371, %v370
        %vm373 = vcmp.lt.s32.totalorder %v197, 0
        %v374 = vsub.s32 0, %v197
        %v375 = vsel %vm373, %v374, %v197
        %v376 = vshrl.u32 %v375, 4
        %v377 = vand.u32 %v375, 15
        %v378 = vsub.s32 0, %v377
        %v379 = vsel %vm373, %v378, %v377
        %vm380 = vcmp.lt.s32.totalorder %v198, 0
        %v381 = vsub.s32 0, %v198
        %v382 = vsel %vm380, %v381, %v198
        %v383 = vshrl.u32 %v382, 4
        %v384 = vand.u32 %v382, 15
        %v385 = vsub.s32 0, %v384
        %v386 = vsel %vm380, %v385, %v384
        %vm387 = vcmp.lt.s32.totalorder %v199, 0
        %v388 = vsub.s32 0, %v199
        %v389 = vsel %vm387, %v388, %v199
        %v390 = vshrl.u32 %v389, 4
        %v391 = vand.u32 %v389, 15
        %v392 = vsub.s32 0, %v391
        %v393 = vsel %vm387, %v392, %v391
        %vm394 = vcmp.lt.s32.totalorder %v200, 0
        %v395 = vsub.s32 0, %v200
        %v396 = vsel %vm394, %v395, %v200
        %v397 = vshrl.u32 %v396, 4
        %v398 = vand.u32 %v396, 15
        %v399 = vsub.s32 0, %v398
        %v400 = vsel %vm394, %v399, %v398
        %vm401 = vcmp.lt.s32.totalorder %v201, 0
        %v402 = vsub.s32 0, %v201
        %v403 = vsel %vm401, %v402, %v201
        %v404 = vshrl.u32 %v403, 4
        %v405 = vand.u32 %v403, 15
        %v406 = vsub.s32 0, %v405
        %v407 = vsel %vm401, %v406, %v405
        %vm408 = vcmp.lt.s32.totalorder %v202, 0
        %v409 = vsub.s32 0, %v202
        %v410 = vsel %vm408, %v409, %v202
        %v411 = vshrl.u32 %v410, 4
        %v412 = vand.u32 %v410, 15
        %v413 = vsub.s32 0, %v412
        %v414 = vsel %vm408, %v413, %v412
        %vm415 = vcmp.lt.s32.totalorder %v203, 0
        %v416 = vsub.s32 0, %v203
        %v417 = vsel %vm415, %v416, %v203
        %v418 = vshrl.u32 %v417, 4
        %v419 = vand.u32 %v417, 15
        %v420 = vsub.s32 0, %v419
        %v421 = vsel %vm415, %v420, %v419
        %vm422 = vcmp.lt.s32.totalorder %v204, 0
        %v423 = vsub.s32 0, %v204
        %v424 = vsel %vm422, %v423, %v204
        %v425 = vshrl.u32 %v424, 4
        %v426 = vand.u32 %v424, 15
        %v427 = vsub.s32 0, %v426
        %v428 = vsel %vm422, %v427, %v426
        %vm429 = vcmp.ne.s32.totalorder %v211, 0
        %vm430 = vcmp.ne.s32.totalorder %v218, 0
        %vm431 = vcmp.ne.s32.totalorder %v225, 0
        %vm432 = vcmp.ne.s32.totalorder %v232, 0
        %vm433 = vcmp.ne.s32.totalorder %v239, 0
        %vm434 = vcmp.ne.s32.totalorder %v246, 0
        %vm435 = vcmp.ne.s32.totalorder %v253, 0
        %vm436 = vcmp.ne.s32.totalorder %v260, 0
        %vm437 = vcmp.ne.s32.totalorder %v267, 0
        %vm438 = vcmp.ne.s32.totalorder %v274, 0
        %vm439 = vcmp.ne.s32.totalorder %v281, 0
        %vm440 = vcmp.ne.s32.totalorder %v288, 0
        %vm441 = vcmp.ne.s32.totalorder %v295, 0
        %vm442 = vcmp.ne.s32.totalorder %v302, 0
        %vm443 = vcmp.ne.s32.totalorder %v309, 0
        %vm444 = vcmp.ne.s32.totalorder %v316, 0
        %vm445 = vcmp.ne.s32.totalorder %v323, 0
        %vm446 = vcmp.ne.s32.totalorder %v330, 0
        %vm447 = vcmp.ne.s32.totalorder %v337, 0
        %vm448 = vcmp.ne.s32.totalorder %v344, 0
        %vm449 = vcmp.ne.s32.totalorder %v351, 0
        %vm450 = vcmp.ne.s32.totalorder %v358, 0
        %vm451 = vcmp.ne.s32.totalorder %v365, 0
        %vm452 = vcmp.ne.s32.totalorder %v372, 0
        %vm453 = vcmp.ne.s32.totalorder %v379, 0
        %vm454 = vcmp.ne.s32.totalorder %v386, 0
        %vm455 = vcmp.ne.s32.totalorder %v393, 0
        %vm456 = vcmp.ne.s32.totalorder %v400, 0
        %vm457 = vcmp.ne.s32.totalorder %v407, 0
        %vm458 = vcmp.ne.s32.totalorder %v414, 0
        %vm459 = vcmp.ne.s32.totalorder %v421, 0
        %vm460 = vcmp.ne.s32.totalorder %v428, 0
        %vm461 = vcmp.lt.s32.totalorder %v211, 0
        %vm462 = vcmp.lt.s32.totalorder %v218, 0
        %vm463 = vcmp.lt.s32.totalorder %v225, 0
        %vm464 = vcmp.lt.s32.totalorder %v232, 0
        %vm465 = vcmp.lt.s32.totalorder %v239, 0
        %vm466 = vcmp.lt.s32.totalorder %v246, 0
        %vm467 = vcmp.lt.s32.totalorder %v253, 0
        %vm468 = vcmp.lt.s32.totalorder %v260, 0
        %vm469 = vcmp.lt.s32.totalorder %v267, 0
        %vm470 = vcmp.lt.s32.totalorder %v274, 0
        %vm471 = vcmp.lt.s32.totalorder %v281, 0
        %vm472 = vcmp.lt.s32.totalorder %v288, 0
        %vm473 = vcmp.lt.s32.totalorder %v295, 0
        %vm474 = vcmp.lt.s32.totalorder %v302, 0
        %vm475 = vcmp.lt.s32.totalorder %v309, 0
        %vm476 = vcmp.lt.s32.totalorder %v316, 0
        %vm477 = vcmp.lt.s32.totalorder %v323, 0
        %vm478 = vcmp.lt.s32.totalorder %v330, 0
        %vm479 = vcmp.lt.s32.totalorder %v337, 0
        %vm480 = vcmp.lt.s32.totalorder %v344, 0
        %vm481 = vcmp.lt.s32.totalorder %v351, 0
        %vm482 = vcmp.lt.s32.totalorder %v358, 0
        %vm483 = vcmp.lt.s32.totalorder %v365, 0
        %vm484 = vcmp.lt.s32.totalorder %v372, 0
        %vm485 = vcmp.lt.s32.totalorder %v379, 0
        %vm486 = vcmp.lt.s32.totalorder %v386, 0
        %vm487 = vcmp.lt.s32.totalorder %v393, 0
        %vm488 = vcmp.lt.s32.totalorder %v400, 0
        %vm489 = vcmp.lt.s32.totalorder %v407, 0
        %vm490 = vcmp.lt.s32.totalorder %v414, 0
        %vm491 = vcmp.lt.s32.totalorder %v421, 0
        %vm492 = vcmp.lt.s32.totalorder %v428, 0
        %vm493 = vmand %vm461, %vm429
        %vm494 = vmand %vm462, %vm430
        %vm495 = vmand %vm463, %vm431
        %vm496 = vmand %vm464, %vm432
        %vm497 = vmand %vm465, %vm433
        %vm498 = vmand %vm466, %vm434
        %vm499 = vmand %vm467, %vm435
        %vm500 = vmand %vm468, %vm436
        %vm501 = vmand %vm469, %vm437
        %vm502 = vmand %vm470, %vm438
        %vm503 = vmand %vm471, %vm439
        %vm504 = vmand %vm472, %vm440
        %vm505 = vmand %vm473, %vm441
        %vm506 = vmand %vm474, %vm442
        %vm507 = vmand %vm475, %vm443
        %vm508 = vmand %vm476, %vm444
        %vm509 = vmand %vm477, %vm445
        %vm510 = vmand %vm478, %vm446
        %vm511 = vmand %vm479, %vm447
        %vm512 = vmand %vm480, %vm448
        %vm513 = vmand %vm481, %vm449
        %vm514 = vmand %vm482, %vm450
        %vm515 = vmand %vm483, %vm451
        %vm516 = vmand %vm484, %vm452
        %vm517 = vmand %vm485, %vm453
        %vm518 = vmand %vm486, %vm454
        %vm519 = vmand %vm487, %vm455
        %vm520 = vmand %vm488, %vm456
        %vm521 = vmand %vm489, %vm457
        %vm522 = vmand %vm490, %vm458
        %vm523 = vmand %vm491, %vm459
        %vm524 = vmand %vm492, %vm460
        %v525 = vadd.s32 %v211, 16
        %v526 = vadd.s32 %v218, 16
        %v527 = vadd.s32 %v225, 16
        %v528 = vadd.s32 %v232, 16
        %v529 = vadd.s32 %v239, 16
        %v530 = vadd.s32 %v246, 16
        %v531 = vadd.s32 %v253, 16
        %v532 = vadd.s32 %v260, 16
        %v533 = vadd.s32 %v267, 16
        %v534 = vadd.s32 %v274, 16
        %v535 = vadd.s32 %v281, 16
        %v536 = vadd.s32 %v288, 16
        %v537 = vadd.s32 %v295, 16
        %v538 = vadd.s32 %v302, 16
        %v539 = vadd.s32 %v309, 16
        %v540 = vadd.s32 %v316, 16
        %v541 = vadd.s32 %v323, 16
        %v542 = vadd.s32 %v330, 16
        %v543 = vadd.s32 %v337, 16
        %v544 = vadd.s32 %v344, 16
        %v545 = vadd.s32 %v351, 16
        %v546 = vadd.s32 %v358, 16
        %v547 = vadd.s32 %v365, 16
        %v548 = vadd.s32 %v372, 16
        %v549 = vadd.s32 %v379, 16
        %v550 = vadd.s32 %v386, 16
        %v551 = vadd.s32 %v393, 16
        %v552 = vadd.s32 %v400, 16
        %v553 = vadd.s32 %v407, 16
        %v554 = vadd.s32 %v414, 16
        %v555 = vadd.s32 %v421, 16
        %v556 = vadd.s32 %v428, 16
        %v557 = vsel %vm493, %v525, %v211
        %v558 = vsel %vm494, %v526, %v218
        %v559 = vsel %vm495, %v527, %v225
        %v560 = vsel %vm496, %v528, %v232
        %v561 = vsel %vm497, %v529, %v239
        %v562 = vsel %vm498, %v530, %v246
        %v563 = vsel %vm499, %v531, %v253
        %v564 = vsel %vm500, %v532, %v260
        %v565 = vsel %vm501, %v533, %v267
        %v566 = vsel %vm502, %v534, %v274
        %v567 = vsel %vm503, %v535, %v281
        %v568 = vsel %vm504, %v536, %v288
        %v569 = vsel %vm505, %v537, %v295
        %v570 = vsel %vm506, %v538, %v302
        %v571 = vsel %vm507, %v539, %v309
        %v572 = vsel %vm508, %v540, %v316
        %v573 = vsel %vm509, %v541, %v323
        %v574 = vsel %vm510, %v542, %v330
        %v575 = vsel %vm511, %v543, %v337
        %v576 = vsel %vm512, %v544, %v344
        %v577 = vsel %vm513, %v545, %v351
        %v578 = vsel %vm514, %v546, %v358
        %v579 = vsel %vm515, %v547, %v365
        %v580 = vsel %vm516, %v548, %v372
        %v581 = vsel %vm517, %v549, %v379
        %v582 = vsel %vm518, %v550, %v386
        %v583 = vsel %vm519, %v551, %v393
        %v584 = vsel %vm520, %v552, %v400
        %v585 = vsel %vm521, %v553, %v407
        %v586 = vsel %vm522, %v554, %v414
        %v587 = vsel %vm523, %v555, %v421
        %v588 = vsel %vm524, %v556, %v428
        %v589 = vld [vmem:[%s168 + $0x4] sm:$0x8]
        %v590 = vld [vmem:[%s168 + $0x8] sm:$0xf]
        %v591 = vld [vmem:[%s168 + $0xc] sm:$0xf]
        %v592 = vld [vmem:[%s168 + $0x10] sm:$0xf]
        %v593 = vld [vmem:[%s168 + $0x14] sm:$0xf]
        %v594 = vld [vmem:[%s168 + $0x18] sm:$0xf]
        %v595 = vld [vmem:[%s168 + $0x1c] sm:$0xf]
        %v596 = vld [vmem:[%s168 + $0x20] sm:$0xf]
        %v597 = vld [vmem:[%s168 + $0x24] sm:$0xf]
        %v598 = vld [vmem:[%s168 + $0x28] sm:$0xf]
        %v599 = vld [vmem:[%s168 + $0x2c] sm:$0xf]
        %v600 = vld [vmem:[%s168 + $0x30] sm:$0xf]
        %v601 = vld [vmem:[%s168 + $0x34] sm:$0xf]
        %v602 = vld [vmem:[%s168 + $0x38] sm:$0xf]
        %v603 = vld [vmem:[%s168 + $0x3c] sm:$0xf]
        %v604 = vld [vmem:[%s168 + $0x40] sm:$0xf]
        %v605 = vld [vmem:[%s168 + $0x44] sm:$0xf]
        %v606 = vld [vmem:[%s168 + $0x48] sm:$0xf]
        %v607 = vld [vmem:[%s168 + $0x4c] sm:$0xf]
        %v608 = vld [vmem:[%s168 + $0x50] sm:$0xf]
        %v609 = vld [vmem:[%s168 + $0x54] sm:$0xf]
        %v610 = vld [vmem:[%s168 + $0x58] sm:$0xf]
        %v611 = vld [vmem:[%s168 + $0x5c] sm:$0xf]
        %v612 = vld [vmem:[%s168 + $0x60] sm:$0xf]
        %v613 = vld [vmem:[%s168 + $0x64] sm:$0xf]
        %v614 = vld [vmem:[%s168 + $0x68] sm:$0xf]
        %v615 = vld [vmem:[%s168 + $0x6c] sm:$0xf]
        %v616 = vld [vmem:[%s168 + $0x70] sm:$0xf]
        %v617 = vld [vmem:[%s168 + $0x74] sm:$0xf]
        %v618 = vld [vmem:[%s168 + $0x78] sm:$0xf]
        %v619 = vld [vmem:[%s168 + $0x7c] sm:$0xf]
        %v620 = vld [vmem:[%s168 + $0x80] sm:$0xf]
        %v621 = vld [vmem:[%s168 + $0x84] sm:$0xf]
        %vm622 = vcmp.ne.s32.totalorder %v557, 0
        %vm623 = vcmp.ne.s32.totalorder %v558, 0
        %vm624 = vcmp.ne.s32.totalorder %v559, 0
        %vm625 = vcmp.ne.s32.totalorder %v560, 0
        %vm626 = vcmp.ne.s32.totalorder %v561, 0
        %vm627 = vcmp.ne.s32.totalorder %v562, 0
        %vm628 = vcmp.ne.s32.totalorder %v563, 0
        %vm629 = vcmp.ne.s32.totalorder %v564, 0
        %vm630 = vcmp.ne.s32.totalorder %v565, 0
        %vm631 = vcmp.ne.s32.totalorder %v566, 0
        %vm632 = vcmp.ne.s32.totalorder %v567, 0
        %vm633 = vcmp.ne.s32.totalorder %v568, 0
        %vm634 = vcmp.ne.s32.totalorder %v569, 0
        %vm635 = vcmp.ne.s32.totalorder %v570, 0
        %vm636 = vcmp.ne.s32.totalorder %v571, 0
        %vm637 = vcmp.ne.s32.totalorder %v572, 0
        %vm638 = vcmp.ne.s32.totalorder %v573, 0
        %vm639 = vcmp.ne.s32.totalorder %v574, 0
        %vm640 = vcmp.ne.s32.totalorder %v575, 0
        %vm641 = vcmp.ne.s32.totalorder %v576, 0
        %vm642 = vcmp.ne.s32.totalorder %v577, 0
        %vm643 = vcmp.ne.s32.totalorder %v578, 0
        %vm644 = vcmp.ne.s32.totalorder %v579, 0
        %vm645 = vcmp.ne.s32.totalorder %v580, 0
        %vm646 = vcmp.ne.s32.totalorder %v581, 0
        %vm647 = vcmp.ne.s32.totalorder %v582, 0
        %vm648 = vcmp.ne.s32.totalorder %v583, 0
        %vm649 = vcmp.ne.s32.totalorder %v584, 0
        %vm650 = vcmp.ne.s32.totalorder %v585, 0
        %vm651 = vcmp.ne.s32.totalorder %v586, 0
        %vm652 = vcmp.ne.s32.totalorder %v587, 0
        %vm653 = vcmp.ne.s32.totalorder %v588, 0
        %v654 = vsel %vm622, 1, 0
        %v655 = vsel %vm623, 1, 0
        %v656 = vsel %vm624, 1, 0
        %v657 = vsel %vm625, 1, 0
        %v658 = vsel %vm626, 1, 0
        %v659 = vsel %vm627, 1, 0
        %v660 = vsel %vm628, 1, 0
        %v661 = vsel %vm629, 1, 0
        %v662 = vsel %vm630, 1, 0
        %v663 = vsel %vm631, 1, 0
        %v664 = vsel %vm632, 1, 0
        %v665 = vsel %vm633, 1, 0
        %v666 = vsel %vm634, 1, 0
        %v667 = vsel %vm635, 1, 0
        %v668 = vsel %vm636, 1, 0
        %v669 = vsel %vm637, 1, 0
        %v670 = vsel %vm638, 1, 0
        %v671 = vsel %vm639, 1, 0
        %v672 = vsel %vm640, 1, 0
        %v673 = vsel %vm641, 1, 0
        %v674 = vsel %vm642, 1, 0
        %v675 = vsel %vm643, 1, 0
        %v676 = vsel %vm644, 1, 0
        %v677 = vsel %vm645, 1, 0
        %v678 = vsel %vm646, 1, 0
        %v679 = vsel %vm647, 1, 0
        %v680 = vsel %vm648, 1, 0
        %v681 = vsel %vm649, 1, 0
        %v682 = vsel %vm650, 1, 0
        %v683 = vsel %vm651, 1, 0
        %v684 = vsel %vm652, 1, 0
        %v685 = vsel %vm653, 1, 0
        %vm686 = vcmp.eq.s32.totalorder %v654, 1
        %vm687 = vcmp.eq.s32.totalorder %v655, 1
        %vm688 = vcmp.eq.s32.totalorder %v656, 1
        %vm689 = vcmp.eq.s32.totalorder %v657, 1
        %vm690 = vcmp.eq.s32.totalorder %v658, 1
        %vm691 = vcmp.eq.s32.totalorder %v659, 1
        %vm692 = vcmp.eq.s32.totalorder %v660, 1
        %vm693 = vcmp.eq.s32.totalorder %v661, 1
        %vm694 = vcmp.eq.s32.totalorder %v662, 1
        %vm695 = vcmp.eq.s32.totalorder %v663, 1
        %vm696 = vcmp.eq.s32.totalorder %v664, 1
        %vm697 = vcmp.eq.s32.totalorder %v665, 1
        %vm698 = vcmp.eq.s32.totalorder %v666, 1
        %vm699 = vcmp.eq.s32.totalorder %v667, 1
        %vm700 = vcmp.eq.s32.totalorder %v668, 1
        %vm701 = vcmp.eq.s32.totalorder %v669, 1
        %vm702 = vcmp.eq.s32.totalorder %v670, 1
        %vm703 = vcmp.eq.s32.totalorder %v671, 1
        %vm704 = vcmp.eq.s32.totalorder %v672, 1
        %vm705 = vcmp.eq.s32.totalorder %v673, 1
        %vm706 = vcmp.eq.s32.totalorder %v674, 1
        %vm707 = vcmp.eq.s32.totalorder %v675, 1
        %vm708 = vcmp.eq.s32.totalorder %v676, 1
        %vm709 = vcmp.eq.s32.totalorder %v677, 1
        %vm710 = vcmp.eq.s32.totalorder %v678, 1
        %vm711 = vcmp.eq.s32.totalorder %v679, 1
        %vm712 = vcmp.eq.s32.totalorder %v680, 1
        %vm713 = vcmp.eq.s32.totalorder %v681, 1
        %vm714 = vcmp.eq.s32.totalorder %v682, 1
        %vm715 = vcmp.eq.s32.totalorder %v683, 1
        %vm716 = vcmp.eq.s32.totalorder %v684, 1
        %vm717 = vcmp.eq.s32.totalorder %v685, 1
        %vm718 = vmpackc.low %vm686, %vm686
        %vm719 = vmpackc.low %vm687, %vm687
        %vm720 = vmpackc.low %vm688, %vm688
        %vm721 = vmpackc.low %vm689, %vm689
        %vm722 = vmpackc.low %vm690, %vm690
        %vm723 = vmpackc.low %vm691, %vm691
        %vm724 = vmpackc.low %vm692, %vm692
        %vm725 = vmpackc.low %vm693, %vm693
        %vm726 = vmpackc.low %vm694, %vm694
        %vm727 = vmpackc.low %vm695, %vm695
        %vm728 = vmpackc.low %vm696, %vm696
        %vm729 = vmpackc.low %vm697, %vm697
        %vm730 = vmpackc.low %vm698, %vm698
        %vm731 = vmpackc.low %vm699, %vm699
        %vm732 = vmpackc.low %vm700, %vm700
        %vm733 = vmpackc.low %vm701, %vm701
        %vm734 = vmpackc.low %vm702, %vm702
        %vm735 = vmpackc.low %vm703, %vm703
        %vm736 = vmpackc.low %vm704, %vm704
        %vm737 = vmpackc.low %vm705, %vm705
        %vm738 = vmpackc.low %vm706, %vm706
        %vm739 = vmpackc.low %vm707, %vm707
        %vm740 = vmpackc.low %vm708, %vm708
        %vm741 = vmpackc.low %vm709, %vm709
        %vm742 = vmpackc.low %vm710, %vm710
        %vm743 = vmpackc.low %vm711, %vm711
        %vm744 = vmpackc.low %vm712, %vm712
        %vm745 = vmpackc.low %vm713, %vm713
        %vm746 = vmpackc.low %vm714, %vm714
        %vm747 = vmpackc.low %vm715, %vm715
        %vm748 = vmpackc.low %vm716, %vm716
        %vm749 = vmpackc.low %vm717, %vm717
        %v750 = vsel %vm718, 65537, 0
        %v751 = vsel %vm719, 65537, 0
        %v752 = vsel %vm720, 65537, 0
        %v753 = vsel %vm721, 65537, 0
        %v754 = vsel %vm722, 65537, 0
        %v755 = vsel %vm723, 65537, 0
        %v756 = vsel %vm724, 65537, 0
        %v757 = vsel %vm725, 65537, 0
        %v758 = vsel %vm726, 65537, 0
        %v759 = vsel %vm727, 65537, 0
        %v760 = vsel %vm728, 65537, 0
        %v761 = vsel %vm729, 65537, 0
        %v762 = vsel %vm730, 65537, 0
        %v763 = vsel %vm731, 65537, 0
        %v764 = vsel %vm732, 65537, 0
        %v765 = vsel %vm733, 65537, 0
        %v766 = vsel %vm734, 65537, 0
        %v767 = vsel %vm735, 65537, 0
        %v768 = vsel %vm736, 65537, 0
        %v769 = vsel %vm737, 65537, 0
        %v770 = vsel %vm738, 65537, 0
        %v771 = vsel %vm739, 65537, 0
        %v772 = vsel %vm740, 65537, 0
        %v773 = vsel %vm741, 65537, 0
        %v774 = vsel %vm742, 65537, 0
        %v775 = vsel %vm743, 65537, 0
        %v776 = vsel %vm744, 65537, 0
        %v777 = vsel %vm745, 65537, 0
        %v778 = vsel %vm746, 65537, 0
        %v779 = vsel %vm747, 65537, 0
        %v780 = vsel %vm748, 65537, 0
        %v781 = vsel %vm749, 65537, 0
        %vm782 = vsmask.f32 3328
        %vm783 = vsmask.f32 7440
        %vm784 = vmor %vm782, %vm783
        %v786 = vshll.u32 %v750, 16
        %v788 = vrot.slane %v786, 5
        %v789 = vshrl.u32 %v750, 16
        %v791 = vrot.slane %v789, 4
        %v792 = vor.u32 %v791, %v788
        %v793 = vrot.slane %v792, 4
        %v795 = vshll.u32 %v751, 16
        %v797 = vrot.slane %v795, 5
        %v798 = vsel %vm784, %v793, %v797
        %v799 = vshrl.u32 %v751, 16
        %v801 = vrot.slane %v799, 4
        %v802 = vor.u32 %v801, %v797
        %v803 = vrot.slane %v802, 4
        %v805 = vshll.u32 %v752, 16
        %v807 = vrot.slane %v805, 5
        %v808 = vsel %vm784, %v803, %v807
        %v809 = vshrl.u32 %v752, 16
        %v811 = vrot.slane %v809, 4
        %v812 = vor.u32 %v811, %v807
        %v813 = vrot.slane %v812, 4
        %v815 = vshll.u32 %v753, 16
        %v817 = vrot.slane %v815, 5
        %v818 = vsel %vm784, %v813, %v817
        %v819 = vshrl.u32 %v753, 16
        %v821 = vrot.slane %v819, 4
        %v822 = vor.u32 %v821, %v817
        %v823 = vrot.slane %v822, 4
        %v825 = vshll.u32 %v754, 16
        %v827 = vrot.slane %v825, 5
        %v828 = vsel %vm784, %v823, %v827
        %v829 = vshrl.u32 %v754, 16
        %v831 = vrot.slane %v829, 4
        %v832 = vor.u32 %v831, %v827
        %v833 = vrot.slane %v832, 4
        %v835 = vshll.u32 %v755, 16
        %v837 = vrot.slane %v835, 5
        %v838 = vsel %vm784, %v833, %v837
        %v839 = vshrl.u32 %v755, 16
        %v841 = vrot.slane %v839, 4
        %v842 = vor.u32 %v841, %v837
        %v843 = vrot.slane %v842, 4
        %v845 = vshll.u32 %v756, 16
        %v847 = vrot.slane %v845, 5
        %v848 = vsel %vm784, %v843, %v847
        %v849 = vshrl.u32 %v756, 16
        %v851 = vrot.slane %v849, 4
        %v852 = vor.u32 %v851, %v847
        %v853 = vrot.slane %v852, 4
        %v855 = vshll.u32 %v757, 16
        %v857 = vrot.slane %v855, 5
        %v858 = vsel %vm784, %v853, %v857
        %v859 = vshrl.u32 %v757, 16
        %v861 = vrot.slane %v859, 4
        %v862 = vor.u32 %v861, %v857
        %v863 = vrot.slane %v862, 4
        %v865 = vshll.u32 %v758, 16
        %v867 = vrot.slane %v865, 5
        %v868 = vsel %vm784, %v863, %v867
        %v869 = vshrl.u32 %v758, 16
        %v871 = vrot.slane %v869, 4
        %v872 = vor.u32 %v871, %v867
        %v873 = vrot.slane %v872, 4
        %v875 = vshll.u32 %v759, 16
        %v877 = vrot.slane %v875, 5
        %v878 = vsel %vm784, %v873, %v877
        %v879 = vshrl.u32 %v759, 16
        %v881 = vrot.slane %v879, 4
        %v882 = vor.u32 %v881, %v877
        %v883 = vrot.slane %v882, 4
        %v885 = vshll.u32 %v760, 16
        %v887 = vrot.slane %v885, 5
        %v888 = vsel %vm784, %v883, %v887
        %v889 = vshrl.u32 %v760, 16
        %v891 = vrot.slane %v889, 4
        %v892 = vor.u32 %v891, %v887
        %v893 = vrot.slane %v892, 4
        %v895 = vshll.u32 %v761, 16
        %v897 = vrot.slane %v895, 5
        %v898 = vsel %vm784, %v893, %v897
        %v899 = vshrl.u32 %v761, 16
        %v901 = vrot.slane %v899, 4
        %v902 = vor.u32 %v901, %v897
        %v903 = vrot.slane %v902, 4
        %v905 = vshll.u32 %v762, 16
        %v907 = vrot.slane %v905, 5
        %v908 = vsel %vm784, %v903, %v907
        %v909 = vshrl.u32 %v762, 16
        %v911 = vrot.slane %v909, 4
        %v912 = vor.u32 %v911, %v907
        %v913 = vrot.slane %v912, 4
        %v915 = vshll.u32 %v763, 16
        %v917 = vrot.slane %v915, 5
        %v918 = vsel %vm784, %v913, %v917
        %v919 = vshrl.u32 %v763, 16
        %v921 = vrot.slane %v919, 4
        %v922 = vor.u32 %v921, %v917
        %v923 = vrot.slane %v922, 4
        %v925 = vshll.u32 %v764, 16
        %v927 = vrot.slane %v925, 5
        %v928 = vsel %vm784, %v923, %v927
        %v929 = vshrl.u32 %v764, 16
        %v931 = vrot.slane %v929, 4
        %v932 = vor.u32 %v931, %v927
        %v933 = vrot.slane %v932, 4
        %v935 = vshll.u32 %v765, 16
        %v937 = vrot.slane %v935, 5
        %v938 = vsel %vm784, %v933, %v937
        %v939 = vshrl.u32 %v765, 16
        %v941 = vrot.slane %v939, 4
        %v942 = vor.u32 %v941, %v937
        %v943 = vrot.slane %v942, 4
        %v945 = vshll.u32 %v766, 16
        %v947 = vrot.slane %v945, 5
        %v948 = vsel %vm784, %v943, %v947
        %v949 = vshrl.u32 %v766, 16
        %v951 = vrot.slane %v949, 4
        %v952 = vor.u32 %v951, %v947
        %v953 = vrot.slane %v952, 4
        %v955 = vshll.u32 %v767, 16
        %v957 = vrot.slane %v955, 5
        %v958 = vsel %vm784, %v953, %v957
        %v959 = vshrl.u32 %v767, 16
        %v961 = vrot.slane %v959, 4
        %v962 = vor.u32 %v961, %v957
        %v963 = vrot.slane %v962, 4
        %v965 = vshll.u32 %v768, 16
        %v967 = vrot.slane %v965, 5
        %v968 = vsel %vm784, %v963, %v967
        %v969 = vshrl.u32 %v768, 16
        %v971 = vrot.slane %v969, 4
        %v972 = vor.u32 %v971, %v967
        %v973 = vrot.slane %v972, 4
        %v975 = vshll.u32 %v769, 16
        %v977 = vrot.slane %v975, 5
        %v978 = vsel %vm784, %v973, %v977
        %v979 = vshrl.u32 %v769, 16
        %v981 = vrot.slane %v979, 4
        %v982 = vor.u32 %v981, %v977
        %v983 = vrot.slane %v982, 4
        %v985 = vshll.u32 %v770, 16
        %v987 = vrot.slane %v985, 5
        %v988 = vsel %vm784, %v983, %v987
        %v989 = vshrl.u32 %v770, 16
        %v991 = vrot.slane %v989, 4
        %v992 = vor.u32 %v991, %v987
        %v993 = vrot.slane %v992, 4
        %v995 = vshll.u32 %v771, 16
        %v997 = vrot.slane %v995, 5
        %v998 = vsel %vm784, %v993, %v997
        %v999 = vshrl.u32 %v771, 16
        %v1001 = vrot.slane %v999, 4
        %v1002 = vor.u32 %v1001, %v997
        %v1003 = vrot.slane %v1002, 4
        %v1005 = vshll.u32 %v772, 16
        %v1007 = vrot.slane %v1005, 5
        %v1008 = vsel %vm784, %v1003, %v1007
        %v1009 = vshrl.u32 %v772, 16
        %v1011 = vrot.slane %v1009, 4
        %v1012 = vor.u32 %v1011, %v1007
        %v1013 = vrot.slane %v1012, 4
        %v1015 = vshll.u32 %v773, 16
        %v1017 = vrot.slane %v1015, 5
        %v1018 = vsel %vm784, %v1013, %v1017
        %v1019 = vshrl.u32 %v773, 16
        %v1021 = vrot.slane %v1019, 4
        %v1022 = vor.u32 %v1021, %v1017
        %v1023 = vrot.slane %v1022, 4
        %v1025 = vshll.u32 %v774, 16
        %v1027 = vrot.slane %v1025, 5
        %v1028 = vsel %vm784, %v1023, %v1027
        %v1029 = vshrl.u32 %v774, 16
        %v1031 = vrot.slane %v1029, 4
        %v1032 = vor.u32 %v1031, %v1027
        %v1033 = vrot.slane %v1032, 4
        %v1035 = vshll.u32 %v775, 16
        %v1037 = vrot.slane %v1035, 5
        %v1038 = vsel %vm784, %v1033, %v1037
        %v1039 = vshrl.u32 %v775, 16
        %v1041 = vrot.slane %v1039, 4
        %v1042 = vor.u32 %v1041, %v1037
        %v1043 = vrot.slane %v1042, 4
        %v1045 = vshll.u32 %v776, 16
        %v1047 = vrot.slane %v1045, 5
        %v1048 = vsel %vm784, %v1043, %v1047
        %v1049 = vshrl.u32 %v776, 16
        %v1051 = vrot.slane %v1049, 4
        %v1052 = vor.u32 %v1051, %v1047
        %v1053 = vrot.slane %v1052, 4
        %v1055 = vshll.u32 %v777, 16
        %v1057 = vrot.slane %v1055, 5
        %v1058 = vsel %vm784, %v1053, %v1057
        %v1059 = vshrl.u32 %v777, 16
        %v1061 = vrot.slane %v1059, 4
        %v1062 = vor.u32 %v1061, %v1057
        %v1063 = vrot.slane %v1062, 4
        %v1065 = vshll.u32 %v778, 16
        %v1067 = vrot.slane %v1065, 5
        %v1068 = vsel %vm784, %v1063, %v1067
        %v1069 = vshrl.u32 %v778, 16
        %v1071 = vrot.slane %v1069, 4
        %v1072 = vor.u32 %v1071, %v1067
        %v1073 = vrot.slane %v1072, 4
        %v1075 = vshll.u32 %v779, 16
        %v1077 = vrot.slane %v1075, 5
        %v1078 = vsel %vm784, %v1073, %v1077
        %v1079 = vshrl.u32 %v779, 16
        %v1081 = vrot.slane %v1079, 4
        %v1082 = vor.u32 %v1081, %v1077
        %v1083 = vrot.slane %v1082, 4
        %v1085 = vshll.u32 %v780, 16
        %v1087 = vrot.slane %v1085, 5
        %v1088 = vsel %vm784, %v1083, %v1087
        %v1089 = vshrl.u32 %v780, 16
        %v1091 = vrot.slane %v1089, 4
        %v1092 = vor.u32 %v1091, %v1087
        %v1093 = vrot.slane %v1092, 4
        %v1095 = vshll.u32 %v781, 16
        %v1097 = vrot.slane %v1095, 5
        %v1098 = vsel %vm784, %v1093, %v1097
        %v1099 = vshrl.u32 %v781, 16
        %v1101 = vrot.slane %v1099, 4
        %v1102 = vor.u32 %v1101, %v1097
        %v1103 = vrot.slane %v1102, 4
        %vm1104 = vcmp.ne.s16.totalorder %v788, 0
        %vm1105 = vcmp.ne.s16.totalorder %v798, 0
        %vm1106 = vcmp.ne.s16.totalorder %v808, 0
        %vm1107 = vcmp.ne.s16.totalorder %v818, 0
        %vm1108 = vcmp.ne.s16.totalorder %v828, 0
        %vm1109 = vcmp.ne.s16.totalorder %v838, 0
        %vm1110 = vcmp.ne.s16.totalorder %v848, 0
        %vm1111 = vcmp.ne.s16.totalorder %v858, 0
        %vm1112 = vcmp.ne.s16.totalorder %v868, 0
        %vm1113 = vcmp.ne.s16.totalorder %v878, 0
        %vm1114 = vcmp.ne.s16.totalorder %v888, 0
        %vm1115 = vcmp.ne.s16.totalorder %v898, 0
        %vm1116 = vcmp.ne.s16.totalorder %v908, 0
        %vm1117 = vcmp.ne.s16.totalorder %v918, 0
        %vm1118 = vcmp.ne.s16.totalorder %v928, 0
        %vm1119 = vcmp.ne.s16.totalorder %v938, 0
        %vm1120 = vcmp.ne.s16.totalorder %v948, 0
        %vm1121 = vcmp.ne.s16.totalorder %v958, 0
        %vm1122 = vcmp.ne.s16.totalorder %v968, 0
        %vm1123 = vcmp.ne.s16.totalorder %v978, 0
        %vm1124 = vcmp.ne.s16.totalorder %v988, 0
        %vm1125 = vcmp.ne.s16.totalorder %v998, 0
        %vm1126 = vcmp.ne.s16.totalorder %v1008, 0
        %vm1127 = vcmp.ne.s16.totalorder %v1018, 0
        %vm1128 = vcmp.ne.s16.totalorder %v1028, 0
        %vm1129 = vcmp.ne.s16.totalorder %v1038, 0
        %vm1130 = vcmp.ne.s16.totalorder %v1048, 0
        %vm1131 = vcmp.ne.s16.totalorder %v1058, 0
        %vm1132 = vcmp.ne.s16.totalorder %v1068, 0
        %vm1133 = vcmp.ne.s16.totalorder %v1078, 0
        %vm1134 = vcmp.ne.s16.totalorder %v1088, 0
        %vm1135 = vcmp.ne.s16.totalorder %v1098, 0
        %vm1136 = vcmp.ne.s16.totalorder %v1103, 0
        %v1137 = vsel %vm1104, %v589, 0
        %v1138 = vsel %vm1105, %v590, 0
        %v1139 = vsel %vm1106, %v591, 0
        %v1140 = vsel %vm1107, %v592, 0
        %v1141 = vsel %vm1108, %v593, 0
        %v1142 = vsel %vm1109, %v594, 0
        %v1143 = vsel %vm1110, %v595, 0
        %v1144 = vsel %vm1111, %v596, 0
        %v1145 = vsel %vm1112, %v597, 0
        %v1146 = vsel %vm1113, %v598, 0
        %v1147 = vsel %vm1114, %v599, 0
        %v1148 = vsel %vm1115, %v600, 0
        %v1149 = vsel %vm1116, %v601, 0
        %v1150 = vsel %vm1117, %v602, 0
        %v1151 = vsel %vm1118, %v603, 0
        %v1152 = vsel %vm1119, %v604, 0
        %v1153 = vsel %vm1120, %v605, 0
        %v1154 = vsel %vm1121, %v606, 0
        %v1155 = vsel %vm1122, %v607, 0
        %v1156 = vsel %vm1123, %v608, 0
        %v1157 = vsel %vm1124, %v609, 0
        %v1158 = vsel %vm1125, %v610, 0
        %v1159 = vsel %vm1126, %v611, 0
        %v1160 = vsel %vm1127, %v612, 0
        %v1161 = vsel %vm1128, %v613, 0
        %v1162 = vsel %vm1129, %v614, 0
        %v1163 = vsel %vm1130, %v615, 0
        %v1164 = vsel %vm1131, %v616, 0
        %v1165 = vsel %vm1132, %v617, 0
        %v1166 = vsel %vm1133, %v618, 0
        %v1167 = vsel %vm1134, %v619, 0
        %v1168 = vsel %vm1135, %v620, 0
        %v1169 = vsel %vm1136, %v621, 0
        %v1203 = vunpack.c.l.b16 %v1137
        %v1204 = vunpack.c.l.b16 %v1138
        %v1205 = vunpack.c.l.b16 %v1139
        %v1206 = vunpack.c.l.b16 %v1140
        %v1207 = vunpack.c.l.b16 %v1141
        %v1208 = vunpack.c.l.b16 %v1142
        %v1209 = vunpack.c.l.b16 %v1143
        %v1210 = vunpack.c.l.b16 %v1144
        %v1211 = vunpack.c.l.b16 %v1145
        %v1212 = vunpack.c.l.b16 %v1146
        %v1213 = vunpack.c.l.b16 %v1147
        %v1214 = vunpack.c.l.b16 %v1148
        %v1215 = vunpack.c.l.b16 %v1149
        %v1216 = vunpack.c.l.b16 %v1150
        %v1217 = vunpack.c.l.b16 %v1151
        %v1218 = vunpack.c.l.b16 %v1152
        %v1219 = vunpack.c.l.b16 %v1153
        %v1220 = vunpack.c.l.b16 %v1154
        %v1221 = vunpack.c.l.b16 %v1155
        %v1222 = vunpack.c.l.b16 %v1156
        %v1223 = vunpack.c.l.b16 %v1157
        %v1224 = vunpack.c.l.b16 %v1158
        %v1225 = vunpack.c.l.b16 %v1159
        %v1226 = vunpack.c.l.b16 %v1160
        %v1227 = vunpack.c.l.b16 %v1161
        %v1228 = vunpack.c.l.b16 %v1162
        %v1229 = vunpack.c.l.b16 %v1163
        %v1230 = vunpack.c.l.b16 %v1164
        %v1231 = vunpack.c.l.b16 %v1165
        %v1232 = vunpack.c.l.b16 %v1166
        %v1233 = vunpack.c.l.b16 %v1167
        %v1234 = vunpack.c.l.b16 %v1168
        %v1235 = vunpack.c.l.b16 %v1169
        %v1236 = vpack.c.b16 %v1204, %v1203
        %v1237 = vpack.c.b16 %v1206, %v1205
        %v1238 = vpack.c.b16 %v1208, %v1207
        %v1239 = vpack.c.b16 %v1210, %v1209
        %v1240 = vpack.c.b16 %v1212, %v1211
        %v1241 = vpack.c.b16 %v1214, %v1213
        %v1242 = vpack.c.b16 %v1216, %v1215
        %v1243 = vpack.c.b16 %v1218, %v1217
        %v1244 = vpack.c.b16 %v1220, %v1219
        %v1245 = vpack.c.b16 %v1222, %v1221
        %v1246 = vpack.c.b16 %v1224, %v1223
        %v1247 = vpack.c.b16 %v1226, %v1225
        %v1248 = vpack.c.b16 %v1228, %v1227
        %v1249 = vpack.c.b16 %v1230, %v1229
        %v1250 = vpack.c.b16 %v1232, %v1231
        %v1251 = vpack.c.b16 %v1234, %v1233
        %v1252 = vpack.c.b16 %v1235, %v1235
        %vm1253 = vsmask.f32 4352
        %v1255 = vshrl.u32 %v1236, 16
        %v1257 = vrot.slane %v1255, 3
        %v1258 = vshll.u32 %v1236, 16
        %v1260 = vrot.slane %v1258, 4
        %v1261 = vor.u32 %v1257, %v1260
        %v1263 = vshrl.u32 %v1237, 16
        %v1265 = vrot.slane %v1263, 3
        %v1266 = vshll.u32 %v1237, 16
        %v1268 = vrot.slane %v1266, 4
        %v1269 = vor.u32 %v1265, %v1268
        %v1270 = vsel %vm1253, %v1261, %v1269
        %v1272 = vshrl.u32 %v1238, 16
        %v1274 = vrot.slane %v1272, 3
        %v1275 = vshll.u32 %v1238, 16
        %v1277 = vrot.slane %v1275, 4
        %v1278 = vor.u32 %v1274, %v1277
        %v1279 = vsel %vm1253, %v1269, %v1278
        %v1281 = vshrl.u32 %v1239, 16
        %v1283 = vrot.slane %v1281, 3
        %v1284 = vshll.u32 %v1239, 16
        %v1286 = vrot.slane %v1284, 4
        %v1287 = vor.u32 %v1283, %v1286
        %v1288 = vsel %vm1253, %v1278, %v1287
        %v1290 = vshrl.u32 %v1240, 16
        %v1292 = vrot.slane %v1290, 3
        %v1293 = vshll.u32 %v1240, 16
        %v1295 = vrot.slane %v1293, 4
        %v1296 = vor.u32 %v1292, %v1295
        %v1297 = vsel %vm1253, %v1287, %v1296
        %v1299 = vshrl.u32 %v1241, 16
        %v1301 = vrot.slane %v1299, 3
        %v1302 = vshll.u32 %v1241, 16
        %v1304 = vrot.slane %v1302, 4
        %v1305 = vor.u32 %v1301, %v1304
        %v1306 = vsel %vm1253, %v1296, %v1305
        %v1308 = vshrl.u32 %v1242, 16
        %v1310 = vrot.slane %v1308, 3
        %v1311 = vshll.u32 %v1242, 16
        %v1313 = vrot.slane %v1311, 4
        %v1314 = vor.u32 %v1310, %v1313
        %v1315 = vsel %vm1253, %v1305, %v1314
        %v1317 = vshrl.u32 %v1243, 16
        %v1319 = vrot.slane %v1317, 3
        %v1320 = vshll.u32 %v1243, 16
        %v1322 = vrot.slane %v1320, 4
        %v1323 = vor.u32 %v1319, %v1322
        %v1324 = vsel %vm1253, %v1314, %v1323
        %v1326 = vshrl.u32 %v1244, 16
        %v1328 = vrot.slane %v1326, 3
        %v1329 = vshll.u32 %v1244, 16
        %v1331 = vrot.slane %v1329, 4
        %v1332 = vor.u32 %v1328, %v1331
        %v1333 = vsel %vm1253, %v1323, %v1332
        %v1335 = vshrl.u32 %v1245, 16
        %v1337 = vrot.slane %v1335, 3
        %v1338 = vshll.u32 %v1245, 16
        %v1340 = vrot.slane %v1338, 4
        %v1341 = vor.u32 %v1337, %v1340
        %v1342 = vsel %vm1253, %v1332, %v1341
        %v1344 = vshrl.u32 %v1246, 16
        %v1346 = vrot.slane %v1344, 3
        %v1347 = vshll.u32 %v1246, 16
        %v1349 = vrot.slane %v1347, 4
        %v1350 = vor.u32 %v1346, %v1349
        %v1351 = vsel %vm1253, %v1341, %v1350
        %v1353 = vshrl.u32 %v1247, 16
        %v1355 = vrot.slane %v1353, 3
        %v1356 = vshll.u32 %v1247, 16
        %v1358 = vrot.slane %v1356, 4
        %v1359 = vor.u32 %v1355, %v1358
        %v1360 = vsel %vm1253, %v1350, %v1359
        %v1362 = vshrl.u32 %v1248, 16
        %v1364 = vrot.slane %v1362, 3
        %v1365 = vshll.u32 %v1248, 16
        %v1367 = vrot.slane %v1365, 4
        %v1368 = vor.u32 %v1364, %v1367
        %v1369 = vsel %vm1253, %v1359, %v1368
        %v1371 = vshrl.u32 %v1249, 16
        %v1373 = vrot.slane %v1371, 3
        %v1374 = vshll.u32 %v1249, 16
        %v1376 = vrot.slane %v1374, 4
        %v1377 = vor.u32 %v1373, %v1376
        %v1378 = vsel %vm1253, %v1368, %v1377
        %v1380 = vshrl.u32 %v1250, 16
        %v1382 = vrot.slane %v1380, 3
        %v1383 = vshll.u32 %v1250, 16
        %v1385 = vrot.slane %v1383, 4
        %v1386 = vor.u32 %v1382, %v1385
        %v1387 = vsel %vm1253, %v1377, %v1386
        %v1389 = vshrl.u32 %v1251, 16
        %v1391 = vrot.slane %v1389, 3
        %v1392 = vshll.u32 %v1251, 16
        %v1394 = vrot.slane %v1392, 4
        %v1395 = vor.u32 %v1391, %v1394
        %v1396 = vsel %vm1253, %v1386, %v1395
        %v1398 = vshrl.u32 %v1252, 16
        %v1400 = vrot.slane %v1398, 3
        %v1401 = vshll.u32 %v1252, 16
        %v1403 = vrot.slane %v1401, 4
        %v1404 = vor.u32 %v1400, %v1403
        %v1405 = vsel %vm1253, %v1395, %v1404
        %vm1422 = vcmask 31744
        %1423 = vst.msk [vmem:[#allocation2] sm:$0xff] %vm1422, %v1270
        %1424 = vst.msk [vmem:[#allocation2 + $0x8] sm:$0xff] %vm1422, %v1279
        %1425 = vst.msk [vmem:[#allocation2 + $0x10] sm:$0xff] %vm1422, %v1288
        %1426 = vst.msk [vmem:[#allocation2 + $0x18] sm:$0xff] %vm1422, %v1297
        %1427 = vst.msk [vmem:[#allocation2 + $0x20] sm:$0xff] %vm1422, %v1306
        %1428 = vst.msk [vmem:[#allocation2 + $0x28] sm:$0xff] %vm1422, %v1315
        %1429 = vst.msk [vmem:[#allocation2 + $0x30] sm:$0xff] %vm1422, %v1324
        %1430 = vst.msk [vmem:[#allocation2 + $0x38] sm:$0xff] %vm1422, %v1333
        %1431 = vst.msk [vmem:[#allocation2 + $0x40] sm:$0xff] %vm1422, %v1342
        %1432 = vst.msk [vmem:[#allocation2 + $0x48] sm:$0xff] %vm1422, %v1351
        %1433 = vst.msk [vmem:[#allocation2 + $0x50] sm:$0xff] %vm1422, %v1360
        %1434 = vst.msk [vmem:[#allocation2 + $0x58] sm:$0xff] %vm1422, %v1369
        %1435 = vst.msk [vmem:[#allocation2 + $0x60] sm:$0xff] %vm1422, %v1378
        %1436 = vst.msk [vmem:[#allocation2 + $0x68] sm:$0xff] %vm1422, %v1387
        %1437 = vst.msk [vmem:[#allocation2 + $0x70] sm:$0xff] %vm1422, %v1396
        %1438 = vst.msk [vmem:[#allocation2 + $0x78] sm:$0xff] %vm1422, %v1405
        %v1439 = vld [vmem:[%s168 + $0x8] sm:$0xf]
        %v1440 = vld [vmem:[%s168 + $0xc] sm:$0xf]
        %v1441 = vld [vmem:[%s168 + $0x10] sm:$0xf]
        %v1442 = vld [vmem:[%s168 + $0x14] sm:$0xf]
        %v1443 = vld [vmem:[%s168 + $0x18] sm:$0xf]
        %v1444 = vld [vmem:[%s168 + $0x1c] sm:$0xf]
        %v1445 = vld [vmem:[%s168 + $0x20] sm:$0xf]
        %v1446 = vld [vmem:[%s168 + $0x24] sm:$0xf]
        %v1447 = vld [vmem:[%s168 + $0x28] sm:$0xf]
        %v1448 = vld [vmem:[%s168 + $0x2c] sm:$0xf]
        %v1449 = vld [vmem:[%s168 + $0x30] sm:$0xf]
        %v1450 = vld [vmem:[%s168 + $0x34] sm:$0xf]
        %v1451 = vld [vmem:[%s168 + $0x38] sm:$0xf]
        %v1452 = vld [vmem:[%s168 + $0x3c] sm:$0xf]
        %v1453 = vld [vmem:[%s168 + $0x40] sm:$0xf]
        %v1454 = vld [vmem:[%s168 + $0x44] sm:$0xf]
        %v1455 = vld [vmem:[%s168 + $0x48] sm:$0xf]
        %v1456 = vld [vmem:[%s168 + $0x4c] sm:$0xf]
        %v1457 = vld [vmem:[%s168 + $0x50] sm:$0xf]
        %v1458 = vld [vmem:[%s168 + $0x54] sm:$0xf]
        %v1459 = vld [vmem:[%s168 + $0x58] sm:$0xf]
        %v1460 = vld [vmem:[%s168 + $0x5c] sm:$0xf]
        %v1461 = vld [vmem:[%s168 + $0x60] sm:$0xf]
        %v1462 = vld [vmem:[%s168 + $0x64] sm:$0xf]
        %v1463 = vld [vmem:[%s168 + $0x68] sm:$0xf]
        %v1464 = vld [vmem:[%s168 + $0x6c] sm:$0xf]
        %v1465 = vld [vmem:[%s168 + $0x70] sm:$0xf]
        %v1466 = vld [vmem:[%s168 + $0x74] sm:$0xf]
        %v1467 = vld [vmem:[%s168 + $0x78] sm:$0xf]
        %v1468 = vld [vmem:[%s168 + $0x7c] sm:$0xf]
        %v1469 = vld [vmem:[%s168 + $0x80] sm:$0xf]
        %v1470 = vld [vmem:[%s168 + $0x84] sm:$0xf]
        %v1503 = vunpack.c.l.b16 %v1439
        %v1504 = vunpack.c.l.b16 %v1440
        %v1505 = vunpack.c.l.b16 %v1441
        %v1506 = vunpack.c.l.b16 %v1442
        %v1507 = vunpack.c.l.b16 %v1443
        %v1508 = vunpack.c.l.b16 %v1444
        %v1509 = vunpack.c.l.b16 %v1445
        %v1510 = vunpack.c.l.b16 %v1446
        %v1511 = vunpack.c.l.b16 %v1447
        %v1512 = vunpack.c.l.b16 %v1448
        %v1513 = vunpack.c.l.b16 %v1449
        %v1514 = vunpack.c.l.b16 %v1450
        %v1515 = vunpack.c.l.b16 %v1451
        %v1516 = vunpack.c.l.b16 %v1452
        %v1517 = vunpack.c.l.b16 %v1453
        %v1518 = vunpack.c.l.b16 %v1454
        %v1519 = vunpack.c.l.b16 %v1455
        %v1520 = vunpack.c.l.b16 %v1456
        %v1521 = vunpack.c.l.b16 %v1457
        %v1522 = vunpack.c.l.b16 %v1458
        %v1523 = vunpack.c.l.b16 %v1459
        %v1524 = vunpack.c.l.b16 %v1460
        %v1525 = vunpack.c.l.b16 %v1461
        %v1526 = vunpack.c.l.b16 %v1462
        %v1527 = vunpack.c.l.b16 %v1463
        %v1528 = vunpack.c.l.b16 %v1464
        %v1529 = vunpack.c.l.b16 %v1465
        %v1530 = vunpack.c.l.b16 %v1466
        %v1531 = vunpack.c.l.b16 %v1467
        %v1532 = vunpack.c.l.b16 %v1468
        %v1533 = vunpack.c.l.b16 %v1469
        %v1534 = vunpack.c.l.b16 %v1470
        %v1535 = vpack.c.b16 %v1504, %v1503
        %v1536 = vpack.c.b16 %v1506, %v1505
        %v1537 = vpack.c.b16 %v1508, %v1507
        %v1538 = vpack.c.b16 %v1510, %v1509
        %v1539 = vpack.c.b16 %v1512, %v1511
        %v1540 = vpack.c.b16 %v1514, %v1513
        %v1541 = vpack.c.b16 %v1516, %v1515
        %v1542 = vpack.c.b16 %v1518, %v1517
        %v1543 = vpack.c.b16 %v1520, %v1519
        %v1544 = vpack.c.b16 %v1522, %v1521
        %v1545 = vpack.c.b16 %v1524, %v1523
        %v1546 = vpack.c.b16 %v1526, %v1525
        %v1547 = vpack.c.b16 %v1528, %v1527
        %v1548 = vpack.c.b16 %v1530, %v1529
        %v1549 = vpack.c.b16 %v1532, %v1531
        %v1550 = vpack.c.b16 %v1534, %v1533
        %1551 = vrot.lane.b32.xlu0 %v1535, 4
        %v1552 = vpop.permute.xlu0 %1551
        %1553 = vrot.lane.b32.xlu0 %v1536, 4
        %v1554 = vpop.permute.xlu0 %1553
        %1555 = vrot.lane.b32.xlu0 %v1537, 4
        %v1556 = vpop.permute.xlu0 %1555
        %1557 = vrot.lane.b32.xlu0 %v1538, 4
        %v1558 = vpop.permute.xlu0 %1557
        %1559 = vrot.lane.b32.xlu0 %v1539, 4
        %v1560 = vpop.permute.xlu0 %1559
        %1561 = vrot.lane.b32.xlu0 %v1540, 4
        %v1562 = vpop.permute.xlu0 %1561
        %1563 = vrot.lane.b32.xlu0 %v1541, 4
        %v1564 = vpop.permute.xlu0 %1563
        %1565 = vrot.lane.b32.xlu0 %v1542, 4
        %v1566 = vpop.permute.xlu0 %1565
        %1567 = vrot.lane.b32.xlu0 %v1543, 4
        %v1568 = vpop.permute.xlu0 %1567
        %1569 = vrot.lane.b32.xlu0 %v1544, 4
        %v1570 = vpop.permute.xlu0 %1569
        %1571 = vrot.lane.b32.xlu0 %v1545, 4
        %v1572 = vpop.permute.xlu0 %1571
        %1573 = vrot.lane.b32.xlu0 %v1546, 4
        %v1574 = vpop.permute.xlu0 %1573
        %1575 = vrot.lane.b32.xlu0 %v1547, 4
        %v1576 = vpop.permute.xlu0 %1575
        %1577 = vrot.lane.b32.xlu0 %v1548, 4
        %v1578 = vpop.permute.xlu0 %1577
        %1579 = vrot.lane.b32.xlu0 %v1549, 4
        %v1580 = vpop.permute.xlu0 %1579
        %1581 = vrot.lane.b32.xlu0 %v1550, 4
        %v1582 = vpop.permute.xlu0 %1581
        %vm1599 = vcmask 64544
        %1600 = vst.msk [vmem:[#allocation2] sm:$0xff] %vm1599, %v1552
        %1601 = vst.msk [vmem:[#allocation2 + $0x8] sm:$0xff] %vm1599, %v1554
        %1602 = vst.msk [vmem:[#allocation2 + $0x10] sm:$0xff] %vm1599, %v1556
        %1603 = vst.msk [vmem:[#allocation2 + $0x18] sm:$0xff] %vm1599, %v1558
        %1604 = vst.msk [vmem:[#allocation2 + $0x20] sm:$0xff] %vm1599, %v1560
        %1605 = vst.msk [vmem:[#allocation2 + $0x28] sm:$0xff] %vm1599, %v1562
        %1606 = vst.msk [vmem:[#allocation2 + $0x30] sm:$0xff] %vm1599, %v1564
        %1607 = vst.msk [vmem:[#allocation2 + $0x38] sm:$0xff] %vm1599, %v1566
        %1608 = vst.msk [vmem:[#allocation2 + $0x40] sm:$0xff] %vm1599, %v1568
        %1609 = vst.msk [vmem:[#allocation2 + $0x48] sm:$0xff] %vm1599, %v1570
        %1610 = vst.msk [vmem:[#allocation2 + $0x50] sm:$0xff] %vm1599, %v1572
        %1611 = vst.msk [vmem:[#allocation2 + $0x58] sm:$0xff] %vm1599, %v1574
        %1612 = vst.msk [vmem:[#allocation2 + $0x60] sm:$0xff] %vm1599, %v1576
        %1613 = vst.msk [vmem:[#allocation2 + $0x68] sm:$0xff] %vm1599, %v1578
        %1614 = vst.msk [vmem:[#allocation2 + $0x70] sm:$0xff] %vm1599, %v1580
        %1615 = vst.msk [vmem:[#allocation2 + $0x78] sm:$0xff] %vm1599, %v1582
        %v1616 = vld [vmem:[%s168 + $0x8] sm:$0xf]
        %v1617 = vld [vmem:[%s168 + $0xc] sm:$0xf]
        %v1618 = vld [vmem:[%s168 + $0x10] sm:$0xf]
        %v1619 = vld [vmem:[%s168 + $0x14] sm:$0xf]
        %v1620 = vld [vmem:[%s168 + $0x18] sm:$0xf]
        %v1621 = vld [vmem:[%s168 + $0x1c] sm:$0xf]
        %v1622 = vld [vmem:[%s168 + $0x20] sm:$0xf]
        %v1623 = vld [vmem:[%s168 + $0x24] sm:$0xf]
        %v1624 = vld [vmem:[%s168 + $0x28] sm:$0xf]
        %v1625 = vld [vmem:[%s168 + $0x2c] sm:$0xf]
        %v1626 = vld [vmem:[%s168 + $0x30] sm:$0xf]
        %v1627 = vld [vmem:[%s168 + $0x34] sm:$0xf]
        %v1628 = vld [vmem:[%s168 + $0x38] sm:$0xf]
        %v1629 = vld [vmem:[%s168 + $0x3c] sm:$0xf]
        %v1630 = vld [vmem:[%s168 + $0x40] sm:$0xf]
        %v1631 = vld [vmem:[%s168 + $0x44] sm:$0xf]
        %v1632 = vld [vmem:[%s168 + $0x48] sm:$0xf]
        %v1633 = vld [vmem:[%s168 + $0x4c] sm:$0xf]
        %v1634 = vld [vmem:[%s168 + $0x50] sm:$0xf]
        %v1635 = vld [vmem:[%s168 + $0x54] sm:$0xf]
        %v1636 = vld [vmem:[%s168 + $0x58] sm:$0xf]
        %v1637 = vld [vmem:[%s168 + $0x5c] sm:$0xf]
        %v1638 = vld [vmem:[%s168 + $0x60] sm:$0xf]
        %v1639 = vld [vmem:[%s168 + $0x64] sm:$0xf]
        %v1640 = vld [vmem:[%s168 + $0x68] sm:$0xf]
        %v1641 = vld [vmem:[%s168 + $0x6c] sm:$0xf]
        %v1642 = vld [vmem:[%s168 + $0x70] sm:$0xf]
        %v1643 = vld [vmem:[%s168 + $0x74] sm:$0xf]
        %v1644 = vld [vmem:[%s168 + $0x78] sm:$0xf]
        %v1645 = vld [vmem:[%s168 + $0x7c] sm:$0xf]
        %v1646 = vld [vmem:[%s168 + $0x80] sm:$0xf]
        %v1647 = vld [vmem:[%s168 + $0x84] sm:$0xf]
        %v1648 = vld [vmem:[%s168 + $0x88] sm:$0x1]
        %vm1649 = vcmp.ne.s32.totalorder %v557, 15
        %vm1650 = vcmp.ne.s32.totalorder %v558, 15
        %vm1651 = vcmp.ne.s32.totalorder %v559, 15
        %vm1652 = vcmp.ne.s32.totalorder %v560, 15
        %vm1653 = vcmp.ne.s32.totalorder %v561, 15
        %vm1654 = vcmp.ne.s32.totalorder %v562, 15
        %vm1655 = vcmp.ne.s32.totalorder %v563, 15
        %vm1656 = vcmp.ne.s32.totalorder %v564, 15
        %vm1657 = vcmp.ne.s32.totalorder %v565, 15
        %vm1658 = vcmp.ne.s32.totalorder %v566, 15
        %vm1659 = vcmp.ne.s32.totalorder %v567, 15
        %vm1660 = vcmp.ne.s32.totalorder %v568, 15
        %vm1661 = vcmp.ne.s32.totalorder %v569, 15
        %vm1662 = vcmp.ne.s32.totalorder %v570, 15
        %vm1663 = vcmp.ne.s32.totalorder %v571, 15
        %vm1664 = vcmp.ne.s32.totalorder %v572, 15
        %vm1665 = vcmp.ne.s32.totalorder %v573, 15
        %vm1666 = vcmp.ne.s32.totalorder %v574, 15
        %vm1667 = vcmp.ne.s32.totalorder %v575, 15
        %vm1668 = vcmp.ne.s32.totalorder %v576, 15
        %vm1669 = vcmp.ne.s32.totalorder %v577, 15
        %vm1670 = vcmp.ne.s32.totalorder %v578, 15
        %vm1671 = vcmp.ne.s32.totalorder %v579, 15
        %vm1672 = vcmp.ne.s32.totalorder %v580, 15
        %vm1673 = vcmp.ne.s32.totalorder %v581, 15
        %vm1674 = vcmp.ne.s32.totalorder %v582, 15
        %vm1675 = vcmp.ne.s32.totalorder %v583, 15
        %vm1676 = vcmp.ne.s32.totalorder %v584, 15
        %vm1677 = vcmp.ne.s32.totalorder %v585, 15
        %vm1678 = vcmp.ne.s32.totalorder %v586, 15
        %vm1679 = vcmp.ne.s32.totalorder %v587, 15
        %vm1680 = vcmp.ne.s32.totalorder %v588, 15
        %v1681 = vsel %vm1649, 1, 0
        %v1682 = vsel %vm1650, 1, 0
        %v1683 = vsel %vm1651, 1, 0
        %v1684 = vsel %vm1652, 1, 0
        %v1685 = vsel %vm1653, 1, 0
        %v1686 = vsel %vm1654, 1, 0
        %v1687 = vsel %vm1655, 1, 0
        %v1688 = vsel %vm1656, 1, 0
        %v1689 = vsel %vm1657, 1, 0
        %v1690 = vsel %vm1658, 1, 0
        %v1691 = vsel %vm1659, 1, 0
        %v1692 = vsel %vm1660, 1, 0
        %v1693 = vsel %vm1661, 1, 0
        %v1694 = vsel %vm1662, 1, 0
        %v1695 = vsel %vm1663, 1, 0
        %v1696 = vsel %vm1664, 1, 0
        %v1697 = vsel %vm1665, 1, 0
        %v1698 = vsel %vm1666, 1, 0
        %v1699 = vsel %vm1667, 1, 0
        %v1700 = vsel %vm1668, 1, 0
        %v1701 = vsel %vm1669, 1, 0
        %v1702 = vsel %vm1670, 1, 0
        %v1703 = vsel %vm1671, 1, 0
        %v1704 = vsel %vm1672, 1, 0
        %v1705 = vsel %vm1673, 1, 0
        %v1706 = vsel %vm1674, 1, 0
        %v1707 = vsel %vm1675, 1, 0
        %v1708 = vsel %vm1676, 1, 0
        %v1709 = vsel %vm1677, 1, 0
        %v1710 = vsel %vm1678, 1, 0
        %v1711 = vsel %vm1679, 1, 0
        %v1712 = vsel %vm1680, 1, 0
        %vm1713 = vcmp.eq.s32.totalorder %v1681, 1
        %vm1714 = vcmp.eq.s32.totalorder %v1682, 1
        %vm1715 = vcmp.eq.s32.totalorder %v1683, 1
        %vm1716 = vcmp.eq.s32.totalorder %v1684, 1
        %vm1717 = vcmp.eq.s32.totalorder %v1685, 1
        %vm1718 = vcmp.eq.s32.totalorder %v1686, 1
        %vm1719 = vcmp.eq.s32.totalorder %v1687, 1
        %vm1720 = vcmp.eq.s32.totalorder %v1688, 1
        %vm1721 = vcmp.eq.s32.totalorder %v1689, 1
        %vm1722 = vcmp.eq.s32.totalorder %v1690, 1
        %vm1723 = vcmp.eq.s32.totalorder %v1691, 1
        %vm1724 = vcmp.eq.s32.totalorder %v1692, 1
        %vm1725 = vcmp.eq.s32.totalorder %v1693, 1
        %vm1726 = vcmp.eq.s32.totalorder %v1694, 1
        %vm1727 = vcmp.eq.s32.totalorder %v1695, 1
        %vm1728 = vcmp.eq.s32.totalorder %v1696, 1
        %vm1729 = vcmp.eq.s32.totalorder %v1697, 1
        %vm1730 = vcmp.eq.s32.totalorder %v1698, 1
        %vm1731 = vcmp.eq.s32.totalorder %v1699, 1
        %vm1732 = vcmp.eq.s32.totalorder %v1700, 1
        %vm1733 = vcmp.eq.s32.totalorder %v1701, 1
        %vm1734 = vcmp.eq.s32.totalorder %v1702, 1
        %vm1735 = vcmp.eq.s32.totalorder %v1703, 1
        %vm1736 = vcmp.eq.s32.totalorder %v1704, 1
        %vm1737 = vcmp.eq.s32.totalorder %v1705, 1
        %vm1738 = vcmp.eq.s32.totalorder %v1706, 1
        %vm1739 = vcmp.eq.s32.totalorder %v1707, 1
        %vm1740 = vcmp.eq.s32.totalorder %v1708, 1
        %vm1741 = vcmp.eq.s32.totalorder %v1709, 1
        %vm1742 = vcmp.eq.s32.totalorder %v1710, 1
        %vm1743 = vcmp.eq.s32.totalorder %v1711, 1
        %vm1744 = vcmp.eq.s32.totalorder %v1712, 1
        %vm1745 = vmpackc.low %vm1713, %vm1713
        %vm1746 = vmpackc.low %vm1714, %vm1714
        %vm1747 = vmpackc.low %vm1715, %vm1715
        %vm1748 = vmpackc.low %vm1716, %vm1716
        %vm1749 = vmpackc.low %vm1717, %vm1717
        %vm1750 = vmpackc.low %vm1718, %vm1718
        %vm1751 = vmpackc.low %vm1719, %vm1719
        %vm1752 = vmpackc.low %vm1720, %vm1720
        %vm1753 = vmpackc.low %vm1721, %vm1721
        %vm1754 = vmpackc.low %vm1722, %vm1722
        %vm1755 = vmpackc.low %vm1723, %vm1723
        %vm1756 = vmpackc.low %vm1724, %vm1724
        %vm1757 = vmpackc.low %vm1725, %vm1725
        %vm1758 = vmpackc.low %vm1726, %vm1726
        %vm1759 = vmpackc.low %vm1727, %vm1727
        %vm1760 = vmpackc.low %vm1728, %vm1728
        %vm1761 = vmpackc.low %vm1729, %vm1729
        %vm1762 = vmpackc.low %vm1730, %vm1730
        %vm1763 = vmpackc.low %vm1731, %vm1731
        %vm1764 = vmpackc.low %vm1732, %vm1732
        %vm1765 = vmpackc.low %vm1733, %vm1733
        %vm1766 = vmpackc.low %vm1734, %vm1734
        %vm1767 = vmpackc.low %vm1735, %vm1735
        %vm1768 = vmpackc.low %vm1736, %vm1736
        %vm1769 = vmpackc.low %vm1737, %vm1737
        %vm1770 = vmpackc.low %vm1738, %vm1738
        %vm1771 = vmpackc.low %vm1739, %vm1739
        %vm1772 = vmpackc.low %vm1740, %vm1740
        %vm1773 = vmpackc.low %vm1741, %vm1741
        %vm1774 = vmpackc.low %vm1742, %vm1742
        %vm1775 = vmpackc.low %vm1743, %vm1743
        %vm1776 = vmpackc.low %vm1744, %vm1744
        %v1777 = vsel %vm1745, 65537, 0
        %v1778 = vsel %vm1746, 65537, 0
        %v1779 = vsel %vm1747, 65537, 0
        %v1780 = vsel %vm1748, 65537, 0
        %v1781 = vsel %vm1749, 65537, 0
        %v1782 = vsel %vm1750, 65537, 0
        %v1783 = vsel %vm1751, 65537, 0
        %v1784 = vsel %vm1752, 65537, 0
        %v1785 = vsel %vm1753, 65537, 0
        %v1786 = vsel %vm1754, 65537, 0
        %v1787 = vsel %vm1755, 65537, 0
        %v1788 = vsel %vm1756, 65537, 0
        %v1789 = vsel %vm1757, 65537, 0
        %v1790 = vsel %vm1758, 65537, 0
        %v1791 = vsel %vm1759, 65537, 0
        %v1792 = vsel %vm1760, 65537, 0
        %v1793 = vsel %vm1761, 65537, 0
        %v1794 = vsel %vm1762, 65537, 0
        %v1795 = vsel %vm1763, 65537, 0
        %v1796 = vsel %vm1764, 65537, 0
        %v1797 = vsel %vm1765, 65537, 0
        %v1798 = vsel %vm1766, 65537, 0
        %v1799 = vsel %vm1767, 65537, 0
        %v1800 = vsel %vm1768, 65537, 0
        %v1801 = vsel %vm1769, 65537, 0
        %v1802 = vsel %vm1770, 65537, 0
        %v1803 = vsel %vm1771, 65537, 0
        %v1804 = vsel %vm1772, 65537, 0
        %v1805 = vsel %vm1773, 65537, 0
        %v1806 = vsel %vm1774, 65537, 0
        %v1807 = vsel %vm1775, 65537, 0
        %v1808 = vsel %vm1776, 65537, 0
        %vm1809 = vsmask.f32 256
        %vm1810 = vsmask.f32 4368
        %vm1811 = vmor %vm1809, %vm1810
        %v1813 = vshrl.u32 %v1777, 16
        %v1815 = vrot.slane %v1813, 7
        %v1816 = vshll.u32 %v1777, 16
        %v1818 = vor.u32 %v1815, %v1816
        %v1819 = vrot.slane %v1815, 4
        %v1821 = vshrl.u32 %v1778, 16
        %v1823 = vrot.slane %v1821, 7
        %v1824 = vshll.u32 %v1778, 16
        %v1826 = vor.u32 %v1823, %v1824
        %v1827 = vsel %vm1811, %v1819, %v1826
        %v1828 = vrot.slane %v1823, 4
        %v1830 = vshrl.u32 %v1779, 16
        %v1832 = vrot.slane %v1830, 7
        %v1833 = vshll.u32 %v1779, 16
        %v1835 = vor.u32 %v1832, %v1833
        %v1836 = vsel %vm1811, %v1828, %v1835
        %v1837 = vrot.slane %v1832, 4
        %v1839 = vshrl.u32 %v1780, 16
        %v1841 = vrot.slane %v1839, 7
        %v1842 = vshll.u32 %v1780, 16
        %v1844 = vor.u32 %v1841, %v1842
        %v1845 = vsel %vm1811, %v1837, %v1844
        %v1846 = vrot.slane %v1841, 4
        %v1848 = vshrl.u32 %v1781, 16
        %v1850 = vrot.slane %v1848, 7
        %v1851 = vshll.u32 %v1781, 16
        %v1853 = vor.u32 %v1850, %v1851
        %v1854 = vsel %vm1811, %v1846, %v1853
        %v1855 = vrot.slane %v1850, 4
        %v1857 = vshrl.u32 %v1782, 16
        %v1859 = vrot.slane %v1857, 7
        %v1860 = vshll.u32 %v1782, 16
        %v1862 = vor.u32 %v1859, %v1860
        %v1863 = vsel %vm1811, %v1855, %v1862
        %v1864 = vrot.slane %v1859, 4
        %v1866 = vshrl.u32 %v1783, 16
        %v1868 = vrot.slane %v1866, 7
        %v1869 = vshll.u32 %v1783, 16
        %v1871 = vor.u32 %v1868, %v1869
        %v1872 = vsel %vm1811, %v1864, %v1871
        %v1873 = vrot.slane %v1868, 4
        %v1875 = vshrl.u32 %v1784, 16
        %v1877 = vrot.slane %v1875, 7
        %v1878 = vshll.u32 %v1784, 16
        %v1880 = vor.u32 %v1877, %v1878
        %v1881 = vsel %vm1811, %v1873, %v1880
        %v1882 = vrot.slane %v1877, 4
        %v1884 = vshrl.u32 %v1785, 16
        %v1886 = vrot.slane %v1884, 7
        %v1887 = vshll.u32 %v1785, 16
        %v1889 = vor.u32 %v1886, %v1887
        %v1890 = vsel %vm1811, %v1882, %v1889
        %v1891 = vrot.slane %v1886, 4
        %v1893 = vshrl.u32 %v1786, 16
        %v1895 = vrot.slane %v1893, 7
        %v1896 = vshll.u32 %v1786, 16
        %v1898 = vor.u32 %v1895, %v1896
        %v1899 = vsel %vm1811, %v1891, %v1898
        %v1900 = vrot.slane %v1895, 4
        %v1902 = vshrl.u32 %v1787, 16
        %v1904 = vrot.slane %v1902, 7
        %v1905 = vshll.u32 %v1787, 16
        %v1907 = vor.u32 %v1904, %v1905
        %v1908 = vsel %vm1811, %v1900, %v1907
        %v1909 = vrot.slane %v1904, 4
        %v1911 = vshrl.u32 %v1788, 16
        %v1913 = vrot.slane %v1911, 7
        %v1914 = vshll.u32 %v1788, 16
        %v1916 = vor.u32 %v1913, %v1914
        %v1917 = vsel %vm1811, %v1909, %v1916
        %v1918 = vrot.slane %v1913, 4
        %v1920 = vshrl.u32 %v1789, 16
        %v1922 = vrot.slane %v1920, 7
        %v1923 = vshll.u32 %v1789, 16
        %v1925 = vor.u32 %v1922, %v1923
        %v1926 = vsel %vm1811, %v1918, %v1925
        %v1927 = vrot.slane %v1922, 4
        %v1929 = vshrl.u32 %v1790, 16
        %v1931 = vrot.slane %v1929, 7
        %v1932 = vshll.u32 %v1790, 16
        %v1934 = vor.u32 %v1931, %v1932
        %v1935 = vsel %vm1811, %v1927, %v1934
        %v1936 = vrot.slane %v1931, 4
        %v1938 = vshrl.u32 %v1791, 16
        %v1940 = vrot.slane %v1938, 7
        %v1941 = vshll.u32 %v1791, 16
        %v1943 = vor.u32 %v1940, %v1941
        %v1944 = vsel %vm1811, %v1936, %v1943
        %v1945 = vrot.slane %v1940, 4
        %v1947 = vshrl.u32 %v1792, 16
        %v1949 = vrot.slane %v1947, 7
        %v1950 = vshll.u32 %v1792, 16
        %v1952 = vor.u32 %v1949, %v1950
        %v1953 = vsel %vm1811, %v1945, %v1952
        %v1954 = vrot.slane %v1949, 4
        %v1956 = vshrl.u32 %v1793, 16
        %v1958 = vrot.slane %v1956, 7
        %v1959 = vshll.u32 %v1793, 16
        %v1961 = vor.u32 %v1958, %v1959
        %v1962 = vsel %vm1811, %v1954, %v1961
        %v1963 = vrot.slane %v1958, 4
        %v1965 = vshrl.u32 %v1794, 16
        %v1967 = vrot.slane %v1965, 7
        %v1968 = vshll.u32 %v1794, 16
        %v1970 = vor.u32 %v1967, %v1968
        %v1971 = vsel %vm1811, %v1963, %v1970
        %v1972 = vrot.slane %v1967, 4
        %v1974 = vshrl.u32 %v1795, 16
        %v1976 = vrot.slane %v1974, 7
        %v1977 = vshll.u32 %v1795, 16
        %v1979 = vor.u32 %v1976, %v1977
        %v1980 = vsel %vm1811, %v1972, %v1979
        %v1981 = vrot.slane %v1976, 4
        %v1983 = vshrl.u32 %v1796, 16
        %v1985 = vrot.slane %v1983, 7
        %v1986 = vshll.u32 %v1796, 16
        %v1988 = vor.u32 %v1985, %v1986
        %v1989 = vsel %vm1811, %v1981, %v1988
        %v1990 = vrot.slane %v1985, 4
        %v1992 = vshrl.u32 %v1797, 16
        %v1994 = vrot.slane %v1992, 7
        %v1995 = vshll.u32 %v1797, 16
        %v1997 = vor.u32 %v1994, %v1995
        %v1998 = vsel %vm1811, %v1990, %v1997
        %v1999 = vrot.slane %v1994, 4
        %v2001 = vshrl.u32 %v1798, 16
        %v2003 = vrot.slane %v2001, 7
        %v2004 = vshll.u32 %v1798, 16
        %v2006 = vor.u32 %v2003, %v2004
        %v2007 = vsel %vm1811, %v1999, %v2006
        %v2008 = vrot.slane %v2003, 4
        %v2010 = vshrl.u32 %v1799, 16
        %v2012 = vrot.slane %v2010, 7
        %v2013 = vshll.u32 %v1799, 16
        %v2015 = vor.u32 %v2012, %v2013
        %v2016 = vsel %vm1811, %v2008, %v2015
        %v2017 = vrot.slane %v2012, 4
        %v2019 = vshrl.u32 %v1800, 16
        %v2021 = vrot.slane %v2019, 7
        %v2022 = vshll.u32 %v1800, 16
        %v2024 = vor.u32 %v2021, %v2022
        %v2025 = vsel %vm1811, %v2017, %v2024
        %v2026 = vrot.slane %v2021, 4
        %v2028 = vshrl.u32 %v1801, 16
        %v2030 = vrot.slane %v2028, 7
        %v2031 = vshll.u32 %v1801, 16
        %v2033 = vor.u32 %v2030, %v2031
        %v2034 = vsel %vm1811, %v2026, %v2033
        %v2035 = vrot.slane %v2030, 4
        %v2037 = vshrl.u32 %v1802, 16
        %v2039 = vrot.slane %v2037, 7
        %v2040 = vshll.u32 %v1802, 16
        %v2042 = vor.u32 %v2039, %v2040
        %v2043 = vsel %vm1811, %v2035, %v2042
        %v2044 = vrot.slane %v2039, 4
        %v2046 = vshrl.u32 %v1803, 16
        %v2048 = vrot.slane %v2046, 7
        %v2049 = vshll.u32 %v1803, 16
        %v2051 = vor.u32 %v2048, %v2049
        %v2052 = vsel %vm1811, %v2044, %v2051
        %v2053 = vrot.slane %v2048, 4
        %v2055 = vshrl.u32 %v1804, 16
        %v2057 = vrot.slane %v2055, 7
        %v2058 = vshll.u32 %v1804, 16
        %v2060 = vor.u32 %v2057, %v2058
        %v2061 = vsel %vm1811, %v2053, %v2060
        %v2062 = vrot.slane %v2057, 4
        %v2064 = vshrl.u32 %v1805, 16
        %v2066 = vrot.slane %v2064, 7
        %v2067 = vshll.u32 %v1805, 16
        %v2069 = vor.u32 %v2066, %v2067
        %v2070 = vsel %vm1811, %v2062, %v2069
        %v2071 = vrot.slane %v2066, 4
        %v2073 = vshrl.u32 %v1806, 16
        %v2075 = vrot.slane %v2073, 7
        %v2076 = vshll.u32 %v1806, 16
        %v2078 = vor.u32 %v2075, %v2076
        %v2079 = vsel %vm1811, %v2071, %v2078
        %v2080 = vrot.slane %v2075, 4
        %v2082 = vshrl.u32 %v1807, 16
        %v2084 = vrot.slane %v2082, 7
        %v2085 = vshll.u32 %v1807, 16
        %v2087 = vor.u32 %v2084, %v2085
        %v2088 = vsel %vm1811, %v2080, %v2087
        %v2089 = vrot.slane %v2084, 4
        %v2091 = vshrl.u32 %v1808, 16
        %v2093 = vrot.slane %v2091, 7
        %v2094 = vshll.u32 %v1808, 16
        %v2096 = vor.u32 %v2093, %v2094
        %v2097 = vsel %vm1811, %v2089, %v2096
        %v2098 = vrot.slane %v2093, 4
        %vm2099 = vcmp.ne.s16.totalorder %v1818, 0
        %vm2100 = vcmp.ne.s16.totalorder %v1827, 0
        %vm2101 = vcmp.ne.s16.totalorder %v1836, 0
        %vm2102 = vcmp.ne.s16.totalorder %v1845, 0
        %vm2103 = vcmp.ne.s16.totalorder %v1854, 0
        %vm2104 = vcmp.ne.s16.totalorder %v1863, 0
        %vm2105 = vcmp.ne.s16.totalorder %v1872, 0
        %vm2106 = vcmp.ne.s16.totalorder %v1881, 0
        %vm2107 = vcmp.ne.s16.totalorder %v1890, 0
        %vm2108 = vcmp.ne.s16.totalorder %v1899, 0
        %vm2109 = vcmp.ne.s16.totalorder %v1908, 0
        %vm2110 = vcmp.ne.s16.totalorder %v1917, 0
        %vm2111 = vcmp.ne.s16.totalorder %v1926, 0
        %vm2112 = vcmp.ne.s16.totalorder %v1935, 0
        %vm2113 = vcmp.ne.s16.totalorder %v1944, 0
        %vm2114 = vcmp.ne.s16.totalorder %v1953, 0
        %vm2115 = vcmp.ne.s16.totalorder %v1962, 0
        %vm2116 = vcmp.ne.s16.totalorder %v1971, 0
        %vm2117 = vcmp.ne.s16.totalorder %v1980, 0
        %vm2118 = vcmp.ne.s16.totalorder %v1989, 0
        %vm2119 = vcmp.ne.s16.totalorder %v1998, 0
        %vm2120 = vcmp.ne.s16.totalorder %v2007, 0
        %vm2121 = vcmp.ne.s16.totalorder %v2016, 0
        %vm2122 = vcmp.ne.s16.totalorder %v2025, 0
        %vm2123 = vcmp.ne.s16.totalorder %v2034, 0
        %vm2124 = vcmp.ne.s16.totalorder %v2043, 0
        %vm2125 = vcmp.ne.s16.totalorder %v2052, 0
        %vm2126 = vcmp.ne.s16.totalorder %v2061, 0
        %vm2127 = vcmp.ne.s16.totalorder %v2070, 0
        %vm2128 = vcmp.ne.s16.totalorder %v2079, 0
        %vm2129 = vcmp.ne.s16.totalorder %v2088, 0
        %vm2130 = vcmp.ne.s16.totalorder %v2097, 0
        %vm2131 = vcmp.ne.s16.totalorder %v2098, 0
        %v2132 = vsel %vm2099, %v1616, 0
        %v2133 = vsel %vm2100, %v1617, 0
        %v2134 = vsel %vm2101, %v1618, 0
        %v2135 = vsel %vm2102, %v1619, 0
        %v2136 = vsel %vm2103, %v1620, 0
        %v2137 = vsel %vm2104, %v1621, 0
        %v2138 = vsel %vm2105, %v1622, 0
        %v2139 = vsel %vm2106, %v1623, 0
        %v2140 = vsel %vm2107, %v1624, 0
        %v2141 = vsel %vm2108, %v1625, 0
        %v2142 = vsel %vm2109, %v1626, 0
        %v2143 = vsel %vm2110, %v1627, 0
        %v2144 = vsel %vm2111, %v1628, 0
        %v2145 = vsel %vm2112, %v1629, 0
        %v2146 = vsel %vm2113, %v1630, 0
        %v2147 = vsel %vm2114, %v1631, 0
        %v2148 = vsel %vm2115, %v1632, 0
        %v2149 = vsel %vm2116, %v1633, 0
        %v2150 = vsel %vm2117, %v1634, 0
        %v2151 = vsel %vm2118, %v1635, 0
        %v2152 = vsel %vm2119, %v1636, 0
        %v2153 = vsel %vm2120, %v1637, 0
        %v2154 = vsel %vm2121, %v1638, 0
        %v2155 = vsel %vm2122, %v1639, 0
        %v2156 = vsel %vm2123, %v1640, 0
        %v2157 = vsel %vm2124, %v1641, 0
        %v2158 = vsel %vm2125, %v1642, 0
        %v2159 = vsel %vm2126, %v1643, 0
        %v2160 = vsel %vm2127, %v1644, 0
        %v2161 = vsel %vm2128, %v1645, 0
        %v2162 = vsel %vm2129, %v1646, 0
        %v2163 = vsel %vm2130, %v1647, 0
        %v2164 = vsel %vm2131, %v1648, 0
        %v2198 = vunpack.c.l.b16 %v2132
        %v2199 = vunpack.c.l.b16 %v2133
        %v2200 = vunpack.c.l.b16 %v2134
        %v2201 = vunpack.c.l.b16 %v2135
        %v2202 = vunpack.c.l.b16 %v2136
        %v2203 = vunpack.c.l.b16 %v2137
        %v2204 = vunpack.c.l.b16 %v2138
        %v2205 = vunpack.c.l.b16 %v2139
        %v2206 = vunpack.c.l.b16 %v2140
        %v2207 = vunpack.c.l.b16 %v2141
        %v2208 = vunpack.c.l.b16 %v2142
        %v2209 = vunpack.c.l.b16 %v2143
        %v2210 = vunpack.c.l.b16 %v2144
        %v2211 = vunpack.c.l.b16 %v2145
        %v2212 = vunpack.c.l.b16 %v2146
        %v2213 = vunpack.c.l.b16 %v2147
        %v2214 = vunpack.c.l.b16 %v2148
        %v2215 = vunpack.c.l.b16 %v2149
        %v2216 = vunpack.c.l.b16 %v2150
        %v2217 = vunpack.c.l.b16 %v2151
        %v2218 = vunpack.c.l.b16 %v2152
        %v2219 = vunpack.c.l.b16 %v2153
        %v2220 = vunpack.c.l.b16 %v2154
        %v2221 = vunpack.c.l.b16 %v2155
        %v2222 = vunpack.c.l.b16 %v2156
        %v2223 = vunpack.c.l.b16 %v2157
        %v2224 = vunpack.c.l.b16 %v2158
        %v2225 = vunpack.c.l.b16 %v2159
        %v2226 = vunpack.c.l.b16 %v2160
        %v2227 = vunpack.c.l.b16 %v2161
        %v2228 = vunpack.c.l.b16 %v2162
        %v2229 = vunpack.c.l.b16 %v2163
        %v2230 = vunpack.c.l.b16 %v2164
        %v2231 = vpack.c.b16 %v2199, %v2198
        %v2232 = vpack.c.b16 %v2201, %v2200
        %v2233 = vpack.c.b16 %v2203, %v2202
        %v2234 = vpack.c.b16 %v2205, %v2204
        %v2235 = vpack.c.b16 %v2207, %v2206
        %v2236 = vpack.c.b16 %v2209, %v2208
        %v2237 = vpack.c.b16 %v2211, %v2210
        %v2238 = vpack.c.b16 %v2213, %v2212
        %v2239 = vpack.c.b16 %v2215, %v2214
        %v2240 = vpack.c.b16 %v2217, %v2216
        %v2241 = vpack.c.b16 %v2219, %v2218
        %v2242 = vpack.c.b16 %v2221, %v2220
        %v2243 = vpack.c.b16 %v2223, %v2222
        %v2244 = vpack.c.b16 %v2225, %v2224
        %v2245 = vpack.c.b16 %v2227, %v2226
        %v2246 = vpack.c.b16 %v2229, %v2228
        %v2247 = vpack.c.b16 %v2230, %v2230
        %vm2248 = vsmask.f32 7424
        %v2250 = vshrl.u32 %v2231, 16
        %v2252 = vshll.u32 %v2231, 16
        %v2254 = vrot.slane %v2252, 1
        %v2255 = vor.u32 %v2250, %v2254
        %v2257 = vshll.u32 %v2232, 16
        %v2259 = vrot.slane %v2257, 1
        %v2260 = vsel %vm2248, %v2255, %v2259
        %v2261 = vshrl.u32 %v2232, 16
        %v2263 = vor.u32 %v2261, %v2259
        %v2265 = vshll.u32 %v2233, 16
        %v2267 = vrot.slane %v2265, 1
        %v2268 = vsel %vm2248, %v2263, %v2267
        %v2269 = vshrl.u32 %v2233, 16
        %v2271 = vor.u32 %v2269, %v2267
        %v2273 = vshll.u32 %v2234, 16
        %v2275 = vrot.slane %v2273, 1
        %v2276 = vsel %vm2248, %v2271, %v2275
        %v2277 = vshrl.u32 %v2234, 16
        %v2279 = vor.u32 %v2277, %v2275
        %v2281 = vshll.u32 %v2235, 16
        %v2283 = vrot.slane %v2281, 1
        %v2284 = vsel %vm2248, %v2279, %v2283
        %v2285 = vshrl.u32 %v2235, 16
        %v2287 = vor.u32 %v2285, %v2283
        %v2289 = vshll.u32 %v2236, 16
        %v2291 = vrot.slane %v2289, 1
        %v2292 = vsel %vm2248, %v2287, %v2291
        %v2293 = vshrl.u32 %v2236, 16
        %v2295 = vor.u32 %v2293, %v2291
        %v2297 = vshll.u32 %v2237, 16
        %v2299 = vrot.slane %v2297, 1
        %v2300 = vsel %vm2248, %v2295, %v2299
        %v2301 = vshrl.u32 %v2237, 16
        %v2303 = vor.u32 %v2301, %v2299
        %v2305 = vshll.u32 %v2238, 16
        %v2307 = vrot.slane %v2305, 1
        %v2308 = vsel %vm2248, %v2303, %v2307
        %v2309 = vshrl.u32 %v2238, 16
        %v2311 = vor.u32 %v2309, %v2307
        %v2313 = vshll.u32 %v2239, 16
        %v2315 = vrot.slane %v2313, 1
        %v2316 = vsel %vm2248, %v2311, %v2315
        %v2317 = vshrl.u32 %v2239, 16
        %v2319 = vor.u32 %v2317, %v2315
        %v2321 = vshll.u32 %v2240, 16
        %v2323 = vrot.slane %v2321, 1
        %v2324 = vsel %vm2248, %v2319, %v2323
        %v2325 = vshrl.u32 %v2240, 16
        %v2327 = vor.u32 %v2325, %v2323
        %v2329 = vshll.u32 %v2241, 16
        %v2331 = vrot.slane %v2329, 1
        %v2332 = vsel %vm2248, %v2327, %v2331
        %v2333 = vshrl.u32 %v2241, 16
        %v2335 = vor.u32 %v2333, %v2331
        %v2337 = vshll.u32 %v2242, 16
        %v2339 = vrot.slane %v2337, 1
        %v2340 = vsel %vm2248, %v2335, %v2339
        %v2341 = vshrl.u32 %v2242, 16
        %v2343 = vor.u32 %v2341, %v2339
        %v2345 = vshll.u32 %v2243, 16
        %v2347 = vrot.slane %v2345, 1
        %v2348 = vsel %vm2248, %v2343, %v2347
        %v2349 = vshrl.u32 %v2243, 16
        %v2351 = vor.u32 %v2349, %v2347
        %v2353 = vshll.u32 %v2244, 16
        %v2355 = vrot.slane %v2353, 1
        %v2356 = vsel %vm2248, %v2351, %v2355
        %v2357 = vshrl.u32 %v2244, 16
        %v2359 = vor.u32 %v2357, %v2355
        %v2361 = vshll.u32 %v2245, 16
        %v2363 = vrot.slane %v2361, 1
        %v2364 = vsel %vm2248, %v2359, %v2363
        %v2365 = vshrl.u32 %v2245, 16
        %v2367 = vor.u32 %v2365, %v2363
        %v2369 = vshll.u32 %v2246, 16
        %v2371 = vrot.slane %v2369, 1
        %v2372 = vsel %vm2248, %v2367, %v2371
        %v2373 = vshrl.u32 %v2246, 16
        %v2375 = vor.u32 %v2373, %v2371
        %v2377 = vshll.u32 %v2247, 16
        %v2379 = vrot.slane %v2377, 1
        %v2380 = vsel %vm2248, %v2375, %v2379
        %2381 = vrot.lane.b32.xlu0 %v2260, 8
        %v2382 = vpop.permute.xlu0 %2381
        %2383 = vrot.lane.b32.xlu0 %v2268, 8
        %v2384 = vpop.permute.xlu0 %2383
        %2385 = vrot.lane.b32.xlu0 %v2276, 8
        %v2386 = vpop.permute.xlu0 %2385
        %2387 = vrot.lane.b32.xlu0 %v2284, 8
        %v2388 = vpop.permute.xlu0 %2387
        %2389 = vrot.lane.b32.xlu0 %v2292, 8
        %v2390 = vpop.permute.xlu0 %2389
        %2391 = vrot.lane.b32.xlu0 %v2300, 8
        %v2392 = vpop.permute.xlu0 %2391
        %2393 = vrot.lane.b32.xlu0 %v2308, 8
        %v2394 = vpop.permute.xlu0 %2393
        %2395 = vrot.lane.b32.xlu0 %v2316, 8
        %v2396 = vpop.permute.xlu0 %2395
        %2397 = vrot.lane.b32.xlu0 %v2324, 8
        %v2398 = vpop.permute.xlu0 %2397
        %2399 = vrot.lane.b32.xlu0 %v2332, 8
        %v2400 = vpop.permute.xlu0 %2399
        %2401 = vrot.lane.b32.xlu0 %v2340, 8
        %v2402 = vpop.permute.xlu0 %2401
        %2403 = vrot.lane.b32.xlu0 %v2348, 8
        %v2404 = vpop.permute.xlu0 %2403
        %2405 = vrot.lane.b32.xlu0 %v2356, 8
        %v2406 = vpop.permute.xlu0 %2405
        %2407 = vrot.lane.b32.xlu0 %v2364, 8
        %v2408 = vpop.permute.xlu0 %2407
        %2409 = vrot.lane.b32.xlu0 %v2372, 8
        %v2410 = vpop.permute.xlu0 %2409
        %2411 = vrot.lane.b32.xlu0 %v2380, 8
        %v2412 = vpop.permute.xlu0 %2411
        %vm2429 = vcmask 97344
        %2430 = vst.msk [vmem:[#allocation2] sm:$0xff] %vm2429, %v2382
        %2431 = vst.msk [vmem:[#allocation2 + $0x8] sm:$0xff] %vm2429, %v2384
        %2432 = vst.msk [vmem:[#allocation2 + $0x10] sm:$0xff] %vm2429, %v2386
        %2433 = vst.msk [vmem:[#allocation2 + $0x18] sm:$0xff] %vm2429, %v2388
        %2434 = vst.msk [vmem:[#allocation2 + $0x20] sm:$0xff] %vm2429, %v2390
        %2435 = vst.msk [vmem:[#allocation2 + $0x28] sm:$0xff] %vm2429, %v2392
        %2436 = vst.msk [vmem:[#allocation2 + $0x30] sm:$0xff] %vm2429, %v2394
        %2437 = vst.msk [vmem:[#allocation2 + $0x38] sm:$0xff] %vm2429, %v2396
        %2438 = vst.msk [vmem:[#allocation2 + $0x40] sm:$0xff] %vm2429, %v2398
        %2439 = vst.msk [vmem:[#allocation2 + $0x48] sm:$0xff] %vm2429, %v2400
        %2440 = vst.msk [vmem:[#allocation2 + $0x50] sm:$0xff] %vm2429, %v2402
        %2441 = vst.msk [vmem:[#allocation2 + $0x58] sm:$0xff] %vm2429, %v2404
        %2442 = vst.msk [vmem:[#allocation2 + $0x60] sm:$0xff] %vm2429, %v2406
        %2443 = vst.msk [vmem:[#allocation2 + $0x68] sm:$0xff] %vm2429, %v2408
        %2444 = vst.msk [vmem:[#allocation2 + $0x70] sm:$0xff] %vm2429, %v2410
        %2445 = vst.msk [vmem:[#allocation2 + $0x78] sm:$0xff] %vm2429, %v2412
        %v2446 = vld [vmem:[%s168 + $0xc] sm:$0x8]
        %v2447 = vld [vmem:[%s168 + $0x10] sm:$0xf]
        %v2448 = vld [vmem:[%s168 + $0x14] sm:$0xf]
        %v2449 = vld [vmem:[%s168 + $0x18] sm:$0xf]
        %v2450 = vld [vmem:[%s168 + $0x1c] sm:$0xf]
        %v2451 = vld [vmem:[%s168 + $0x20] sm:$0xf]
        %v2452 = vld [vmem:[%s168 + $0x24] sm:$0xf]
        %v2453 = vld [vmem:[%s168 + $0x28] sm:$0xf]
        %v2454 = vld [vmem:[%s168 + $0x2c] sm:$0xf]
        %v2455 = vld [vmem:[%s168 + $0x30] sm:$0xf]
        %v2456 = vld [vmem:[%s168 + $0x34] sm:$0xf]
        %v2457 = vld [vmem:[%s168 + $0x38] sm:$0xf]
        %v2458 = vld [vmem:[%s168 + $0x3c] sm:$0xf]
        %v2459 = vld [vmem:[%s168 + $0x40] sm:$0xf]
        %v2460 = vld [vmem:[%s168 + $0x44] sm:$0xf]
        %v2461 = vld [vmem:[%s168 + $0x48] sm:$0xf]
        %v2462 = vld [vmem:[%s168 + $0x4c] sm:$0xf]
        %v2463 = vld [vmem:[%s168 + $0x50] sm:$0xf]
        %v2464 = vld [vmem:[%s168 + $0x54] sm:$0xf]
        %v2465 = vld [vmem:[%s168 + $0x58] sm:$0xf]
        %v2466 = vld [vmem:[%s168 + $0x5c] sm:$0xf]
        %v2467 = vld [vmem:[%s168 + $0x60] sm:$0xf]
        %v2468 = vld [vmem:[%s168 + $0x64] sm:$0xf]
        %v2469 = vld [vmem:[%s168 + $0x68] sm:$0xf]
        %v2470 = vld [vmem:[%s168 + $0x6c] sm:$0xf]
        %v2471 = vld [vmem:[%s168 + $0x70] sm:$0xf]
        %v2472 = vld [vmem:[%s168 + $0x74] sm:$0xf]
        %v2473 = vld [vmem:[%s168 + $0x78] sm:$0xf]
        %v2474 = vld [vmem:[%s168 + $0x7c] sm:$0xf]
        %v2475 = vld [vmem:[%s168 + $0x80] sm:$0xf]
        %v2476 = vld [vmem:[%s168 + $0x84] sm:$0xf]
        %v2477 = vld [vmem:[%s168 + $0x88] sm:$0xf]
        %v2478 = vld [vmem:[%s168 + $0x8c] sm:$0xf]
        %v2479 = vsel %vm1104, %v2446, 0
        %v2480 = vsel %vm1105, %v2447, 0
        %v2481 = vsel %vm1106, %v2448, 0
        %v2482 = vsel %vm1107, %v2449, 0
        %v2483 = vsel %vm1108, %v2450, 0
        %v2484 = vsel %vm1109, %v2451, 0
        %v2485 = vsel %vm1110, %v2452, 0
        %v2486 = vsel %vm1111, %v2453, 0
        %v2487 = vsel %vm1112, %v2454, 0
        %v2488 = vsel %vm1113, %v2455, 0
        %v2489 = vsel %vm1114, %v2456, 0
        %v2490 = vsel %vm1115, %v2457, 0
        %v2491 = vsel %vm1116, %v2458, 0
        %v2492 = vsel %vm1117, %v2459, 0
        %v2493 = vsel %vm1118, %v2460, 0
        %v2494 = vsel %vm1119, %v2461, 0
        %v2495 = vsel %vm1120, %v2462, 0
        %v2496 = vsel %vm1121, %v2463, 0
        %v2497 = vsel %vm1122, %v2464, 0
        %v2498 = vsel %vm1123, %v2465, 0
        %v2499 = vsel %vm1124, %v2466, 0
        %v2500 = vsel %vm1125, %v2467, 0
        %v2501 = vsel %vm1126, %v2468, 0
        %v2502 = vsel %vm1127, %v2469, 0
        %v2503 = vsel %vm1128, %v2470, 0
        %v2504 = vsel %vm1129, %v2471, 0
        %v2505 = vsel %vm1130, %v2472, 0
        %v2506 = vsel %vm1131, %v2473, 0
        %v2507 = vsel %vm1132, %v2474, 0
        %v2508 = vsel %vm1133, %v2475, 0
        %v2509 = vsel %vm1134, %v2476, 0
        %v2510 = vsel %vm1135, %v2477, 0
        %v2511 = vsel %vm1136, %v2478, 0
        %v2545 = vunpack.c.l.b16 %v2479
        %v2546 = vunpack.c.l.b16 %v2480
        %v2547 = vunpack.c.l.b16 %v2481
        %v2548 = vunpack.c.l.b16 %v2482
        %v2549 = vunpack.c.l.b16 %v2483
        %v2550 = vunpack.c.l.b16 %v2484
        %v2551 = vunpack.c.l.b16 %v2485
        %v2552 = vunpack.c.l.b16 %v2486
        %v2553 = vunpack.c.l.b16 %v2487
        %v2554 = vunpack.c.l.b16 %v2488
        %v2555 = vunpack.c.l.b16 %v2489
        %v2556 = vunpack.c.l.b16 %v2490
        %v2557 = vunpack.c.l.b16 %v2491
        %v2558 = vunpack.c.l.b16 %v2492
        %v2559 = vunpack.c.l.b16 %v2493
        %v2560 = vunpack.c.l.b16 %v2494
        %v2561 = vunpack.c.l.b16 %v2495
        %v2562 = vunpack.c.l.b16 %v2496
        %v2563 = vunpack.c.l.b16 %v2497
        %v2564 = vunpack.c.l.b16 %v2498
        %v2565 = vunpack.c.l.b16 %v2499
        %v2566 = vunpack.c.l.b16 %v2500
        %v2567 = vunpack.c.l.b16 %v2501
        %v2568 = vunpack.c.l.b16 %v2502
        %v2569 = vunpack.c.l.b16 %v2503
        %v2570 = vunpack.c.l.b16 %v2504
        %v2571 = vunpack.c.l.b16 %v2505
        %v2572 = vunpack.c.l.b16 %v2506
        %v2573 = vunpack.c.l.b16 %v2507
        %v2574 = vunpack.c.l.b16 %v2508
        %v2575 = vunpack.c.l.b16 %v2509
        %v2576 = vunpack.c.l.b16 %v2510
        %v2577 = vunpack.c.l.b16 %v2511
        %v2578 = vpack.c.b16 %v2546, %v2545
        %v2579 = vpack.c.b16 %v2548, %v2547
        %v2580 = vpack.c.b16 %v2550, %v2549
        %v2581 = vpack.c.b16 %v2552, %v2551
        %v2582 = vpack.c.b16 %v2554, %v2553
        %v2583 = vpack.c.b16 %v2556, %v2555
        %v2584 = vpack.c.b16 %v2558, %v2557
        %v2585 = vpack.c.b16 %v2560, %v2559
        %v2586 = vpack.c.b16 %v2562, %v2561
        %v2587 = vpack.c.b16 %v2564, %v2563
        %v2588 = vpack.c.b16 %v2566, %v2565
        %v2589 = vpack.c.b16 %v2568, %v2567
        %v2590 = vpack.c.b16 %v2570, %v2569
        %v2591 = vpack.c.b16 %v2572, %v2571
        %v2592 = vpack.c.b16 %v2574, %v2573
        %v2593 = vpack.c.b16 %v2576, %v2575
        %v2594 = vpack.c.b16 %v2577, %v2577
        %v2596 = vshrl.u32 %v2578, 16
        %v2598 = vrot.slane %v2596, 3
        %v2599 = vshll.u32 %v2578, 16
        %v2601 = vrot.slane %v2599, 4
        %v2602 = vor.u32 %v2598, %v2601
        %v2604 = vshrl.u32 %v2579, 16
        %v2606 = vrot.slane %v2604, 3
        %v2607 = vshll.u32 %v2579, 16
        %v2609 = vrot.slane %v2607, 4
        %v2610 = vor.u32 %v2606, %v2609
        %v2611 = vsel %vm1253, %v2602, %v2610
        %v2613 = vshrl.u32 %v2580, 16
        %v2615 = vrot.slane %v2613, 3
        %v2616 = vshll.u32 %v2580, 16
        %v2618 = vrot.slane %v2616, 4
        %v2619 = vor.u32 %v2615, %v2618
        %v2620 = vsel %vm1253, %v2610, %v2619
        %v2622 = vshrl.u32 %v2581, 16
        %v2624 = vrot.slane %v2622, 3
        %v2625 = vshll.u32 %v2581, 16
        %v2627 = vrot.slane %v2625, 4
        %v2628 = vor.u32 %v2624, %v2627
        %v2629 = vsel %vm1253, %v2619, %v2628
        %v2631 = vshrl.u32 %v2582, 16
        %v2633 = vrot.slane %v2631, 3
        %v2634 = vshll.u32 %v2582, 16
        %v2636 = vrot.slane %v2634, 4
        %v2637 = vor.u32 %v2633, %v2636
        %v2638 = vsel %vm1253, %v2628, %v2637
        %v2640 = vshrl.u32 %v2583, 16
        %v2642 = vrot.slane %v2640, 3
        %v2643 = vshll.u32 %v2583, 16
        %v2645 = vrot.slane %v2643, 4
        %v2646 = vor.u32 %v2642, %v2645
        %v2647 = vsel %vm1253, %v2637, %v2646
        %v2649 = vshrl.u32 %v2584, 16
        %v2651 = vrot.slane %v2649, 3
        %v2652 = vshll.u32 %v2584, 16
        %v2654 = vrot.slane %v2652, 4
        %v2655 = vor.u32 %v2651, %v2654
        %v2656 = vsel %vm1253, %v2646, %v2655
        %v2658 = vshrl.u32 %v2585, 16
        %v2660 = vrot.slane %v2658, 3
        %v2661 = vshll.u32 %v2585, 16
        %v2663 = vrot.slane %v2661, 4
        %v2664 = vor.u32 %v2660, %v2663
        %v2665 = vsel %vm1253, %v2655, %v2664
        %v2667 = vshrl.u32 %v2586, 16
        %v2669 = vrot.slane %v2667, 3
        %v2670 = vshll.u32 %v2586, 16
        %v2672 = vrot.slane %v2670, 4
        %v2673 = vor.u32 %v2669, %v2672
        %v2674 = vsel %vm1253, %v2664, %v2673
        %v2676 = vshrl.u32 %v2587, 16
        %v2678 = vrot.slane %v2676, 3
        %v2679 = vshll.u32 %v2587, 16
        %v2681 = vrot.slane %v2679, 4
        %v2682 = vor.u32 %v2678, %v2681
        %v2683 = vsel %vm1253, %v2673, %v2682
        %v2685 = vshrl.u32 %v2588, 16
        %v2687 = vrot.slane %v2685, 3
        %v2688 = vshll.u32 %v2588, 16
        %v2690 = vrot.slane %v2688, 4
        %v2691 = vor.u32 %v2687, %v2690
        %v2692 = vsel %vm1253, %v2682, %v2691
        %v2694 = vshrl.u32 %v2589, 16
        %v2696 = vrot.slane %v2694, 3
        %v2697 = vshll.u32 %v2589, 16
        %v2699 = vrot.slane %v2697, 4
        %v2700 = vor.u32 %v2696, %v2699
        %v2701 = vsel %vm1253, %v2691, %v2700
        %v2703 = vshrl.u32 %v2590, 16
        %v2705 = vrot.slane %v2703, 3
        %v2706 = vshll.u32 %v2590, 16
        %v2708 = vrot.slane %v2706, 4
        %v2709 = vor.u32 %v2705, %v2708
        %v2710 = vsel %vm1253, %v2700, %v2709
        %v2712 = vshrl.u32 %v2591, 16
        %v2714 = vrot.slane %v2712, 3
        %v2715 = vshll.u32 %v2591, 16
        %v2717 = vrot.slane %v2715, 4
        %v2718 = vor.u32 %v2714, %v2717
        %v2719 = vsel %vm1253, %v2709, %v2718
        %v2721 = vshrl.u32 %v2592, 16
        %v2723 = vrot.slane %v2721, 3
        %v2724 = vshll.u32 %v2592, 16
        %v2726 = vrot.slane %v2724, 4
        %v2727 = vor.u32 %v2723, %v2726
        %v2728 = vsel %vm1253, %v2718, %v2727
        %v2730 = vshrl.u32 %v2593, 16
        %v2732 = vrot.slane %v2730, 3
        %v2733 = vshll.u32 %v2593, 16
        %v2735 = vrot.slane %v2733, 4
        %v2736 = vor.u32 %v2732, %v2735
        %v2737 = vsel %vm1253, %v2727, %v2736
        %v2739 = vshrl.u32 %v2594, 16
        %v2741 = vrot.slane %v2739, 3
        %v2742 = vshll.u32 %v2594, 16
        %v2744 = vrot.slane %v2742, 4
        %v2745 = vor.u32 %v2741, %v2744
        %v2746 = vsel %vm1253, %v2736, %v2745
        %2747 = vrot.lane.b32.xlu0 %v2611, 12
        %v2748 = vpop.permute.xlu0 %2747
        %2749 = vrot.lane.b32.xlu0 %v2620, 12
        %v2750 = vpop.permute.xlu0 %2749
        %2751 = vrot.lane.b32.xlu0 %v2629, 12
        %v2752 = vpop.permute.xlu0 %2751
        %2753 = vrot.lane.b32.xlu0 %v2638, 12
        %v2754 = vpop.permute.xlu0 %2753
        %2755 = vrot.lane.b32.xlu0 %v2647, 12
        %v2756 = vpop.permute.xlu0 %2755
        %2757 = vrot.lane.b32.xlu0 %v2656, 12
        %v2758 = vpop.permute.xlu0 %2757
        %2759 = vrot.lane.b32.xlu0 %v2665, 12
        %v2760 = vpop.permute.xlu0 %2759
        %2761 = vrot.lane.b32.xlu0 %v2674, 12
        %v2762 = vpop.permute.xlu0 %2761
        %2763 = vrot.lane.b32.xlu0 %v2683, 12
        %v2764 = vpop.permute.xlu0 %2763
        %2765 = vrot.lane.b32.xlu0 %v2692, 12
        %v2766 = vpop.permute.xlu0 %2765
        %2767 = vrot.lane.b32.xlu0 %v2701, 12
        %v2768 = vpop.permute.xlu0 %2767
        %2769 = vrot.lane.b32.xlu0 %v2710, 12
        %v2770 = vpop.permute.xlu0 %2769
        %2771 = vrot.lane.b32.xlu0 %v2719, 12
        %v2772 = vpop.permute.xlu0 %2771
        %2773 = vrot.lane.b32.xlu0 %v2728, 12
        %v2774 = vpop.permute.xlu0 %2773
        %2775 = vrot.lane.b32.xlu0 %v2737, 12
        %v2776 = vpop.permute.xlu0 %2775
        %2777 = vrot.lane.b32.xlu0 %v2746, 12
        %v2778 = vpop.permute.xlu0 %2777
        %vm2795 = vcmask 130144
        %2796 = vst.msk [vmem:[#allocation2] sm:$0xff] %vm2795, %v2748
        %2797 = vst.msk [vmem:[#allocation2 + $0x8] sm:$0xff] %vm2795, %v2750
        %2798 = vst.msk [vmem:[#allocation2 + $0x10] sm:$0xff] %vm2795, %v2752
        %2799 = vst.msk [vmem:[#allocation2 + $0x18] sm:$0xff] %vm2795, %v2754
        %2800 = vst.msk [vmem:[#allocation2 + $0x20] sm:$0xff] %vm2795, %v2756
        %2801 = vst.msk [vmem:[#allocation2 + $0x28] sm:$0xff] %vm2795, %v2758
        %2802 = vst.msk [vmem:[#allocation2 + $0x30] sm:$0xff] %vm2795, %v2760
        %2803 = vst.msk [vmem:[#allocation2 + $0x38] sm:$0xff] %vm2795, %v2762
        %2804 = vst.msk [vmem:[#allocation2 + $0x40] sm:$0xff] %vm2795, %v2764
        %2805 = vst.msk [vmem:[#allocation2 + $0x48] sm:$0xff] %vm2795, %v2766
        %2806 = vst.msk [vmem:[#allocation2 + $0x50] sm:$0xff] %vm2795, %v2768
        %2807 = vst.msk [vmem:[#allocation2 + $0x58] sm:$0xff] %vm2795, %v2770
        %2808 = vst.msk [vmem:[#allocation2 + $0x60] sm:$0xff] %vm2795, %v2772
        %2809 = vst.msk [vmem:[#allocation2 + $0x68] sm:$0xff] %vm2795, %v2774
        %2810 = vst.msk [vmem:[#allocation2 + $0x70] sm:$0xff] %vm2795, %v2776
        %2811 = vst.msk [vmem:[#allocation2 + $0x78] sm:$0xff] %vm2795, %v2778
        %v2812 = vld [vmem:[%s168 + $0x10] sm:$0xf]
        %v2813 = vld [vmem:[%s168 + $0x14] sm:$0xf]
        %v2814 = vld [vmem:[%s168 + $0x18] sm:$0xf]
        %v2815 = vld [vmem:[%s168 + $0x1c] sm:$0xf]
        %v2816 = vld [vmem:[%s168 + $0x20] sm:$0xf]
        %v2817 = vld [vmem:[%s168 + $0x24] sm:$0xf]
        %v2818 = vld [vmem:[%s168 + $0x28] sm:$0xf]
        %v2819 = vld [vmem:[%s168 + $0x2c] sm:$0xf]
        %v2820 = vld [vmem:[%s168 + $0x30] sm:$0xf]
        %v2821 = vld [vmem:[%s168 + $0x34] sm:$0xf]
        %v2822 = vld [vmem:[%s168 + $0x38] sm:$0xf]
        %v2823 = vld [vmem:[%s168 + $0x3c] sm:$0xf]
        %v2824 = vld [vmem:[%s168 + $0x40] sm:$0xf]
        %v2825 = vld [vmem:[%s168 + $0x44] sm:$0xf]
        %v2826 = vld [vmem:[%s168 + $0x48] sm:$0xf]
        %v2827 = vld [vmem:[%s168 + $0x4c] sm:$0xf]
        %v2828 = vld [vmem:[%s168 + $0x50] sm:$0xf]
        %v2829 = vld [vmem:[%s168 + $0x54] sm:$0xf]
        %v2830 = vld [vmem:[%s168 + $0x58] sm:$0xf]
        %v2831 = vld [vmem:[%s168 + $0x5c] sm:$0xf]
        %v2832 = vld [vmem:[%s168 + $0x60] sm:$0xf]
        %v2833 = vld [vmem:[%s168 + $0x64] sm:$0xf]
        %v2834 = vld [vmem:[%s168 + $0x68] sm:$0xf]
        %v2835 = vld [vmem:[%s168 + $0x6c] sm:$0xf]
        %v2836 = vld [vmem:[%s168 + $0x70] sm:$0xf]
        %v2837 = vld [vmem:[%s168 + $0x74] sm:$0xf]
        %v2838 = vld [vmem:[%s168 + $0x78] sm:$0xf]
        %v2839 = vld [vmem:[%s168 + $0x7c] sm:$0xf]
        %v2840 = vld [vmem:[%s168 + $0x80] sm:$0xf]
        %v2841 = vld [vmem:[%s168 + $0x84] sm:$0xf]
        %v2842 = vld [vmem:[%s168 + $0x88] sm:$0xf]
        %v2843 = vld [vmem:[%s168 + $0x8c] sm:$0xf]
        %v2876 = vunpack.c.l.b16 %v2812
        %v2877 = vunpack.c.l.b16 %v2813
        %v2878 = vunpack.c.l.b16 %v2814
        %v2879 = vunpack.c.l.b16 %v2815
        %v2880 = vunpack.c.l.b16 %v2816
        %v2881 = vunpack.c.l.b16 %v2817
        %v2882 = vunpack.c.l.b16 %v2818
        %v2883 = vunpack.c.l.b16 %v2819
        %v2884 = vunpack.c.l.b16 %v2820
        %v2885 = vunpack.c.l.b16 %v2821
        %v2886 = vunpack.c.l.b16 %v2822
        %v2887 = vunpack.c.l.b16 %v2823
        %v2888 = vunpack.c.l.b16 %v2824
        %v2889 = vunpack.c.l.b16 %v2825
        %v2890 = vunpack.c.l.b16 %v2826
        %v2891 = vunpack.c.l.b16 %v2827
        %v2892 = vunpack.c.l.b16 %v2828
        %v2893 = vunpack.c.l.b16 %v2829
        %v2894 = vunpack.c.l.b16 %v2830
        %v2895 = vunpack.c.l.b16 %v2831
        %v2896 = vunpack.c.l.b16 %v2832
        %v2897 = vunpack.c.l.b16 %v2833
        %v2898 = vunpack.c.l.b16 %v2834
        %v2899 = vunpack.c.l.b16 %v2835
        %v2900 = vunpack.c.l.b16 %v2836
        %v2901 = vunpack.c.l.b16 %v2837
        %v2902 = vunpack.c.l.b16 %v2838
        %v2903 = vunpack.c.l.b16 %v2839
        %v2904 = vunpack.c.l.b16 %v2840
        %v2905 = vunpack.c.l.b16 %v2841
        %v2906 = vunpack.c.l.b16 %v2842
        %v2907 = vunpack.c.l.b16 %v2843
        %v2908 = vpack.c.b16 %v2877, %v2876
        %v2909 = vpack.c.b16 %v2879, %v2878
        %v2910 = vpack.c.b16 %v2881, %v2880
        %v2911 = vpack.c.b16 %v2883, %v2882
        %v2912 = vpack.c.b16 %v2885, %v2884
        %v2913 = vpack.c.b16 %v2887, %v2886
        %v2914 = vpack.c.b16 %v2889, %v2888
        %v2915 = vpack.c.b16 %v2891, %v2890
        %v2916 = vpack.c.b16 %v2893, %v2892
        %v2917 = vpack.c.b16 %v2895, %v2894
        %v2918 = vpack.c.b16 %v2897, %v2896
        %v2919 = vpack.c.b16 %v2899, %v2898
        %v2920 = vpack.c.b16 %v2901, %v2900
        %v2921 = vpack.c.b16 %v2903, %v2902
        %v2922 = vpack.c.b16 %v2905, %v2904
        %v2923 = vpack.c.b16 %v2907, %v2906
        %2924 = vrot.lane.b32.xlu0 %v2908, 16
        %v2925 = vpop.permute.xlu0 %2924
        %2926 = vrot.lane.b32.xlu0 %v2909, 16
        %v2927 = vpop.permute.xlu0 %2926
        %2928 = vrot.lane.b32.xlu0 %v2910, 16
        %v2929 = vpop.permute.xlu0 %2928
        %2930 = vrot.lane.b32.xlu0 %v2911, 16
        %v2931 = vpop.permute.xlu0 %2930
        %2932 = vrot.lane.b32.xlu0 %v2912, 16
        %v2933 = vpop.permute.xlu0 %2932
        %2934 = vrot.lane.b32.xlu0 %v2913, 16
        %v2935 = vpop.permute.xlu0 %2934
        %2936 = vrot.lane.b32.xlu0 %v2914, 16
        %v2937 = vpop.permute.xlu0 %2936
        %2938 = vrot.lane.b32.xlu0 %v2915, 16
        %v2939 = vpop.permute.xlu0 %2938
        %2940 = vrot.lane.b32.xlu0 %v2916, 16
        %v2941 = vpop.permute.xlu0 %2940
        %2942 = vrot.lane.b32.xlu0 %v2917, 16
        %v2943 = vpop.permute.xlu0 %2942
        %2944 = vrot.lane.b32.xlu0 %v2918, 16
        %v2945 = vpop.permute.xlu0 %2944
        %2946 = vrot.lane.b32.xlu0 %v2919, 16
        %v2947 = vpop.permute.xlu0 %2946
        %2948 = vrot.lane.b32.xlu0 %v2920, 16
        %v2949 = vpop.permute.xlu0 %2948
        %2950 = vrot.lane.b32.xlu0 %v2921, 16
        %v2951 = vpop.permute.xlu0 %2950
        %2952 = vrot.lane.b32.xlu0 %v2922, 16
        %v2953 = vpop.permute.xlu0 %2952
        %2954 = vrot.lane.b32.xlu0 %v2923, 16
        %v2955 = vpop.permute.xlu0 %2954
        %vm2972 = vcmask 162944
        %2973 = vst.msk [vmem:[#allocation2] sm:$0xff] %vm2972, %v2925
        %2974 = vst.msk [vmem:[#allocation2 + $0x8] sm:$0xff] %vm2972, %v2927
        %2975 = vst.msk [vmem:[#allocation2 + $0x10] sm:$0xff] %vm2972, %v2929
        %2976 = vst.msk [vmem:[#allocation2 + $0x18] sm:$0xff] %vm2972, %v2931
        %2977 = vst.msk [vmem:[#allocation2 + $0x20] sm:$0xff] %vm2972, %v2933
        %2978 = vst.msk [vmem:[#allocation2 + $0x28] sm:$0xff] %vm2972, %v2935
        %2979 = vst.msk [vmem:[#allocation2 + $0x30] sm:$0xff] %vm2972, %v2937
        %2980 = vst.msk [vmem:[#allocation2 + $0x38] sm:$0xff] %vm2972, %v2939
        %2981 = vst.msk [vmem:[#allocation2 + $0x40] sm:$0xff] %vm2972, %v2941
        %2982 = vst.msk [vmem:[#allocation2 + $0x48] sm:$0xff] %vm2972, %v2943
        %2983 = vst.msk [vmem:[#allocation2 + $0x50] sm:$0xff] %vm2972, %v2945
        %2984 = vst.msk [vmem:[#allocation2 + $0x58] sm:$0xff] %vm2972, %v2947
        %2985 = vst.msk [vmem:[#allocation2 + $0x60] sm:$0xff] %vm2972, %v2949
        %2986 = vst.msk [vmem:[#allocation2 + $0x68] sm:$0xff] %vm2972, %v2951
        %2987 = vst.msk [vmem:[#allocation2 + $0x70] sm:$0xff] %vm2972, %v2953
        %2988 = vst.msk [vmem:[#allocation2 + $0x78] sm:$0xff] %vm2972, %v2955
        %v2989 = vld [vmem:[%s168 + $0x10] sm:$0xf]
        %v2990 = vld [vmem:[%s168 + $0x14] sm:$0xf]
        %v2991 = vld [vmem:[%s168 + $0x18] sm:$0xf]
        %v2992 = vld [vmem:[%s168 + $0x1c] sm:$0xf]
        %v2993 = vld [vmem:[%s168 + $0x20] sm:$0xf]
        %v2994 = vld [vmem:[%s168 + $0x24] sm:$0xf]
        %v2995 = vld [vmem:[%s168 + $0x28] sm:$0xf]
        %v2996 = vld [vmem:[%s168 + $0x2c] sm:$0xf]
        %v2997 = vld [vmem:[%s168 + $0x30] sm:$0xf]
        %v2998 = vld [vmem:[%s168 + $0x34] sm:$0xf]
        %v2999 = vld [vmem:[%s168 + $0x38] sm:$0xf]
        %v3000 = vld [vmem:[%s168 + $0x3c] sm:$0xf]
        %v3001 = vld [vmem:[%s168 + $0x40] sm:$0xf]
        %v3002 = vld [vmem:[%s168 + $0x44] sm:$0xf]
        %v3003 = vld [vmem:[%s168 + $0x48] sm:$0xf]
        %v3004 = vld [vmem:[%s168 + $0x4c] sm:$0xf]
        %v3005 = vld [vmem:[%s168 + $0x50] sm:$0xf]
        %v3006 = vld [vmem:[%s168 + $0x54] sm:$0xf]
        %v3007 = vld [vmem:[%s168 + $0x58] sm:$0xf]
        %v3008 = vld [vmem:[%s168 + $0x5c] sm:$0xf]
        %v3009 = vld [vmem:[%s168 + $0x60] sm:$0xf]
        %v3010 = vld [vmem:[%s168 + $0x64] sm:$0xf]
        %v3011 = vld [vmem:[%s168 + $0x68] sm:$0xf]
        %v3012 = vld [vmem:[%s168 + $0x6c] sm:$0xf]
        %v3013 = vld [vmem:[%s168 + $0x70] sm:$0xf]
        %v3014 = vld [vmem:[%s168 + $0x74] sm:$0xf]
        %v3015 = vld [vmem:[%s168 + $0x78] sm:$0xf]
        %v3016 = vld [vmem:[%s168 + $0x7c] sm:$0xf]
        %v3017 = vld [vmem:[%s168 + $0x80] sm:$0xf]
        %v3018 = vld [vmem:[%s168 + $0x84] sm:$0xf]
        %v3019 = vld [vmem:[%s168 + $0x88] sm:$0xf]
        %v3020 = vld [vmem:[%s168 + $0x8c] sm:$0xf]
        %v3021 = vld [vmem:[%s168 + $0x90] sm:$0x1]
        %v3022 = vsel %vm2099, %v2989, 0
        %v3023 = vsel %vm2100, %v2990, 0
        %v3024 = vsel %vm2101, %v2991, 0
        %v3025 = vsel %vm2102, %v2992, 0
        %v3026 = vsel %vm2103, %v2993, 0
        %v3027 = vsel %vm2104, %v2994, 0
        %v3028 = vsel %vm2105, %v2995, 0
        %v3029 = vsel %vm2106, %v2996, 0
        %v3030 = vsel %vm2107, %v2997, 0
        %v3031 = vsel %vm2108, %v2998, 0
        %v3032 = vsel %vm2109, %v2999, 0
        %v3033 = vsel %vm2110, %v3000, 0
        %v3034 = vsel %vm2111, %v3001, 0
        %v3035 = vsel %vm2112, %v3002, 0
        %v3036 = vsel %vm2113, %v3003, 0
        %v3037 = vsel %vm2114, %v3004, 0
        %v3038 = vsel %vm2115, %v3005, 0
        %v3039 = vsel %vm2116, %v3006, 0
        %v3040 = vsel %vm2117, %v3007, 0
        %v3041 = vsel %vm2118, %v3008, 0
        %v3042 = vsel %vm2119, %v3009, 0
        %v3043 = vsel %vm2120, %v3010, 0
        %v3044 = vsel %vm2121, %v3011, 0
        %v3045 = vsel %vm2122, %v3012, 0
        %v3046 = vsel %vm2123, %v3013, 0
        %v3047 = vsel %vm2124, %v3014, 0
        %v3048 = vsel %vm2125, %v3015, 0
        %v3049 = vsel %vm2126, %v3016, 0
        %v3050 = vsel %vm2127, %v3017, 0
        %v3051 = vsel %vm2128, %v3018, 0
        %v3052 = vsel %vm2129, %v3019, 0
        %v3053 = vsel %vm2130, %v3020, 0
        %v3054 = vsel %vm2131, %v3021, 0
        %v3088 = vunpack.c.l.b16 %v3022
        %v3089 = vunpack.c.l.b16 %v3023
        %v3090 = vunpack.c.l.b16 %v3024
        %v3091 = vunpack.c.l.b16 %v3025
        %v3092 = vunpack.c.l.b16 %v3026
        %v3093 = vunpack.c.l.b16 %v3027
        %v3094 = vunpack.c.l.b16 %v3028
        %v3095 = vunpack.c.l.b16 %v3029
        %v3096 = vunpack.c.l.b16 %v3030
        %v3097 = vunpack.c.l.b16 %v3031
        %v3098 = vunpack.c.l.b16 %v3032
        %v3099 = vunpack.c.l.b16 %v3033
        %v3100 = vunpack.c.l.b16 %v3034
        %v3101 = vunpack.c.l.b16 %v3035
        %v3102 = vunpack.c.l.b16 %v3036
        %v3103 = vunpack.c.l.b16 %v3037
        %v3104 = vunpack.c.l.b16 %v3038
        %v3105 = vunpack.c.l.b16 %v3039
        %v3106 = vunpack.c.l.b16 %v3040
        %v3107 = vunpack.c.l.b16 %v3041
        %v3108 = vunpack.c.l.b16 %v3042
        %v3109 = vunpack.c.l.b16 %v3043
        %v3110 = vunpack.c.l.b16 %v3044
        %v3111 = vunpack.c.l.b16 %v3045
        %v3112 = vunpack.c.l.b16 %v3046
        %v3113 = vunpack.c.l.b16 %v3047
        %v3114 = vunpack.c.l.b16 %v3048
        %v3115 = vunpack.c.l.b16 %v3049
        %v3116 = vunpack.c.l.b16 %v3050
        %v3117 = vunpack.c.l.b16 %v3051
        %v3118 = vunpack.c.l.b16 %v3052
        %v3119 = vunpack.c.l.b16 %v3053
        %v3120 = vunpack.c.l.b16 %v3054
        %v3121 = vpack.c.b16 %v3089, %v3088
        %v3122 = vpack.c.b16 %v3091, %v3090
        %v3123 = vpack.c.b16 %v3093, %v3092
        %v3124 = vpack.c.b16 %v3095, %v3094
        %v3125 = vpack.c.b16 %v3097, %v3096
        %v3126 = vpack.c.b16 %v3099, %v3098
        %v3127 = vpack.c.b16 %v3101, %v3100
        %v3128 = vpack.c.b16 %v3103, %v3102
        %v3129 = vpack.c.b16 %v3105, %v3104
        %v3130 = vpack.c.b16 %v3107, %v3106
        %v3131 = vpack.c.b16 %v3109, %v3108
        %v3132 = vpack.c.b16 %v3111, %v3110
        %v3133 = vpack.c.b16 %v3113, %v3112
        %v3134 = vpack.c.b16 %v3115, %v3114
        %v3135 = vpack.c.b16 %v3117, %v3116
        %v3136 = vpack.c.b16 %v3119, %v3118
        %v3137 = vpack.c.b16 %v3120, %v3120
        %v3139 = vshrl.u32 %v3121, 16
        %v3141 = vshll.u32 %v3121, 16
        %v3143 = vrot.slane %v3141, 1
        %v3144 = vor.u32 %v3139, %v3143
        %v3146 = vshll.u32 %v3122, 16
        %v3148 = vrot.slane %v3146, 1
        %v3149 = vsel %vm2248, %v3144, %v3148
        %v3150 = vshrl.u32 %v3122, 16
        %v3152 = vor.u32 %v3150, %v3148
        %v3154 = vshll.u32 %v3123, 16
        %v3156 = vrot.slane %v3154, 1
        %v3157 = vsel %vm2248, %v3152, %v3156
        %v3158 = vshrl.u32 %v3123, 16
        %v3160 = vor.u32 %v3158, %v3156
        %v3162 = vshll.u32 %v3124, 16
        %v3164 = vrot.slane %v3162, 1
        %v3165 = vsel %vm2248, %v3160, %v3164
        %v3166 = vshrl.u32 %v3124, 16
        %v3168 = vor.u32 %v3166, %v3164
        %v3170 = vshll.u32 %v3125, 16
        %v3172 = vrot.slane %v3170, 1
        %v3173 = vsel %vm2248, %v3168, %v3172
        %v3174 = vshrl.u32 %v3125, 16
        %v3176 = vor.u32 %v3174, %v3172
        %v3178 = vshll.u32 %v3126, 16
        %v3180 = vrot.slane %v3178, 1
        %v3181 = vsel %vm2248, %v3176, %v3180
        %v3182 = vshrl.u32 %v3126, 16
        %v3184 = vor.u32 %v3182, %v3180
        %v3186 = vshll.u32 %v3127, 16
        %v3188 = vrot.slane %v3186, 1
        %v3189 = vsel %vm2248, %v3184, %v3188
        %v3190 = vshrl.u32 %v3127, 16
        %v3192 = vor.u32 %v3190, %v3188
        %v3194 = vshll.u32 %v3128, 16
        %v3196 = vrot.slane %v3194, 1
        %v3197 = vsel %vm2248, %v3192, %v3196
        %v3198 = vshrl.u32 %v3128, 16
        %v3200 = vor.u32 %v3198, %v3196
        %v3202 = vshll.u32 %v3129, 16
        %v3204 = vrot.slane %v3202, 1
        %v3205 = vsel %vm2248, %v3200, %v3204
        %v3206 = vshrl.u32 %v3129, 16
        %v3208 = vor.u32 %v3206, %v3204
        %v3210 = vshll.u32 %v3130, 16
        %v3212 = vrot.slane %v3210, 1
        %v3213 = vsel %vm2248, %v3208, %v3212
        %v3214 = vshrl.u32 %v3130, 16
        %v3216 = vor.u32 %v3214, %v3212
        %v3218 = vshll.u32 %v3131, 16
        %v3220 = vrot.slane %v3218, 1
        %v3221 = vsel %vm2248, %v3216, %v3220
        %v3222 = vshrl.u32 %v3131, 16
        %v3224 = vor.u32 %v3222, %v3220
        %v3226 = vshll.u32 %v3132, 16
        %v3228 = vrot.slane %v3226, 1
        %v3229 = vsel %vm2248, %v3224, %v3228
        %v3230 = vshrl.u32 %v3132, 16
        %v3232 = vor.u32 %v3230, %v3228
        %v3234 = vshll.u32 %v3133, 16
        %v3236 = vrot.slane %v3234, 1
        %v3237 = vsel %vm2248, %v3232, %v3236
        %v3238 = vshrl.u32 %v3133, 16
        %v3240 = vor.u32 %v3238, %v3236
        %v3242 = vshll.u32 %v3134, 16
        %v3244 = vrot.slane %v3242, 1
        %v3245 = vsel %vm2248, %v3240, %v3244
        %v3246 = vshrl.u32 %v3134, 16
        %v3248 = vor.u32 %v3246, %v3244
        %v3250 = vshll.u32 %v3135, 16
        %v3252 = vrot.slane %v3250, 1
        %v3253 = vsel %vm2248, %v3248, %v3252
        %v3254 = vshrl.u32 %v3135, 16
        %v3256 = vor.u32 %v3254, %v3252
        %v3258 = vshll.u32 %v3136, 16
        %v3260 = vrot.slane %v3258, 1
        %v3261 = vsel %vm2248, %v3256, %v3260
        %v3262 = vshrl.u32 %v3136, 16
        %v3264 = vor.u32 %v3262, %v3260
        %v3266 = vshll.u32 %v3137, 16
        %v3268 = vrot.slane %v3266, 1
        %v3269 = vsel %vm2248, %v3264, %v3268
        %3270 = vrot.lane.b32.xlu0 %v3149, 20
        %v3271 = vpop.permute.xlu0 %3270
        %3272 = vrot.lane.b32.xlu0 %v3157, 20
        %v3273 = vpop.permute.xlu0 %3272
        %3274 = vrot.lane.b32.xlu0 %v3165, 20
        %v3275 = vpop.permute.xlu0 %3274
        %3276 = vrot.lane.b32.xlu0 %v3173, 20
        %v3277 = vpop.permute.xlu0 %3276
        %3278 = vrot.lane.b32.xlu0 %v3181, 20
        %v3279 = vpop.permute.xlu0 %3278
        %3280 = vrot.lane.b32.xlu0 %v3189, 20
        %v3281 = vpop.permute.xlu0 %3280
        %3282 = vrot.lane.b32.xlu0 %v3197, 20
        %v3283 = vpop.permute.xlu0 %3282
        %3284 = vrot.lane.b32.xlu0 %v3205, 20
        %v3285 = vpop.permute.xlu0 %3284
        %3286 = vrot.lane.b32.xlu0 %v3213, 20
        %v3287 = vpop.permute.xlu0 %3286
        %3288 = vrot.lane.b32.xlu0 %v3221, 20
        %v3289 = vpop.permute.xlu0 %3288
        %3290 = vrot.lane.b32.xlu0 %v3229, 20
        %v3291 = vpop.permute.xlu0 %3290
        %3292 = vrot.lane.b32.xlu0 %v3237, 20
        %v3293 = vpop.permute.xlu0 %3292
        %3294 = vrot.lane.b32.xlu0 %v3245, 20
        %v3295 = vpop.permute.xlu0 %3294
        %3296 = vrot.lane.b32.xlu0 %v3253, 20
        %v3297 = vpop.permute.xlu0 %3296
        %3298 = vrot.lane.b32.xlu0 %v3261, 20
        %v3299 = vpop.permute.xlu0 %3298
        %3300 = vrot.lane.b32.xlu0 %v3269, 20
        %v3301 = vpop.permute.xlu0 %3300
        %vm3318 = vcmask 195744
        %3319 = vst.msk [vmem:[#allocation2] sm:$0xff] %vm3318, %v3271
        %3320 = vst.msk [vmem:[#allocation2 + $0x8] sm:$0xff] %vm3318, %v3273
        %3321 = vst.msk [vmem:[#allocation2 + $0x10] sm:$0xff] %vm3318, %v3275
        %3322 = vst.msk [vmem:[#allocation2 + $0x18] sm:$0xff] %vm3318, %v3277
        %3323 = vst.msk [vmem:[#allocation2 + $0x20] sm:$0xff] %vm3318, %v3279
        %3324 = vst.msk [vmem:[#allocation2 + $0x28] sm:$0xff] %vm3318, %v3281
        %3325 = vst.msk [vmem:[#allocation2 + $0x30] sm:$0xff] %vm3318, %v3283
        %3326 = vst.msk [vmem:[#allocation2 + $0x38] sm:$0xff] %vm3318, %v3285
        %3327 = vst.msk [vmem:[#allocation2 + $0x40] sm:$0xff] %vm3318, %v3287
        %3328 = vst.msk [vmem:[#allocation2 + $0x48] sm:$0xff] %vm3318, %v3289
        %3329 = vst.msk [vmem:[#allocation2 + $0x50] sm:$0xff] %vm3318, %v3291
        %3330 = vst.msk [vmem:[#allocation2 + $0x58] sm:$0xff] %vm3318, %v3293
        %3331 = vst.msk [vmem:[#allocation2 + $0x60] sm:$0xff] %vm3318, %v3295
        %3332 = vst.msk [vmem:[#allocation2 + $0x68] sm:$0xff] %vm3318, %v3297
        %3333 = vst.msk [vmem:[#allocation2 + $0x70] sm:$0xff] %vm3318, %v3299
        %3334 = vst.msk [vmem:[#allocation2 + $0x78] sm:$0xff] %vm3318, %v3301
        %v3335 = vld [vmem:[%s168 + $0x14] sm:$0x8]
        %v3336 = vld [vmem:[%s168 + $0x18] sm:$0xf]
        %v3337 = vld [vmem:[%s168 + $0x1c] sm:$0xf]
        %v3338 = vld [vmem:[%s168 + $0x20] sm:$0xf]
        %v3339 = vld [vmem:[%s168 + $0x24] sm:$0xf]
        %v3340 = vld [vmem:[%s168 + $0x28] sm:$0xf]
        %v3341 = vld [vmem:[%s168 + $0x2c] sm:$0xf]
        %v3342 = vld [vmem:[%s168 + $0x30] sm:$0xf]
        %v3343 = vld [vmem:[%s168 + $0x34] sm:$0xf]
        %v3344 = vld [vmem:[%s168 + $0x38] sm:$0xf]
        %v3345 = vld [vmem:[%s168 + $0x3c] sm:$0xf]
        %v3346 = vld [vmem:[%s168 + $0x40] sm:$0xf]
        %v3347 = vld [vmem:[%s168 + $0x44] sm:$0xf]
        %v3348 = vld [vmem:[%s168 + $0x48] sm:$0xf]
        %v3349 = vld [vmem:[%s168 + $0x4c] sm:$0xf]
        %v3350 = vld [vmem:[%s168 + $0x50] sm:$0xf]
        %v3351 = vld [vmem:[%s168 + $0x54] sm:$0xf]
        %v3352 = vld [vmem:[%s168 + $0x58] sm:$0xf]
        %v3353 = vld [vmem:[%s168 + $0x5c] sm:$0xf]
        %v3354 = vld [vmem:[%s168 + $0x60] sm:$0xf]
        %v3355 = vld [vmem:[%s168 + $0x64] sm:$0xf]
        %v3356 = vld [vmem:[%s168 + $0x68] sm:$0xf]
        %v3357 = vld [vmem:[%s168 + $0x6c] sm:$0xf]
        %v3358 = vld [vmem:[%s168 + $0x70] sm:$0xf]
        %v3359 = vld [vmem:[%s168 + $0x74] sm:$0xf]
        %v3360 = vld [vmem:[%s168 + $0x78] sm:$0xf]
        %v3361 = vld [vmem:[%s168 + $0x7c] sm:$0xf]
        %v3362 = vld [vmem:[%s168 + $0x80] sm:$0xf]
        %v3363 = vld [vmem:[%s168 + $0x84] sm:$0xf]
        %v3364 = vld [vmem:[%s168 + $0x88] sm:$0xf]
        %v3365 = vld [vmem:[%s168 + $0x8c] sm:$0xf]
        %v3366 = vld [vmem:[%s168 + $0x90] sm:$0xf]
        %v3367 = vld [vmem:[%s168 + $0x94] sm:$0xf]
        %v3368 = vsel %vm1104, %v3335, 0
        %v3369 = vsel %vm1105, %v3336, 0
        %v3370 = vsel %vm1106, %v3337, 0
        %v3371 = vsel %vm1107, %v3338, 0
        %v3372 = vsel %vm1108, %v3339, 0
        %v3373 = vsel %vm1109, %v3340, 0
        %v3374 = vsel %vm1110, %v3341, 0
        %v3375 = vsel %vm1111, %v3342, 0
        %v3376 = vsel %vm1112, %v3343, 0
        %v3377 = vsel %vm1113, %v3344, 0
        %v3378 = vsel %vm1114, %v3345, 0
        %v3379 = vsel %vm1115, %v3346, 0
        %v3380 = vsel %vm1116, %v3347, 0
        %v3381 = vsel %vm1117, %v3348, 0
        %v3382 = vsel %vm1118, %v3349, 0
        %v3383 = vsel %vm1119, %v3350, 0
        %v3384 = vsel %vm1120, %v3351, 0
        %v3385 = vsel %vm1121, %v3352, 0
        %v3386 = vsel %vm1122, %v3353, 0
        %v3387 = vsel %vm1123, %v3354, 0
        %v3388 = vsel %vm1124, %v3355, 0
        %v3389 = vsel %vm1125, %v3356, 0
        %v3390 = vsel %vm1126, %v3357, 0
        %v3391 = vsel %vm1127, %v3358, 0
        %v3392 = vsel %vm1128, %v3359, 0
        %v3393 = vsel %vm1129, %v3360, 0
        %v3394 = vsel %vm1130, %v3361, 0
        %v3395 = vsel %vm1131, %v3362, 0
        %v3396 = vsel %vm1132, %v3363, 0
        %v3397 = vsel %vm1133, %v3364, 0
        %v3398 = vsel %vm1134, %v3365, 0
        %v3399 = vsel %vm1135, %v3366, 0
        %v3400 = vsel %vm1136, %v3367, 0
        %v3434 = vunpack.c.l.b16 %v3368
        %v3435 = vunpack.c.l.b16 %v3369
        %v3436 = vunpack.c.l.b16 %v3370
        %v3437 = vunpack.c.l.b16 %v3371
        %v3438 = vunpack.c.l.b16 %v3372
        %v3439 = vunpack.c.l.b16 %v3373
        %v3440 = vunpack.c.l.b16 %v3374
        %v3441 = vunpack.c.l.b16 %v3375
        %v3442 = vunpack.c.l.b16 %v3376
        %v3443 = vunpack.c.l.b16 %v3377
        %v3444 = vunpack.c.l.b16 %v3378
        %v3445 = vunpack.c.l.b16 %v3379
        %v3446 = vunpack.c.l.b16 %v3380
        %v3447 = vunpack.c.l.b16 %v3381
        %v3448 = vunpack.c.l.b16 %v3382
        %v3449 = vunpack.c.l.b16 %v3383
        %v3450 = vunpack.c.l.b16 %v3384
        %v3451 = vunpack.c.l.b16 %v3385
        %v3452 = vunpack.c.l.b16 %v3386
        %v3453 = vunpack.c.l.b16 %v3387
        %v3454 = vunpack.c.l.b16 %v3388
        %v3455 = vunpack.c.l.b16 %v3389
        %v3456 = vunpack.c.l.b16 %v3390
        %v3457 = vunpack.c.l.b16 %v3391
        %v3458 = vunpack.c.l.b16 %v3392
        %v3459 = vunpack.c.l.b16 %v3393
        %v3460 = vunpack.c.l.b16 %v3394
        %v3461 = vunpack.c.l.b16 %v3395
        %v3462 = vunpack.c.l.b16 %v3396
        %v3463 = vunpack.c.l.b16 %v3397
        %v3464 = vunpack.c.l.b16 %v3398
        %v3465 = vunpack.c.l.b16 %v3399
        %v3466 = vunpack.c.l.b16 %v3400
        %v3467 = vpack.c.b16 %v3435, %v3434
        %v3468 = vpack.c.b16 %v3437, %v3436
        %v3469 = vpack.c.b16 %v3439, %v3438
        %v3470 = vpack.c.b16 %v3441, %v3440
        %v3471 = vpack.c.b16 %v3443, %v3442
        %v3472 = vpack.c.b16 %v3445, %v3444
        %v3473 = vpack.c.b16 %v3447, %v3446
        %v3474 = vpack.c.b16 %v3449, %v3448
        %v3475 = vpack.c.b16 %v3451, %v3450
        %v3476 = vpack.c.b16 %v3453, %v3452
        %v3477 = vpack.c.b16 %v3455, %v3454
        %v3478 = vpack.c.b16 %v3457, %v3456
        %v3479 = vpack.c.b16 %v3459, %v3458
        %v3480 = vpack.c.b16 %v3461, %v3460
        %v3481 = vpack.c.b16 %v3463, %v3462
        %v3482 = vpack.c.b16 %v3465, %v3464
        %v3483 = vpack.c.b16 %v3466, %v3466
        %v3485 = vshrl.u32 %v3467, 16
        %v3487 = vrot.slane %v3485, 3
        %v3488 = vshll.u32 %v3467, 16
        %v3490 = vrot.slane %v3488, 4
        %v3491 = vor.u32 %v3487, %v3490
        %v3493 = vshrl.u32 %v3468, 16
        %v3495 = vrot.slane %v3493, 3
        %v3496 = vshll.u32 %v3468, 16
        %v3498 = vrot.slane %v3496, 4
        %v3499 = vor.u32 %v3495, %v3498
        %v3500 = vsel %vm1253, %v3491, %v3499
        %v3502 = vshrl.u32 %v3469, 16
        %v3504 = vrot.slane %v3502, 3
        %v3505 = vshll.u32 %v3469, 16
        %v3507 = vrot.slane %v3505, 4
        %v3508 = vor.u32 %v3504, %v3507
        %v3509 = vsel %vm1253, %v3499, %v3508
        %v3511 = vshrl.u32 %v3470, 16
        %v3513 = vrot.slane %v3511, 3
        %v3514 = vshll.u32 %v3470, 16
        %v3516 = vrot.slane %v3514, 4
        %v3517 = vor.u32 %v3513, %v3516
        %v3518 = vsel %vm1253, %v3508, %v3517
        %v3520 = vshrl.u32 %v3471, 16
        %v3522 = vrot.slane %v3520, 3
        %v3523 = vshll.u32 %v3471, 16
        %v3525 = vrot.slane %v3523, 4
        %v3526 = vor.u32 %v3522, %v3525
        %v3527 = vsel %vm1253, %v3517, %v3526
        %v3529 = vshrl.u32 %v3472, 16
        %v3531 = vrot.slane %v3529, 3
        %v3532 = vshll.u32 %v3472, 16
        %v3534 = vrot.slane %v3532, 4
        %v3535 = vor.u32 %v3531, %v3534
        %v3536 = vsel %vm1253, %v3526, %v3535
        %v3538 = vshrl.u32 %v3473, 16
        %v3540 = vrot.slane %v3538, 3
        %v3541 = vshll.u32 %v3473, 16
        %v3543 = vrot.slane %v3541, 4
        %v3544 = vor.u32 %v3540, %v3543
        %v3545 = vsel %vm1253, %v3535, %v3544
        %v3547 = vshrl.u32 %v3474, 16
        %v3549 = vrot.slane %v3547, 3
        %v3550 = vshll.u32 %v3474, 16
        %v3552 = vrot.slane %v3550, 4
        %v3553 = vor.u32 %v3549, %v3552
        %v3554 = vsel %vm1253, %v3544, %v3553
        %v3556 = vshrl.u32 %v3475, 16
        %v3558 = vrot.slane %v3556, 3
        %v3559 = vshll.u32 %v3475, 16
        %v3561 = vrot.slane %v3559, 4
        %v3562 = vor.u32 %v3558, %v3561
        %v3563 = vsel %vm1253, %v3553, %v3562
        %v3565 = vshrl.u32 %v3476, 16
        %v3567 = vrot.slane %v3565, 3
        %v3568 = vshll.u32 %v3476, 16
        %v3570 = vrot.slane %v3568, 4
        %v3571 = vor.u32 %v3567, %v3570
        %v3572 = vsel %vm1253, %v3562, %v3571
        %v3574 = vshrl.u32 %v3477, 16
        %v3576 = vrot.slane %v3574, 3
        %v3577 = vshll.u32 %v3477, 16
        %v3579 = vrot.slane %v3577, 4
        %v3580 = vor.u32 %v3576, %v3579
        %v3581 = vsel %vm1253, %v3571, %v3580
        %v3583 = vshrl.u32 %v3478, 16
        %v3585 = vrot.slane %v3583, 3
        %v3586 = vshll.u32 %v3478, 16
        %v3588 = vrot.slane %v3586, 4
        %v3589 = vor.u32 %v3585, %v3588
        %v3590 = vsel %vm1253, %v3580, %v3589
        %v3592 = vshrl.u32 %v3479, 16
        %v3594 = vrot.slane %v3592, 3
        %v3595 = vshll.u32 %v3479, 16
        %v3597 = vrot.slane %v3595, 4
        %v3598 = vor.u32 %v3594, %v3597
        %v3599 = vsel %vm1253, %v3589, %v3598
        %v3601 = vshrl.u32 %v3480, 16
        %v3603 = vrot.slane %v3601, 3
        %v3604 = vshll.u32 %v3480, 16
        %v3606 = vrot.slane %v3604, 4
        %v3607 = vor.u32 %v3603, %v3606
        %v3608 = vsel %vm1253, %v3598, %v3607
        %v3610 = vshrl.u32 %v3481, 16
        %v3612 = vrot.slane %v3610, 3
        %v3613 = vshll.u32 %v3481, 16
        %v3615 = vrot.slane %v3613, 4
        %v3616 = vor.u32 %v3612, %v3615
        %v3617 = vsel %vm1253, %v3607, %v3616
        %v3619 = vshrl.u32 %v3482, 16
        %v3621 = vrot.slane %v3619, 3
        %v3622 = vshll.u32 %v3482, 16
        %v3624 = vrot.slane %v3622, 4
        %v3625 = vor.u32 %v3621, %v3624
        %v3626 = vsel %vm1253, %v3616, %v3625
        %v3628 = vshrl.u32 %v3483, 16
        %v3630 = vrot.slane %v3628, 3
        %v3631 = vshll.u32 %v3483, 16
        %v3633 = vrot.slane %v3631, 4
        %v3634 = vor.u32 %v3630, %v3633
        %v3635 = vsel %vm1253, %v3625, %v3634
        %3636 = vrot.lane.b32.xlu0 %v3500, 24
        %v3637 = vpop.permute.xlu0 %3636
        %3638 = vrot.lane.b32.xlu0 %v3509, 24
        %v3639 = vpop.permute.xlu0 %3638
        %3640 = vrot.lane.b32.xlu0 %v3518, 24
        %v3641 = vpop.permute.xlu0 %3640
        %3642 = vrot.lane.b32.xlu0 %v3527, 24
        %v3643 = vpop.permute.xlu0 %3642
        %3644 = vrot.lane.b32.xlu0 %v3536, 24
        %v3645 = vpop.permute.xlu0 %3644
        %3646 = vrot.lane.b32.xlu0 %v3545, 24
        %v3647 = vpop.permute.xlu0 %3646
        %3648 = vrot.lane.b32.xlu0 %v3554, 24
        %v3649 = vpop.permute.xlu0 %3648
        %3650 = vrot.lane.b32.xlu0 %v3563, 24
        %v3651 = vpop.permute.xlu0 %3650
        %3652 = vrot.lane.b32.xlu0 %v3572, 24
        %v3653 = vpop.permute.xlu0 %3652
        %3654 = vrot.lane.b32.xlu0 %v3581, 24
        %v3655 = vpop.permute.xlu0 %3654
        %3656 = vrot.lane.b32.xlu0 %v3590, 24
        %v3657 = vpop.permute.xlu0 %3656
        %3658 = vrot.lane.b32.xlu0 %v3599, 24
        %v3659 = vpop.permute.xlu0 %3658
        %3660 = vrot.lane.b32.xlu0 %v3608, 24
        %v3661 = vpop.permute.xlu0 %3660
        %3662 = vrot.lane.b32.xlu0 %v3617, 24
        %v3663 = vpop.permute.xlu0 %3662
        %3664 = vrot.lane.b32.xlu0 %v3626, 24
        %v3665 = vpop.permute.xlu0 %3664
        %3666 = vrot.lane.b32.xlu0 %v3635, 24
        %v3667 = vpop.permute.xlu0 %3666
        %vm3684 = vcmask 228544
        %3685 = vst.msk [vmem:[#allocation2] sm:$0xff] %vm3684, %v3637
        %3686 = vst.msk [vmem:[#allocation2 + $0x8] sm:$0xff] %vm3684, %v3639
        %3687 = vst.msk [vmem:[#allocation2 + $0x10] sm:$0xff] %vm3684, %v3641
        %3688 = vst.msk [vmem:[#allocation2 + $0x18] sm:$0xff] %vm3684, %v3643
        %3689 = vst.msk [vmem:[#allocation2 + $0x20] sm:$0xff] %vm3684, %v3645
        %3690 = vst.msk [vmem:[#allocation2 + $0x28] sm:$0xff] %vm3684, %v3647
        %3691 = vst.msk [vmem:[#allocation2 + $0x30] sm:$0xff] %vm3684, %v3649
        %3692 = vst.msk [vmem:[#allocation2 + $0x38] sm:$0xff] %vm3684, %v3651
        %3693 = vst.msk [vmem:[#allocation2 + $0x40] sm:$0xff] %vm3684, %v3653
        %3694 = vst.msk [vmem:[#allocation2 + $0x48] sm:$0xff] %vm3684, %v3655
        %3695 = vst.msk [vmem:[#allocation2 + $0x50] sm:$0xff] %vm3684, %v3657
        %3696 = vst.msk [vmem:[#allocation2 + $0x58] sm:$0xff] %vm3684, %v3659
        %3697 = vst.msk [vmem:[#allocation2 + $0x60] sm:$0xff] %vm3684, %v3661
        %3698 = vst.msk [vmem:[#allocation2 + $0x68] sm:$0xff] %vm3684, %v3663
        %3699 = vst.msk [vmem:[#allocation2 + $0x70] sm:$0xff] %vm3684, %v3665
        %3700 = vst.msk [vmem:[#allocation2 + $0x78] sm:$0xff] %vm3684, %v3667
        %v3701 = vld [vmem:[%s168 + $0x18] sm:$0xf]
        %v3702 = vld [vmem:[%s168 + $0x1c] sm:$0xf]
        %v3703 = vld [vmem:[%s168 + $0x20] sm:$0xf]
        %v3704 = vld [vmem:[%s168 + $0x24] sm:$0xf]
        %v3705 = vld [vmem:[%s168 + $0x28] sm:$0xf]
        %v3706 = vld [vmem:[%s168 + $0x2c] sm:$0xf]
        %v3707 = vld [vmem:[%s168 + $0x30] sm:$0xf]
        %v3708 = vld [vmem:[%s168 + $0x34] sm:$0xf]
        %v3709 = vld [vmem:[%s168 + $0x38] sm:$0xf]
        %v3710 = vld [vmem:[%s168 + $0x3c] sm:$0xf]
        %v3711 = vld [vmem:[%s168 + $0x40] sm:$0xf]
        %v3712 = vld [vmem:[%s168 + $0x44] sm:$0xf]
        %v3713 = vld [vmem:[%s168 + $0x48] sm:$0xf]
        %v3714 = vld [vmem:[%s168 + $0x4c] sm:$0xf]
        %v3715 = vld [vmem:[%s168 + $0x50] sm:$0xf]
        %v3716 = vld [vmem:[%s168 + $0x54] sm:$0xf]
        %v3717 = vld [vmem:[%s168 + $0x58] sm:$0xf]
        %v3718 = vld [vmem:[%s168 + $0x5c] sm:$0xf]
        %v3719 = vld [vmem:[%s168 + $0x60] sm:$0xf]
        %v3720 = vld [vmem:[%s168 + $0x64] sm:$0xf]
        %v3721 = vld [vmem:[%s168 + $0x68] sm:$0xf]
        %v3722 = vld [vmem:[%s168 + $0x6c] sm:$0xf]
        %v3723 = vld [vmem:[%s168 + $0x70] sm:$0xf]
        %v3724 = vld [vmem:[%s168 + $0x74] sm:$0xf]
        %v3725 = vld [vmem:[%s168 + $0x78] sm:$0xf]
        %v3726 = vld [vmem:[%s168 + $0x7c] sm:$0xf]
        %v3727 = vld [vmem:[%s168 + $0x80] sm:$0xf]
        %v3728 = vld [vmem:[%s168 + $0x84] sm:$0xf]
        %v3729 = vld [vmem:[%s168 + $0x88] sm:$0xf]
        %v3730 = vld [vmem:[%s168 + $0x8c] sm:$0xf]
        %v3731 = vld [vmem:[%s168 + $0x90] sm:$0xf]
        %v3732 = vld [vmem:[%s168 + $0x94] sm:$0xf]
        %v3765 = vunpack.c.l.b16 %v3701
        %v3766 = vunpack.c.l.b16 %v3702
        %v3767 = vunpack.c.l.b16 %v3703
        %v3768 = vunpack.c.l.b16 %v3704
        %v3769 = vunpack.c.l.b16 %v3705
        %v3770 = vunpack.c.l.b16 %v3706
        %v3771 = vunpack.c.l.b16 %v3707
        %v3772 = vunpack.c.l.b16 %v3708
        %v3773 = vunpack.c.l.b16 %v3709
        %v3774 = vunpack.c.l.b16 %v3710
        %v3775 = vunpack.c.l.b16 %v3711
        %v3776 = vunpack.c.l.b16 %v3712
        %v3777 = vunpack.c.l.b16 %v3713
        %v3778 = vunpack.c.l.b16 %v3714
        %v3779 = vunpack.c.l.b16 %v3715
        %v3780 = vunpack.c.l.b16 %v3716
        %v3781 = vunpack.c.l.b16 %v3717
        %v3782 = vunpack.c.l.b16 %v3718
        %v3783 = vunpack.c.l.b16 %v3719
        %v3784 = vunpack.c.l.b16 %v3720
        %v3785 = vunpack.c.l.b16 %v3721
        %v3786 = vunpack.c.l.b16 %v3722
        %v3787 = vunpack.c.l.b16 %v3723
        %v3788 = vunpack.c.l.b16 %v3724
        %v3789 = vunpack.c.l.b16 %v3725
        %v3790 = vunpack.c.l.b16 %v3726
        %v3791 = vunpack.c.l.b16 %v3727
        %v3792 = vunpack.c.l.b16 %v3728
        %v3793 = vunpack.c.l.b16 %v3729
        %v3794 = vunpack.c.l.b16 %v3730
        %v3795 = vunpack.c.l.b16 %v3731
        %v3796 = vunpack.c.l.b16 %v3732
        %v3797 = vpack.c.b16 %v3766, %v3765
        %v3798 = vpack.c.b16 %v3768, %v3767
        %v3799 = vpack.c.b16 %v3770, %v3769
        %v3800 = vpack.c.b16 %v3772, %v3771
        %v3801 = vpack.c.b16 %v3774, %v3773
        %v3802 = vpack.c.b16 %v3776, %v3775
        %v3803 = vpack.c.b16 %v3778, %v3777
        %v3804 = vpack.c.b16 %v3780, %v3779
        %v3805 = vpack.c.b16 %v3782, %v3781
        %v3806 = vpack.c.b16 %v3784, %v3783
        %v3807 = vpack.c.b16 %v3786, %v3785
        %v3808 = vpack.c.b16 %v3788, %v3787
        %v3809 = vpack.c.b16 %v3790, %v3789
        %v3810 = vpack.c.b16 %v3792, %v3791
        %v3811 = vpack.c.b16 %v3794, %v3793
        %v3812 = vpack.c.b16 %v3796, %v3795
        %3813 = vrot.lane.b32.xlu0 %v3797, 28
        %v3814 = vpop.permute.xlu0 %3813
        %3815 = vrot.lane.b32.xlu0 %v3798, 28
        %v3816 = vpop.permute.xlu0 %3815
        %3817 = vrot.lane.b32.xlu0 %v3799, 28
        %v3818 = vpop.permute.xlu0 %3817
        %3819 = vrot.lane.b32.xlu0 %v3800, 28
        %v3820 = vpop.permute.xlu0 %3819
        %3821 = vrot.lane.b32.xlu0 %v3801, 28
        %v3822 = vpop.permute.xlu0 %3821
        %3823 = vrot.lane.b32.xlu0 %v3802, 28
        %v3824 = vpop.permute.xlu0 %3823
        %3825 = vrot.lane.b32.xlu0 %v3803, 28
        %v3826 = vpop.permute.xlu0 %3825
        %3827 = vrot.lane.b32.xlu0 %v3804, 28
        %v3828 = vpop.permute.xlu0 %3827
        %3829 = vrot.lane.b32.xlu0 %v3805, 28
        %v3830 = vpop.permute.xlu0 %3829
        %3831 = vrot.lane.b32.xlu0 %v3806, 28
        %v3832 = vpop.permute.xlu0 %3831
        %3833 = vrot.lane.b32.xlu0 %v3807, 28
        %v3834 = vpop.permute.xlu0 %3833
        %3835 = vrot.lane.b32.xlu0 %v3808, 28
        %v3836 = vpop.permute.xlu0 %3835
        %3837 = vrot.lane.b32.xlu0 %v3809, 28
        %v3838 = vpop.permute.xlu0 %3837
        %3839 = vrot.lane.b32.xlu0 %v3810, 28
        %v3840 = vpop.permute.xlu0 %3839
        %3841 = vrot.lane.b32.xlu0 %v3811, 28
        %v3842 = vpop.permute.xlu0 %3841
        %3843 = vrot.lane.b32.xlu0 %v3812, 28
        %v3844 = vpop.permute.xlu0 %3843
        %vm3861 = vcmask 261344
        %3862 = vst.msk [vmem:[#allocation2] sm:$0xff] %vm3861, %v3814
        %3863 = vst.msk [vmem:[#allocation2 + $0x8] sm:$0xff] %vm3861, %v3816
        %3864 = vst.msk [vmem:[#allocation2 + $0x10] sm:$0xff] %vm3861, %v3818
        %3865 = vst.msk [vmem:[#allocation2 + $0x18] sm:$0xff] %vm3861, %v3820
        %3866 = vst.msk [vmem:[#allocation2 + $0x20] sm:$0xff] %vm3861, %v3822
        %3867 = vst.msk [vmem:[#allocation2 + $0x28] sm:$0xff] %vm3861, %v3824
        %3868 = vst.msk [vmem:[#allocation2 + $0x30] sm:$0xff] %vm3861, %v3826
        %3869 = vst.msk [vmem:[#allocation2 + $0x38] sm:$0xff] %vm3861, %v3828
        %3870 = vst.msk [vmem:[#allocation2 + $0x40] sm:$0xff] %vm3861, %v3830
        %3871 = vst.msk [vmem:[#allocation2 + $0x48] sm:$0xff] %vm3861, %v3832
        %3872 = vst.msk [vmem:[#allocation2 + $0x50] sm:$0xff] %vm3861, %v3834
        %3873 = vst.msk [vmem:[#allocation2 + $0x58] sm:$0xff] %vm3861, %v3836
        %3874 = vst.msk [vmem:[#allocation2 + $0x60] sm:$0xff] %vm3861, %v3838
        %3875 = vst.msk [vmem:[#allocation2 + $0x68] sm:$0xff] %vm3861, %v3840
        %3876 = vst.msk [vmem:[#allocation2 + $0x70] sm:$0xff] %vm3861, %v3842
        %3877 = vst.msk [vmem:[#allocation2 + $0x78] sm:$0xff] %vm3861, %v3844
        %v3878 = vld [vmem:[%s168 + $0x18] sm:$0xf]
        %v3879 = vld [vmem:[%s168 + $0x1c] sm:$0xf]
        %v3880 = vld [vmem:[%s168 + $0x20] sm:$0xf]
        %v3881 = vld [vmem:[%s168 + $0x24] sm:$0xf]
        %v3882 = vld [vmem:[%s168 + $0x28] sm:$0xf]
        %v3883 = vld [vmem:[%s168 + $0x2c] sm:$0xf]
        %v3884 = vld [vmem:[%s168 + $0x30] sm:$0xf]
        %v3885 = vld [vmem:[%s168 + $0x34] sm:$0xf]
        %v3886 = vld [vmem:[%s168 + $0x38] sm:$0xf]
        %v3887 = vld [vmem:[%s168 + $0x3c] sm:$0xf]
        %v3888 = vld [vmem:[%s168 + $0x40] sm:$0xf]
        %v3889 = vld [vmem:[%s168 + $0x44] sm:$0xf]
        %v3890 = vld [vmem:[%s168 + $0x48] sm:$0xf]
        %v3891 = vld [vmem:[%s168 + $0x4c] sm:$0xf]
        %v3892 = vld [vmem:[%s168 + $0x50] sm:$0xf]
        %v3893 = vld [vmem:[%s168 + $0x54] sm:$0xf]
        %v3894 = vld [vmem:[%s168 + $0x58] sm:$0xf]
        %v3895 = vld [vmem:[%s168 + $0x5c] sm:$0xf]
        %v3896 = vld [vmem:[%s168 + $0x60] sm:$0xf]
        %v3897 = vld [vmem:[%s168 + $0x64] sm:$0xf]
        %v3898 = vld [vmem:[%s168 + $0x68] sm:$0xf]
        %v3899 = vld [vmem:[%s168 + $0x6c] sm:$0xf]
        %v3900 = vld [vmem:[%s168 + $0x70] sm:$0xf]
        %v3901 = vld [vmem:[%s168 + $0x74] sm:$0xf]
        %v3902 = vld [vmem:[%s168 + $0x78] sm:$0xf]
        %v3903 = vld [vmem:[%s168 + $0x7c] sm:$0xf]
        %v3904 = vld [vmem:[%s168 + $0x80] sm:$0xf]
        %v3905 = vld [vmem:[%s168 + $0x84] sm:$0xf]
        %v3906 = vld [vmem:[%s168 + $0x88] sm:$0xf]
        %v3907 = vld [vmem:[%s168 + $0x8c] sm:$0xf]
        %v3908 = vld [vmem:[%s168 + $0x90] sm:$0xf]
        %v3909 = vld [vmem:[%s168 + $0x94] sm:$0xf]
        %v3910 = vld [vmem:[%s168 + $0x98] sm:$0x1]
        %v3911 = vsel %vm2099, %v3878, 0
        %v3912 = vsel %vm2100, %v3879, 0
        %v3913 = vsel %vm2101, %v3880, 0
        %v3914 = vsel %vm2102, %v3881, 0
        %v3915 = vsel %vm2103, %v3882, 0
        %v3916 = vsel %vm2104, %v3883, 0
        %v3917 = vsel %vm2105, %v3884, 0
        %v3918 = vsel %vm2106, %v3885, 0
        %v3919 = vsel %vm2107, %v3886, 0
        %v3920 = vsel %vm2108, %v3887, 0
        %v3921 = vsel %vm2109, %v3888, 0
        %v3922 = vsel %vm2110, %v3889, 0
        %v3923 = vsel %vm2111, %v3890, 0
        %v3924 = vsel %vm2112, %v3891, 0
        %v3925 = vsel %vm2113, %v3892, 0
        %v3926 = vsel %vm2114, %v3893, 0
        %v3927 = vsel %vm2115, %v3894, 0
        %v3928 = vsel %vm2116, %v3895, 0
        %v3929 = vsel %vm2117, %v3896, 0
        %v3930 = vsel %vm2118, %v3897, 0
        %v3931 = vsel %vm2119, %v3898, 0
        %v3932 = vsel %vm2120, %v3899, 0
        %v3933 = vsel %vm2121, %v3900, 0
        %v3934 = vsel %vm2122, %v3901, 0
        %v3935 = vsel %vm2123, %v3902, 0
        %v3936 = vsel %vm2124, %v3903, 0
        %v3937 = vsel %vm2125, %v3904, 0
        %v3938 = vsel %vm2126, %v3905, 0
        %v3939 = vsel %vm2127, %v3906, 0
        %v3940 = vsel %vm2128, %v3907, 0
        %v3941 = vsel %vm2129, %v3908, 0
        %v3942 = vsel %vm2130, %v3909, 0
        %v3943 = vsel %vm2131, %v3910, 0
        %v3977 = vunpack.c.l.b16 %v3911
        %v3978 = vunpack.c.l.b16 %v3912
        %v3979 = vunpack.c.l.b16 %v3913
        %v3980 = vunpack.c.l.b16 %v3914
        %v3981 = vunpack.c.l.b16 %v3915
        %v3982 = vunpack.c.l.b16 %v3916
        %v3983 = vunpack.c.l.b16 %v3917
        %v3984 = vunpack.c.l.b16 %v3918
        %v3985 = vunpack.c.l.b16 %v3919
        %v3986 = vunpack.c.l.b16 %v3920
        %v3987 = vunpack.c.l.b16 %v3921
        %v3988 = vunpack.c.l.b16 %v3922
        %v3989 = vunpack.c.l.b16 %v3923
        %v3990 = vunpack.c.l.b16 %v3924
        %v3991 = vunpack.c.l.b16 %v3925
        %v3992 = vunpack.c.l.b16 %v3926
        %v3993 = vunpack.c.l.b16 %v3927
        %v3994 = vunpack.c.l.b16 %v3928
        %v3995 = vunpack.c.l.b16 %v3929
        %v3996 = vunpack.c.l.b16 %v3930
        %v3997 = vunpack.c.l.b16 %v3931
        %v3998 = vunpack.c.l.b16 %v3932
        %v3999 = vunpack.c.l.b16 %v3933
        %v4000 = vunpack.c.l.b16 %v3934
        %v4001 = vunpack.c.l.b16 %v3935
        %v4002 = vunpack.c.l.b16 %v3936
        %v4003 = vunpack.c.l.b16 %v3937
        %v4004 = vunpack.c.l.b16 %v3938
        %v4005 = vunpack.c.l.b16 %v3939
        %v4006 = vunpack.c.l.b16 %v3940
        %v4007 = vunpack.c.l.b16 %v3941
        %v4008 = vunpack.c.l.b16 %v3942
        %v4009 = vunpack.c.l.b16 %v3943
        %v4010 = vpack.c.b16 %v3978, %v3977
        %v4011 = vpack.c.b16 %v3980, %v3979
        %v4012 = vpack.c.b16 %v3982, %v3981
        %v4013 = vpack.c.b16 %v3984, %v3983
        %v4014 = vpack.c.b16 %v3986, %v3985
        %v4015 = vpack.c.b16 %v3988, %v3987
        %v4016 = vpack.c.b16 %v3990, %v3989
        %v4017 = vpack.c.b16 %v3992, %v3991
        %v4018 = vpack.c.b16 %v3994, %v3993
        %v4019 = vpack.c.b16 %v3996, %v3995
        %v4020 = vpack.c.b16 %v3998, %v3997
        %v4021 = vpack.c.b16 %v4000, %v3999
        %v4022 = vpack.c.b16 %v4002, %v4001
        %v4023 = vpack.c.b16 %v4004, %v4003
        %v4024 = vpack.c.b16 %v4006, %v4005
        %v4025 = vpack.c.b16 %v4008, %v4007
        %v4026 = vpack.c.b16 %v4009, %v4009
        %v4028 = vshrl.u32 %v4010, 16
        %v4030 = vshll.u32 %v4010, 16
        %v4032 = vrot.slane %v4030, 1
        %v4033 = vor.u32 %v4028, %v4032
        %v4035 = vshll.u32 %v4011, 16
        %v4037 = vrot.slane %v4035, 1
        %v4038 = vsel %vm2248, %v4033, %v4037
        %v4039 = vshrl.u32 %v4011, 16
        %v4041 = vor.u32 %v4039, %v4037
        %v4043 = vshll.u32 %v4012, 16
        %v4045 = vrot.slane %v4043, 1
        %v4046 = vsel %vm2248, %v4041, %v4045
        %v4047 = vshrl.u32 %v4012, 16
        %v4049 = vor.u32 %v4047, %v4045
        %v4051 = vshll.u32 %v4013, 16
        %v4053 = vrot.slane %v4051, 1
        %v4054 = vsel %vm2248, %v4049, %v4053
        %v4055 = vshrl.u32 %v4013, 16
        %v4057 = vor.u32 %v4055, %v4053
        %v4059 = vshll.u32 %v4014, 16
        %v4061 = vrot.slane %v4059, 1
        %v4062 = vsel %vm2248, %v4057, %v4061
        %v4063 = vshrl.u32 %v4014, 16
        %v4065 = vor.u32 %v4063, %v4061
        %v4067 = vshll.u32 %v4015, 16
        %v4069 = vrot.slane %v4067, 1
        %v4070 = vsel %vm2248, %v4065, %v4069
        %v4071 = vshrl.u32 %v4015, 16
        %v4073 = vor.u32 %v4071, %v4069
        %v4075 = vshll.u32 %v4016, 16
        %v4077 = vrot.slane %v4075, 1
        %v4078 = vsel %vm2248, %v4073, %v4077
        %v4079 = vshrl.u32 %v4016, 16
        %v4081 = vor.u32 %v4079, %v4077
        %v4083 = vshll.u32 %v4017, 16
        %v4085 = vrot.slane %v4083, 1
        %v4086 = vsel %vm2248, %v4081, %v4085
        %v4087 = vshrl.u32 %v4017, 16
        %v4089 = vor.u32 %v4087, %v4085
        %v4091 = vshll.u32 %v4018, 16
        %v4093 = vrot.slane %v4091, 1
        %v4094 = vsel %vm2248, %v4089, %v4093
        %v4095 = vshrl.u32 %v4018, 16
        %v4097 = vor.u32 %v4095, %v4093
        %v4099 = vshll.u32 %v4019, 16
        %v4101 = vrot.slane %v4099, 1
        %v4102 = vsel %vm2248, %v4097, %v4101
        %v4103 = vshrl.u32 %v4019, 16
        %v4105 = vor.u32 %v4103, %v4101
        %v4107 = vshll.u32 %v4020, 16
        %v4109 = vrot.slane %v4107, 1
        %v4110 = vsel %vm2248, %v4105, %v4109
        %v4111 = vshrl.u32 %v4020, 16
        %v4113 = vor.u32 %v4111, %v4109
        %v4115 = vshll.u32 %v4021, 16
        %v4117 = vrot.slane %v4115, 1
        %v4118 = vsel %vm2248, %v4113, %v4117
        %v4119 = vshrl.u32 %v4021, 16
        %v4121 = vor.u32 %v4119, %v4117
        %v4123 = vshll.u32 %v4022, 16
        %v4125 = vrot.slane %v4123, 1
        %v4126 = vsel %vm2248, %v4121, %v4125
        %v4127 = vshrl.u32 %v4022, 16
        %v4129 = vor.u32 %v4127, %v4125
        %v4131 = vshll.u32 %v4023, 16
        %v4133 = vrot.slane %v4131, 1
        %v4134 = vsel %vm2248, %v4129, %v4133
        %v4135 = vshrl.u32 %v4023, 16
        %v4137 = vor.u32 %v4135, %v4133
        %v4139 = vshll.u32 %v4024, 16
        %v4141 = vrot.slane %v4139, 1
        %v4142 = vsel %vm2248, %v4137, %v4141
        %v4143 = vshrl.u32 %v4024, 16
        %v4145 = vor.u32 %v4143, %v4141
        %v4147 = vshll.u32 %v4025, 16
        %v4149 = vrot.slane %v4147, 1
        %v4150 = vsel %vm2248, %v4145, %v4149
        %v4151 = vshrl.u32 %v4025, 16
        %v4153 = vor.u32 %v4151, %v4149
        %v4155 = vshll.u32 %v4026, 16
        %v4157 = vrot.slane %v4155, 1
        %v4158 = vsel %vm2248, %v4153, %v4157
        %4159 = vrot.lane.b32.xlu0 %v4038, 32
        %v4160 = vpop.permute.xlu0 %4159
        %4161 = vrot.lane.b32.xlu0 %v4046, 32
        %v4162 = vpop.permute.xlu0 %4161
        %4163 = vrot.lane.b32.xlu0 %v4054, 32
        %v4164 = vpop.permute.xlu0 %4163
        %4165 = vrot.lane.b32.xlu0 %v4062, 32
        %v4166 = vpop.permute.xlu0 %4165
        %4167 = vrot.lane.b32.xlu0 %v4070, 32
        %v4168 = vpop.permute.xlu0 %4167
        %4169 = vrot.lane.b32.xlu0 %v4078, 32
        %v4170 = vpop.permute.xlu0 %4169
        %4171 = vrot.lane.b32.xlu0 %v4086, 32
        %v4172 = vpop.permute.xlu0 %4171
        %4173 = vrot.lane.b32.xlu0 %v4094, 32
        %v4174 = vpop.permute.xlu0 %4173
        %4175 = vrot.lane.b32.xlu0 %v4102, 32
        %v4176 = vpop.permute.xlu0 %4175
        %4177 = vrot.lane.b32.xlu0 %v4110, 32
        %v4178 = vpop.permute.xlu0 %4177
        %4179 = vrot.lane.b32.xlu0 %v4118, 32
        %v4180 = vpop.permute.xlu0 %4179
        %4181 = vrot.lane.b32.xlu0 %v4126, 32
        %v4182 = vpop.permute.xlu0 %4181
        %4183 = vrot.lane.b32.xlu0 %v4134, 32
        %v4184 = vpop.permute.xlu0 %4183
        %4185 = vrot.lane.b32.xlu0 %v4142, 32
        %v4186 = vpop.permute.xlu0 %4185
        %4187 = vrot.lane.b32.xlu0 %v4150, 32
        %v4188 = vpop.permute.xlu0 %4187
        %4189 = vrot.lane.b32.xlu0 %v4158, 32
        %v4190 = vpop.permute.xlu0 %4189
        %vm4207 = vcmask 294144
        %4208 = vst.msk [vmem:[#allocation2] sm:$0xff] %vm4207, %v4160
        %4209 = vst.msk [vmem:[#allocation2 + $0x8] sm:$0xff] %vm4207, %v4162
        %4210 = vst.msk [vmem:[#allocation2 + $0x10] sm:$0xff] %vm4207, %v4164
        %4211 = vst.msk [vmem:[#allocation2 + $0x18] sm:$0xff] %vm4207, %v4166
        %4212 = vst.msk [vmem:[#allocation2 + $0x20] sm:$0xff] %vm4207, %v4168
        %4213 = vst.msk [vmem:[#allocation2 + $0x28] sm:$0xff] %vm4207, %v4170
        %4214 = vst.msk [vmem:[#allocation2 + $0x30] sm:$0xff] %vm4207, %v4172
        %4215 = vst.msk [vmem:[#allocation2 + $0x38] sm:$0xff] %vm4207, %v4174
        %4216 = vst.msk [vmem:[#allocation2 + $0x40] sm:$0xff] %vm4207, %v4176
        %4217 = vst.msk [vmem:[#allocation2 + $0x48] sm:$0xff] %vm4207, %v4178
        %4218 = vst.msk [vmem:[#allocation2 + $0x50] sm:$0xff] %vm4207, %v4180
        %4219 = vst.msk [vmem:[#allocation2 + $0x58] sm:$0xff] %vm4207, %v4182
        %4220 = vst.msk [vmem:[#allocation2 + $0x60] sm:$0xff] %vm4207, %v4184
        %4221 = vst.msk [vmem:[#allocation2 + $0x68] sm:$0xff] %vm4207, %v4186
        %4222 = vst.msk [vmem:[#allocation2 + $0x70] sm:$0xff] %vm4207, %v4188
        %4223 = vst.msk [vmem:[#allocation2 + $0x78] sm:$0xff] %vm4207, %v4190
        %v4224 = vld [vmem:[#allocation2] sm:$0xff]
        %v4225 = vld [vmem:[#allocation2 + $0x8] sm:$0xff]
        %v4226 = vld [vmem:[#allocation2 + $0x10] sm:$0xff]
        %v4227 = vld [vmem:[#allocation2 + $0x18] sm:$0xff]
        %v4228 = vld [vmem:[#allocation2 + $0x20] sm:$0xff]
        %v4229 = vld [vmem:[#allocation2 + $0x28] sm:$0xff]
        %v4230 = vld [vmem:[#allocation2 + $0x30] sm:$0xff]
        %v4231 = vld [vmem:[#allocation2 + $0x38] sm:$0xff]
        %v4232 = vld [vmem:[#allocation2 + $0x40] sm:$0xff]
        %v4233 = vld [vmem:[#allocation2 + $0x48] sm:$0xff]
        %v4234 = vld [vmem:[#allocation2 + $0x50] sm:$0xff]
        %v4235 = vld [vmem:[#allocation2 + $0x58] sm:$0xff]
        %v4236 = vld [vmem:[#allocation2 + $0x60] sm:$0xff]
        %v4237 = vld [vmem:[#allocation2 + $0x68] sm:$0xff]
        %v4238 = vld [vmem:[#allocation2 + $0x70] sm:$0xff]
        %v4239 = vld [vmem:[#allocation2 + $0x78] sm:$0xff]
        %v4240 = vld [vmem:[%s1] sm:$0xf]
        %v4241 = vld [vmem:[%s1 + $0x4] sm:$0xf]
        %v4242 = vld [vmem:[%s1 + $0x8] sm:$0xf]
        %v4243 = vld [vmem:[%s1 + $0xc] sm:$0xf]
        %v4244 = vld [vmem:[%s1 + $0x10] sm:$0x3]
        %v4245 = vld [vmem:[%s2] sm:$0x1]
        %v4247 = vlaneseq
        %v4248 = vshrl.u32 %v4247, 7
        %v4249 = vsub.s32 0, %v4248
        %v4250 = vrot.slane %v4245, %v4249
        %v4257 = vunpack.c.l.b16 %v4240
        %v4258 = vunpack.c.l.b16 %v4241
        %v4259 = vunpack.c.l.b16 %v4242
        %v4260 = vunpack.c.l.b16 %v4243
        %v4261 = vunpack.c.l.b16 %v4244
        %v4262 = vpack.c.b16 %v4258, %v4257
        %v4263 = vpack.c.b16 %v4260, %v4259
        %v4264 = vpack.c.b16 %v4261, %v4261
        %vm4267 = vcmask 293888
        %v4269 = vsel %vm4267, %v4224, 0
        %v4272 = vsel %vm4267, %v4225, 0
        %v4275 = vsel %vm4267, %v4226, 0
        %v4278 = vsel %vm4267, %v4227, 0
        %v4281 = vsel %vm4267, %v4228, 0
        %v4284 = vsel %vm4267, %v4229, 0
        %v4287 = vsel %vm4267, %v4230, 0
        %v4290 = vsel %vm4267, %v4231, 0
        %v4293 = vsel %vm4267, %v4232, 0
        %v4296 = vsel %vm4267, %v4233, 0
        %v4299 = vsel %vm4267, %v4234, 0
        %v4302 = vsel %vm4267, %v4235, 0
        %v4305 = vsel %vm4267, %v4236, 0
        %v4308 = vsel %vm4267, %v4237, 0
        %v4311 = vsel %vm4267, %v4238, 0
        %v4314 = vsel %vm4267, %v4239, 0
        %vm4316 = vcmask 1041408
        %v4318 = vsel %vm4316, %v4264, 0
        %4320 = vmatprep.subr.bf16.mxu0 0
        %4321 = vmatpush1.bf16.msra.mxu0 %v4262
        %4322 = vmatprep.subr.bf16.mxu0 0
        %4323 = vmatpush1.bf16.msra.mxu0 %v4263
        %4324 = vmatprep.subr.bf16.mxu0 0
        %4325 = vmatpush1.bf16.msra.mxu0 %v4318
        %4326 = vmatprep.subr.bf16.mxu0 0
        %4327 = vmatpush1.bf16.msra.mxu0 0
        %4328 = vmatprep.subr.bf16.mxu0 0
        %4329 = vmatpush1.bf16.msra.mxu0 0
        %4330 = vmatprep.subr.bf16.mxu0 0
        %4331 = vmatpush1.bf16.msra.mxu0 0
        %4332 = vmatprep.subr.bf16.mxu0 0
        %4333 = vmatpush1.bf16.msra.mxu0 0
        %4334 = vmatprep.subr.bf16.mxu0 0
        %4335 = vmatpush1.bf16.msra.mxu0 0
        %4336 = vmatprep.subr.bf16.mxu0 0
        %4337 = vmatpush1.bf16.msra.mxu0 0
        %4338 = vmatprep.subr.bf16.mxu0 0
        %4339 = vmatpush1.bf16.msra.mxu0 0
        %4340 = vmatprep.subr.bf16.mxu0 0
        %4341 = vmatpush1.bf16.msra.mxu0 0
        %4342 = vmatprep.subr.bf16.mxu0 0
        %4343 = vmatpush1.bf16.msra.mxu0 0
        %4344 = vmatprep.subr.bf16.mxu0 0
        %4345 = vmatpush1.bf16.msra.mxu0 0
        %4346 = vmatprep.subr.bf16.mxu0 0
        %4347 = vmatpush1.bf16.msra.mxu0 0
        %4348 = vmatprep.subr.bf16.mxu0 0
        %4349 = vmatpush1.bf16.msra.mxu0 0
        %4350 = vmatprep.subr.bf16.mxu0 0
        %4351 = vmatpush1.bf16.msra.mxu0 0
        %4352 = vmatprep.mubr.bf16.mxu0 0
        %4353 = vmatmul.mubr.bf16.gmra.mrb[0].mxu0 %v4269
        %v4354 = vpop.f32.mrb[0].mxu0
        %v4355 = vadd.f32 %v4250, %v4354
        %v4356 = vpop.f32.mrb[0].mxu0
        %v4357 = vpop.f32.mrb[0].mxu0
        %v4358 = vadd.f32 %v4250, %v4357
        %v4359 = vpop.f32.mrb[0].mxu0
        %4360 = vmatprep.mubr.bf16.mxu0 0
        %4361 = vmatmul.mubr.bf16.gmra.mrb[0].mxu0 %v4272
        %v4362 = vpop.f32.mrb[0].mxu0
        %v4363 = vadd.f32 %v4250, %v4362
        %v4364 = vpop.f32.mrb[0].mxu0
        %v4365 = vpop.f32.mrb[0].mxu0
        %v4366 = vadd.f32 %v4250, %v4365
        %v4367 = vpop.f32.mrb[0].mxu0
        %4368 = vmatprep.mubr.bf16.mxu0 0
        %4369 = vmatmul.mubr.bf16.gmra.mrb[0].mxu0 %v4275
        %v4370 = vpop.f32.mrb[0].mxu0
        %v4371 = vadd.f32 %v4250, %v4370
        %v4372 = vpop.f32.mrb[0].mxu0
        %v4373 = vpop.f32.mrb[0].mxu0
        %v4374 = vadd.f32 %v4250, %v4373
        %v4375 = vpop.f32.mrb[0].mxu0
        %4376 = vmatprep.mubr.bf16.mxu0 0
        %4377 = vmatmul.mubr.bf16.gmra.mrb[0].mxu0 %v4278
        %v4378 = vpop.f32.mrb[0].mxu0
        %v4379 = vadd.f32 %v4250, %v4378
        %v4380 = vpop.f32.mrb[0].mxu0
        %v4381 = vpop.f32.mrb[0].mxu0
        %v4382 = vadd.f32 %v4250, %v4381
        %v4383 = vpop.f32.mrb[0].mxu0
        %4384 = vmatprep.mubr.bf16.mxu0 0
        %4385 = vmatmul.mubr.bf16.gmra.mrb[0].mxu0 %v4281
        %v4386 = vpop.f32.mrb[0].mxu0
        %v4387 = vadd.f32 %v4250, %v4386
        %v4388 = vpop.f32.mrb[0].mxu0
        %v4389 = vpop.f32.mrb[0].mxu0
        %v4390 = vadd.f32 %v4250, %v4389
        %v4391 = vpop.f32.mrb[0].mxu0
        %4392 = vmatprep.mubr.bf16.mxu0 0
        %4393 = vmatmul.mubr.bf16.gmra.mrb[0].mxu0 %v4284
        %v4394 = vpop.f32.mrb[0].mxu0
        %v4395 = vadd.f32 %v4250, %v4394
        %v4396 = vpop.f32.mrb[0].mxu0
        %v4397 = vpop.f32.mrb[0].mxu0
        %v4398 = vadd.f32 %v4250, %v4397
        %v4399 = vpop.f32.mrb[0].mxu0
        %4400 = vmatprep.mubr.bf16.mxu0 0
        %4401 = vmatmul.mubr.bf16.gmra.mrb[0].mxu0 %v4287
        %v4402 = vpop.f32.mrb[0].mxu0
        %v4403 = vadd.f32 %v4250, %v4402
        %v4404 = vpop.f32.mrb[0].mxu0
        %v4405 = vpop.f32.mrb[0].mxu0
        %v4406 = vadd.f32 %v4250, %v4405
        %v4407 = vpop.f32.mrb[0].mxu0
        %4408 = vmatprep.mubr.bf16.mxu0 0
        %4409 = vmatmul.mubr.bf16.gmra.mrb[0].mxu0 %v4290
        %v4410 = vpop.f32.mrb[0].mxu0
        %v4411 = vadd.f32 %v4250, %v4410
        %v4412 = vpop.f32.mrb[0].mxu0
        %v4413 = vpop.f32.mrb[0].mxu0
        %v4414 = vadd.f32 %v4250, %v4413
        %v4415 = vpop.f32.mrb[0].mxu0
        %4416 = vmatprep.mubr.bf16.mxu0 0
        %4417 = vmatmul.mubr.bf16.gmra.mrb[0].mxu0 %v4293
        %v4418 = vpop.f32.mrb[0].mxu0
        %v4419 = vadd.f32 %v4250, %v4418
        %v4420 = vpop.f32.mrb[0].mxu0
        %v4421 = vpop.f32.mrb[0].mxu0
        %v4422 = vadd.f32 %v4250, %v4421
        %v4423 = vpop.f32.mrb[0].mxu0
        %4424 = vmatprep.mubr.bf16.mxu0 0
        %4425 = vmatmul.mubr.bf16.gmra.mrb[0].mxu0 %v4296
        %v4426 = vpop.f32.mrb[0].mxu0
        %v4427 = vadd.f32 %v4250, %v4426
        %v4428 = vpop.f32.mrb[0].mxu0
        %v4429 = vpop.f32.mrb[0].mxu0
        %v4430 = vadd.f32 %v4250, %v4429
        %v4431 = vpop.f32.mrb[0].mxu0
        %4432 = vmatprep.mubr.bf16.mxu0 0
        %4433 = vmatmul.mubr.bf16.gmra.mrb[0].mxu0 %v4299
        %v4434 = vpop.f32.mrb[0].mxu0
        %v4435 = vadd.f32 %v4250, %v4434
        %v4436 = vpop.f32.mrb[0].mxu0
        %v4437 = vpop.f32.mrb[0].mxu0
        %v4438 = vadd.f32 %v4250, %v4437
        %v4439 = vpop.f32.mrb[0].mxu0
        %4440 = vmatprep.mubr.bf16.mxu0 0
        %4441 = vmatmul.mubr.bf16.gmra.mrb[0].mxu0 %v4302
        %v4442 = vpop.f32.mrb[0].mxu0
        %v4443 = vadd.f32 %v4250, %v4442
        %v4444 = vpop.f32.mrb[0].mxu0
        %v4445 = vpop.f32.mrb[0].mxu0
        %v4446 = vadd.f32 %v4250, %v4445
        %v4447 = vpop.f32.mrb[0].mxu0
        %4448 = vmatprep.mubr.bf16.mxu0 0
        %4449 = vmatmul.mubr.bf16.gmra.mrb[0].mxu0 %v4305
        %v4450 = vpop.f32.mrb[0].mxu0
        %v4451 = vadd.f32 %v4250, %v4450
        %v4452 = vpop.f32.mrb[0].mxu0
        %v4453 = vpop.f32.mrb[0].mxu0
        %v4454 = vadd.f32 %v4250, %v4453
        %v4455 = vpop.f32.mrb[0].mxu0
        %4456 = vmatprep.mubr.bf16.mxu0 0
        %4457 = vmatmul.mubr.bf16.gmra.mrb[0].mxu0 %v4308
        %v4458 = vpop.f32.mrb[0].mxu0
        %v4459 = vadd.f32 %v4250, %v4458
        %v4460 = vpop.f32.mrb[0].mxu0
        %v4461 = vpop.f32.mrb[0].mxu0
        %v4462 = vadd.f32 %v4250, %v4461
        %v4463 = vpop.f32.mrb[0].mxu0
        %4464 = vmatprep.mubr.bf16.mxu0 0
        %4465 = vmatmul.mubr.bf16.gmra.mrb[0].mxu0 %v4311
        %v4466 = vpop.f32.mrb[0].mxu0
        %v4467 = vadd.f32 %v4250, %v4466
        %v4468 = vpop.f32.mrb[0].mxu0
        %v4469 = vpop.f32.mrb[0].mxu0
        %v4470 = vadd.f32 %v4250, %v4469
        %v4471 = vpop.f32.mrb[0].mxu0
        %4472 = vmatprep.mubr.bf16.mxu0 0
        %4473 = vmatmul.mubr.bf16.gmra.mrb[0].mxu0 %v4314
        %v4474 = vpop.f32.mrb[0].mxu0
        %v4475 = vadd.f32 %v4250, %v4474
        %v4476 = vpop.f32.mrb[0].mxu0
        %v4477 = vpop.f32.mrb[0].mxu0
        %v4478 = vadd.f32 %v4250, %v4477
        %v4479 = vpop.f32.mrb[0].mxu0
        %4480 = vdwg.mxu0
        %v4481 = vmax.f32 %v4355, 0.0
        %v4482 = vmax.f32 %v4358, 0.0
        %v4483 = vmax.f32 %v4363, 0.0
        %v4484 = vmax.f32 %v4366, 0.0
        %v4485 = vmax.f32 %v4371, 0.0
        %v4486 = vmax.f32 %v4374, 0.0
        %v4487 = vmax.f32 %v4379, 0.0
        %v4488 = vmax.f32 %v4382, 0.0
        %v4489 = vmax.f32 %v4387, 0.0
        %v4490 = vmax.f32 %v4390, 0.0
        %v4491 = vmax.f32 %v4395, 0.0
        %v4492 = vmax.f32 %v4398, 0.0
        %v4493 = vmax.f32 %v4403, 0.0
        %v4494 = vmax.f32 %v4406, 0.0
        %v4495 = vmax.f32 %v4411, 0.0
        %v4496 = vmax.f32 %v4414, 0.0
        %v4497 = vmax.f32 %v4419, 0.0
        %v4498 = vmax.f32 %v4422, 0.0
        %v4499 = vmax.f32 %v4427, 0.0
        %v4500 = vmax.f32 %v4430, 0.0
        %v4501 = vmax.f32 %v4435, 0.0
        %v4502 = vmax.f32 %v4438, 0.0
        %v4503 = vmax.f32 %v4443, 0.0
        %v4504 = vmax.f32 %v4446, 0.0
        %v4505 = vmax.f32 %v4451, 0.0
        %v4506 = vmax.f32 %v4454, 0.0
        %v4507 = vmax.f32 %v4459, 0.0
        %v4508 = vmax.f32 %v4462, 0.0
        %v4509 = vmax.f32 %v4467, 0.0
        %v4510 = vmax.f32 %v4470, 0.0
        %v4511 = vmax.f32 %v4475, 0.0
        %v4512 = vmax.f32 %v4478, 0.0
        %v4513 = vpack.c.bf16 %v4482, %v4481
        %v4514 = vpack.c.bf16 %v4484, %v4483
        %v4515 = vpack.c.bf16 %v4486, %v4485
        %v4516 = vpack.c.bf16 %v4488, %v4487
        %v4517 = vpack.c.bf16 %v4490, %v4489
        %v4518 = vpack.c.bf16 %v4492, %v4491
        %v4519 = vpack.c.bf16 %v4494, %v4493
        %v4520 = vpack.c.bf16 %v4496, %v4495
        %v4521 = vpack.c.bf16 %v4498, %v4497
        %v4522 = vpack.c.bf16 %v4500, %v4499
        %v4523 = vpack.c.bf16 %v4502, %v4501
        %v4524 = vpack.c.bf16 %v4504, %v4503
        %v4525 = vpack.c.bf16 %v4506, %v4505
        %v4526 = vpack.c.bf16 %v4508, %v4507
        %v4527 = vpack.c.bf16 %v4510, %v4509
        %v4528 = vpack.c.bf16 %v4512, %v4511
        %4529 = vxpose.xlu0.c.b16.start [1/8] %v4513, 128
        %4530 = vxpose.xlu0.c.b16.cont [2/8] %v4514, 128
        %4531 = vxpose.xlu0.c.b16.cont [3/8] %v4515, 128
        %4532 = vxpose.xlu0.c.b16.cont [4/8] %v4516, 128
        %4533 = vxpose.xlu0.c.b16.cont [5/8] %v4517, 128
        %4534 = vxpose.xlu0.c.b16.cont [6/8] %v4518, 128
        %4535 = vxpose.xlu0.c.b16.cont [7/8] %v4519, 128
        %4536 = vxpose.xlu0.c.b16.end [8/8] %v4520, 128
        %v4537 = vpop.trf.xlu0
        %v4538 = vpop.trf.xlu0
        %v4539 = vpop.trf.xlu0
        %v4540 = vpop.trf.xlu0
        %v4541 = vpop.trf.xlu0
        %v4542 = vpop.trf.xlu0
        %v4543 = vpop.trf.xlu0
        %v4544 = vpop.trf.xlu0
        %4545 = vxpose.xlu0.c.b16.start [1/8] %v4521, 128
        %4546 = vxpose.xlu0.c.b16.cont [2/8] %v4522, 128
        %4547 = vxpose.xlu0.c.b16.cont [3/8] %v4523, 128
        %4548 = vxpose.xlu0.c.b16.cont [4/8] %v4524, 128
        %4549 = vxpose.xlu0.c.b16.cont [5/8] %v4525, 128
        %4550 = vxpose.xlu0.c.b16.cont [6/8] %v4526, 128
        %4551 = vxpose.xlu0.c.b16.cont [7/8] %v4527, 128
        %4552 = vxpose.xlu0.c.b16.end [8/8] %v4528, 128
        %v4553 = vpop.trf.xlu0
        %v4554 = vpop.trf.xlu0
        %v4555 = vpop.trf.xlu0
        %v4556 = vpop.trf.xlu0
        %v4557 = vpop.trf.xlu0
        %v4558 = vpop.trf.xlu0
        %v4559 = vpop.trf.xlu0
        %v4560 = vpop.trf.xlu0
        %v4569 = vunpack.c.l.b16 %v4537
        %v4570 = vunpack.c.l.b16 %v4553
        %v4571 = vunpack.c.h.b16 %v4537
        %v4572 = vunpack.c.h.b16 %v4553
        %v4573 = vunpack.c.l.b16 %v4538
        %v4574 = vunpack.c.l.b16 %v4554
        %v4575 = vunpack.c.h.b16 %v4538
        %v4576 = vunpack.c.h.b16 %v4554
        %v4577 = vunpack.c.l.b16 %v4539
        %v4578 = vunpack.c.l.b16 %v4555
        %v4579 = vunpack.c.h.b16 %v4539
        %v4580 = vunpack.c.h.b16 %v4555
        %v4581 = vunpack.c.l.b16 %v4540
        %v4582 = vunpack.c.l.b16 %v4556
        %v4583 = vunpack.c.h.b16 %v4540
        %v4584 = vunpack.c.h.b16 %v4556
        %v4585 = vpack.c.b16 %v4570, %v4569
        %v4586 = vpack.c.b16 %v4572, %v4571
        %v4587 = vpack.c.b16 %v4574, %v4573
        %v4588 = vpack.c.b16 %v4576, %v4575
        %v4589 = vpack.c.b16 %v4578, %v4577
        %v4590 = vpack.c.b16 %v4580, %v4579
        %v4591 = vpack.c.b16 %v4582, %v4581
        %v4592 = vpack.c.b16 %v4584, %v4583
        %4601 = vst [vmem:[%s163] sm:$0xff] %v4585
        %4602 = vst [vmem:[%s163 + $0x8] sm:$0xff] %v4586
        %4603 = vst [vmem:[%s163 + $0x10] sm:$0xff] %v4587
        %4604 = vst [vmem:[%s163 + $0x18] sm:$0xff] %v4588
        %4605 = vst [vmem:[%s163 + $0x20] sm:$0xff] %v4589
        %4606 = vst [vmem:[%s163 + $0x28] sm:$0xff] %v4590
        %4607 = vst [vmem:[%s163 + $0x30] sm:$0xff] %v4591
        %4608 = vst [vmem:[%s163 + $0x38] sm:$0xff] %v4592
        %s4609 = sand.u32 %s93, 1
        %s4610 = scalar_lea.sflag [#allocation4], %s4609
        %s4611 = sand.u32 %s93, 1
        %s4612 = smul.addr %s4611, 64
        %s4613 = scalar_lea.vmem [#allocation3], %s4612
        // Predicated region
        $region33: #{tpu_custom_call.1} parent=31 // pred_check
          %p4614 = pneg %p103
        $region34: #{tpu_custom_call.1} parent=31 // pred_check_branch
          %4616 = sbr.rel (%p4614) target = $region36
        $region35: #{tpu_custom_call.1} parent=31 // pred_region
          %s4618 = ssub.s32 1024, 1024
          %4619 = vsyncadd %s4610, %s4618
          %s4620 = smul.addr %s17, 16
          %s4621 = smul.addr %s4620, 64
          %s4622 = scalar_lea.hbm %s3, %s4621
          %s4623 = sshll.u32 %s4613, 4
          %s4624 = int_to_ptr.vmem [resolvable:$true] %s4623
          %4629 = dma.vmem_to_hbm [thread:$0]  %s4624, 1024, %s4622, %s4610, 128, 128, 8
        $region36: #{tpu_custom_call.1} parent=31 // pred_fallthru
          _
      $region32: #{tpu_custom_call.1} parent=5 // pred_fallthru
        _
      %p4630 = scmp.le.s32.totalorder 2, %s12
      // Predicated region
      $region37: #{tpu_custom_call.1} parent=5 // pred_check
        %p4631 = pneg %p4630
      $region38: #{tpu_custom_call.1} parent=5 // pred_check_branch
        %4633 = sbr.rel (%p4631) target = $region40
      $region39: #{tpu_custom_call.1} parent=5 // pred_region
        %s4634 = ssub.s32 %s12, 2
        // Predicated region
        $region41: #{tpu_custom_call.1} parent=39 // pred_check
          %p4635 = pneg %p109
        $region42: #{tpu_custom_call.1} parent=39 // pred_check_branch
          %4637 = sbr.rel (%p4635) target = $region44
        $region43: #{tpu_custom_call.1} parent=39 // pred_region
          %s4638 = sand.u32 %s94, 1
          %s4639 = scalar_lea.sflag [#allocation4], %s4638
          %s4640 = sand.u32 %s94, 1
          %s4641 = smul.addr %s4640, 64
          %s4642 = scalar_lea.vmem [#allocation3], %s4641
          %4643 = dma.done %s4639, 1024
        $region44: #{tpu_custom_call.1} parent=39 // pred_fallthru
          _
      $region40: #{tpu_custom_call.1} parent=5 // pred_fallthru
        _
    $region6: #{tpu_custom_call.1} parent=1 // loop_footer
      %s16 = sadd.s32 1, %s12
    $region7: #{tpu_custom_call.1} parent=1 // loop_footer_branch
      %11 = sbr.rel target = $region3
    $region8: #{tpu_custom_call.1} parent=1 // loop_exit
      _
    %4644 = vsyncpa [#allocation4], 1
    %s4645 = scalar_lea.sflag [#allocation4], 1
    %4646 = vsyncpa %s4645, 1

</llo_original>
